<compile_context>
chip_gen: v7x
topology: tpu7x:2x2x1
jax: 0.10.0
libtpu: 0.0.40
codegen_flags: <defaults>
</compile_context>

<pallas_src>
import math
import functools

import jax
import jax.numpy as jnp
from jax import lax
from jax.experimental import pallas as pl
from jax.experimental.pallas import tpu as pltpu


def mha_kernel(q_ref, k_ref, v_ref, mask_ref,
               wq_ref, bq_ref, wk_ref, bk_ref,
               wv_ref, bv_ref, wo_ref, bo_ref,
               o_ref, *,
               batch, q_len, kv_len, num_heads, compute_dtype):
    """Whole problem in one step.

    q_ref:[B*T,D]  k_ref/v_ref:[B*S,D]  mask_ref:[B,T,S] (f32 additive)
    wq/wk/wv_ref:[H,D,N]  bq/bk/bv_ref:[H,1,N] (f32)
    wo_ref:[H,N,D]        bo_ref:[1,D] (f32)
    o_ref:[B*T,D] f32
    """
    B, T, S, H = batch, q_len, kv_len, num_heads
    N = wq_ref.shape[-1]          # head dim
    D = wo_ref.shape[-1]          # hidden size
    cdt = compute_dtype
    scale = 1.0 / math.sqrt(N)

    q = q_ref[...]                # [B*T, D], compute dtype
    k = k_ref[...]                # [B*S, D]
    v = v_ref[...]                # [B*S, D]

    acc = jnp.zeros((B * T, D), jnp.float32)

    for h in range(H):            # static unroll; leading-dim loads only
        wq_h = wq_ref[h]          # [D, N]
        wk_h = wk_ref[h]          # [D, N]
        wv_h = wv_ref[h]          # [D, N]
        wo_h = wo_ref[h]          # [N, D]

        # Projections for all batch rows at once; scale folded into Q.
        qp = (jnp.dot(q, wq_h, preferred_element_type=jnp.float32)
              + bq_ref[h]) * scale                                   # [B*T, N] f32
        kp = jnp.dot(k, wk_h, preferred_element_type=jnp.float32) + bk_ref[h]
        vp = jnp.dot(v, wv_h, preferred_element_type=jnp.float32) + bv_ref[h]

        qp_c = qp.astype(cdt)
        kp_c = kp.astype(cdt)
        vp_c = vp.astype(cdt)

        ctx_rows = []
        for b in range(B):
            qb = qp_c[b * T:(b + 1) * T]      # [T, N]  sublane-aligned row slice
            kb = kp_c[b * S:(b + 1) * S]      # [S, N]
            vb = vp_c[b * S:(b + 1) * S]      # [S, N]

            # Q @ K^T via dot_general contracting the last dims (no explicit .T)
            logits = lax.dot_general(qb, kb, (((1,), (1,)), ((), ())),
                                     preferred_element_type=jnp.float32)   # [T,S]
            logits = logits + mask_ref[b]     # additive float padding mask

            # numerically-stable softmax, strictly f32 (v5e-safe elementwise math)
            m = jnp.max(logits, axis=-1, keepdims=True)
            e = jnp.exp(logits - m)
            denom = jnp.sum(e, axis=-1, keepdims=True)
            probs = e * pl.reciprocal(denom, approx=True)   # EUP vrcp, ~free
            # TODO(synk): attention dropout (eval mode -> identity)

            ctx_rows.append(jnp.dot(probs.astype(cdt), vb,
                                    preferred_element_type=jnp.float32))   # [T,N]

        ctx = ctx_rows[0] if B == 1 else jnp.concatenate(ctx_rows, axis=0)  # [B*T,N]

        # Fused per-head output projection: accumulate straight into f32 result
        # (no lane-wise concat of narrow head fragments).
        acc = acc + jnp.dot(ctx.astype(cdt), wo_h,
                            preferred_element_type=jnp.float32)             # [B*T,D]

    out = acc + bo_ref[...]                   # [B*T, D] + [1, D]
    o_ref[...] = out.astype(o_ref.dtype)


def multi_head_attention(q, k, v, padding_mask,
                         wq, bq, wk, bk, wv, bv, wo, bo,
                         num_heads, compute_dtype=jnp.float32):
    """q:[B,T,D]  k,v:[B,S,D]  padding_mask:[B,T,S] float additive -> [B,T,D] f32.

    Weights are stored pre-transposed ([D_in, D_out]) so y = x @ W + b matches
    torch.nn.Linear. `compute_dtype=jnp.bfloat16` runs the matmuls on the bf16
    MXU path (v6e/v7x) with f32 accumulation and f32 softmax.
    """
    B, T, D = q.shape
    S = k.shape[1]
    H = num_heads
    N = D // H
    cdt = compute_dtype

    # Wrapper-side layout plumbing (free / tiny XLA reshapes):
    #  * flatten batch into rows -> kernel sees plain 2-D matmul operands
    #  * split projection weights per head -> kernel never slices the lane dim
    q2 = q.reshape(B * T, D).astype(cdt)
    k2 = k.reshape(B * S, D).astype(cdt)
    v2 = v.reshape(B * S, D).astype(cdt)
    mask = padding_mask.astype(jnp.float32)

    def split_in_w(w):   # [D, H*N] -> [H, D, N]  (per-head input-proj blocks)
        return jnp.asarray(w).reshape(D, H, N).transpose(1, 0, 2).astype(cdt)

    def split_in_b(b_):  # [..., H*N] -> [H, 1, N]  (kept f32, added to f32 acc)
        return jnp.asarray(b_, jnp.float32).reshape(H, 1, N)

    wq3, wk3, wv3 = split_in_w(wq), split_in_w(wk), split_in_w(wv)
    bq3, bk3, bv3 = split_in_b(bq), split_in_b(bk), split_in_b(bv)
    wo3 = jnp.asarray(wo).reshape(H, N, D).astype(cdt)   # per-head row blocks of Wo
    bo2 = jnp.asarray(bo, jnp.float32).reshape(1, D)

    kernel = functools.partial(mha_kernel, batch=B, q_len=T, kv_len=S,
                               num_heads=H, compute_dtype=cdt)

    vmem_full = pl.BlockSpec(memory_space=pltpu.MemorySpace.VMEM)
    out2 = pl.pallas_call(
        kernel,
        out_shape=jax.ShapeDtypeStruct((B * T, D), jnp.float32),
        in_specs=[vmem_full] * 12,
        out_specs=vmem_full,
    )(q2, k2, v2, mask, wq3, bq3, wk3, bk3, wv3, bv3, wo3, bo2)

    return out2.reshape(B, T, D)


def reference(q, k, v, mask, wq, bq, wk, bk, wv, bv, wo, bo, num_heads):
    B, T, D = q.shape
    S = k.shape[1]
    N = D // num_heads
    qp = (q @ wq + bq).reshape(B, T, num_heads, N).transpose(0, 2, 1, 3)
    kp = (k @ wk + bk).reshape(B, S, num_heads, N).transpose(0, 2, 1, 3)
    vp = (v @ wv + bv).reshape(B, S, num_heads, N).transpose(0, 2, 1, 3)
    logits = jnp.einsum('bhtn,bhsn->bhts', qp, kp) / math.sqrt(N)
    logits = logits + mask[:, None, :, :]
    probs = jax.nn.softmax(logits, axis=-1)
    o = jnp.einsum('bhts,bhsn->bhtn', probs, vp)
    o = o.transpose(0, 2, 1, 3).reshape(B, T, D)
    return o @ wo + bo


if __name__ == "__main__":
    # Small shapes consistent with the module: hidden_size=32, num_heads=4.
    B, T, S, D, H = 2, 8, 8, 32, 4

    key = jax.random.PRNGKey(0)
    keys = jax.random.split(key, 12)

    q = jax.random.normal(keys[0], (B, T, D), jnp.float32)
    k = jax.random.normal(keys[1], (B, S, D), jnp.float32)
    v = jax.random.normal(keys[2], (B, S, D), jnp.float32)
    # float additive padding mask [B, T, S] (PyTorch float-mask branch).
    padding_mask = jax.random.normal(keys[3], (B, T, S), jnp.float32) * 0.1

    # Deterministic parameter init (nn.Linear-like uniform bound).
    bound = 1.0 / math.sqrt(D)
    def init_w(kk):
        return jax.random.uniform(kk, (D, D), jnp.float32, -bound, bound)
    def init_b(kk):
        return jax.random.uniform(kk, (1, D), jnp.float32, -bound, bound)

    wq, bq = init_w(keys[4]), init_b(keys[5])
    wk, bk = init_w(keys[6]), init_b(keys[7])
    wv, bv = init_w(keys[8]), init_b(keys[9])
    wo, bo = init_w(keys[10]), init_b(keys[11])

    ref = reference(q, k, v, padding_mask, wq, bq, wk, bk, wv, bv, wo, bo,
                    num_heads=H)

    # f32 path (default): tight check (tolerance covers approx softmax recip).
    out = multi_head_attention(q, k, v, padding_mask,
                               wq, bq, wk, bk, wv, bv, wo, bo, num_heads=H)
    out = jax.block_until_ready(out)
    assert out.shape == (B, T, D)
    assert jnp.allclose(out, ref, atol=5e-3, rtol=5e-3), \
        float(jnp.max(jnp.abs(out - ref)))

    # bf16 MXU path (v6e/v7x feedback): bf16 matmuls, f32 accumulation+softmax.
    out_bf16 = multi_head_attention(q, k, v, padding_mask,
                                    wq, bq, wk, bk, wv, bv, wo, bo,
                                    num_heads=H, compute_dtype=jnp.bfloat16)
    out_bf16 = jax.block_until_ready(out_bf16)
    assert jnp.allclose(out_bf16, ref, atol=5e-2, rtol=5e-2), \
        float(jnp.max(jnp.abs(out_bf16 - ref)))

    print("KERNEL_OK")
</pallas_src>

<mosaic_0001>
module attributes {stable_mosaic.version = 11 : i64} {
  func.func @mha_kernel(%arg0: memref<16x32xf32, #tpu.memory_space<vmem>>, %arg1: memref<16x32xf32, #tpu.memory_space<vmem>>, %arg2: memref<16x32xf32, #tpu.memory_space<vmem>>, %arg3: memref<2x8x8xf32, #tpu.memory_space<vmem>>, %arg4: memref<4x32x8xf32, #tpu.memory_space<vmem>>, %arg5: memref<4x1x8xf32, #tpu.memory_space<vmem>>, %arg6: memref<4x32x8xf32, #tpu.memory_space<vmem>>, %arg7: memref<4x1x8xf32, #tpu.memory_space<vmem>>, %arg8: memref<4x32x8xf32, #tpu.memory_space<vmem>>, %arg9: memref<4x1x8xf32, #tpu.memory_space<vmem>>, %arg10: memref<4x8x32xf32, #tpu.memory_space<vmem>>, %arg11: memref<1x32xf32, #tpu.memory_space<vmem>>, %arg12: memref<16x32xf32, #tpu.memory_space<vmem>>) attributes {dimension_semantics = [], scalar_prefetch = 0 : i64, scratch_operands = 0 : i64, tpu.core_type = #tpu.core_type<tc>} {
    %c0 = arith.constant 0 : index
    %c0_0 = arith.constant 0 : index
    %0 = vector.load %arg0[%c0, %c0_0] : memref<16x32xf32, #tpu.memory_space<vmem>>, vector<16x32xf32>
    %c0_1 = arith.constant 0 : index
    %c0_2 = arith.constant 0 : index
    %1 = vector.load %arg1[%c0_1, %c0_2] : memref<16x32xf32, #tpu.memory_space<vmem>>, vector<16x32xf32>
    %c0_3 = arith.constant 0 : index
    %c0_4 = arith.constant 0 : index
    %2 = vector.load %arg2[%c0_3, %c0_4] : memref<16x32xf32, #tpu.memory_space<vmem>>, vector<16x32xf32>
    %cst = arith.constant 0.000000e+00 : f32
    %3 = vector.broadcast %cst : f32 to vector<16x32xf32>
    %c0_5 = arith.constant 0 : index
    %c0_6 = arith.constant 0 : index
    %c0_7 = arith.constant 0 : index
    %4 = vector.load %arg4[%c0_5, %c0_6, %c0_7] : memref<4x32x8xf32, #tpu.memory_space<vmem>>, vector<1x32x8xf32>
    %5 = vector.shape_cast %4 : vector<1x32x8xf32> to vector<32x8xf32>
    %c0_8 = arith.constant 0 : index
    %c0_9 = arith.constant 0 : index
    %c0_10 = arith.constant 0 : index
    %6 = vector.load %arg6[%c0_8, %c0_9, %c0_10] : memref<4x32x8xf32, #tpu.memory_space<vmem>>, vector<1x32x8xf32>
    %7 = vector.shape_cast %6 : vector<1x32x8xf32> to vector<32x8xf32>
    %c0_11 = arith.constant 0 : index
    %c0_12 = arith.constant 0 : index
    %c0_13 = arith.constant 0 : index
    %8 = vector.load %arg8[%c0_11, %c0_12, %c0_13] : memref<4x32x8xf32, #tpu.memory_space<vmem>>, vector<1x32x8xf32>
    %9 = vector.shape_cast %8 : vector<1x32x8xf32> to vector<32x8xf32>
    %c0_14 = arith.constant 0 : index
    %c0_15 = arith.constant 0 : index
    %c0_16 = arith.constant 0 : index
    %10 = vector.load %arg10[%c0_14, %c0_15, %c0_16] : memref<4x8x32xf32, #tpu.memory_space<vmem>>, vector<1x8x32xf32>
    %11 = vector.shape_cast %10 : vector<1x8x32xf32> to vector<8x32xf32>
    %cst_17 = arith.constant dense<0.000000e+00> : vector<16x8xf32>
    %12 = tpu.matmul %0, %5, %cst_17 {dimension_numbers = #tpu.dot_dimension_numbers<[1], [0], [0], [1], [0, 0, 1, 1], [], []>} : vector<16x32xf32>, vector<32x8xf32>, vector<16x8xf32> -> vector<16x8xf32>
    %c0_18 = arith.constant 0 : index
    %c0_19 = arith.constant 0 : index
    %c0_20 = arith.constant 0 : index
    %13 = vector.load %arg5[%c0_18, %c0_19, %c0_20] : memref<4x1x8xf32, #tpu.memory_space<vmem>>, vector<1x1x8xf32>
    %14 = vector.shape_cast %13 : vector<1x1x8xf32> to vector<1x8xf32>
    %15 = vector.broadcast %14 : vector<1x8xf32> to vector<16x8xf32>
    %16 = arith.addf %12, %15 : vector<16x8xf32>
    %cst_21 = arith.constant 0.353553385 : f32
    %17 = vector.broadcast %cst_21 : f32 to vector<16x8xf32>
    %18 = arith.mulf %16, %17 : vector<16x8xf32>
    %cst_22 = arith.constant dense<0.000000e+00> : vector<16x8xf32>
    %19 = tpu.matmul %1, %7, %cst_22 {dimension_numbers = #tpu.dot_dimension_numbers<[1], [0], [0], [1], [0, 0, 1, 1], [], []>} : vector<16x32xf32>, vector<32x8xf32>, vector<16x8xf32> -> vector<16x8xf32>
    %c0_23 = arith.constant 0 : index
    %c0_24 = arith.constant 0 : index
    %c0_25 = arith.constant 0 : index
    %20 = vector.load %arg7[%c0_23, %c0_24, %c0_25] : memref<4x1x8xf32, #tpu.memory_space<vmem>>, vector<1x1x8xf32>
    %21 = vector.shape_cast %20 : vector<1x1x8xf32> to vector<1x8xf32>
    %22 = vector.broadcast %21 : vector<1x8xf32> to vector<16x8xf32>
    %23 = arith.addf %19, %22 : vector<16x8xf32>
    %cst_26 = arith.constant dense<0.000000e+00> : vector<16x8xf32>
    %24 = tpu.matmul %2, %9, %cst_26 {dimension_numbers = #tpu.dot_dimension_numbers<[1], [0], [0], [1], [0, 0, 1, 1], [], []>} : vector<16x32xf32>, vector<32x8xf32>, vector<16x8xf32> -> vector<16x8xf32>
    %c0_27 = arith.constant 0 : index
    %c0_28 = arith.constant 0 : index
    %c0_29 = arith.constant 0 : index
    %25 = vector.load %arg9[%c0_27, %c0_28, %c0_29] : memref<4x1x8xf32, #tpu.memory_space<vmem>>, vector<1x1x8xf32>
    %26 = vector.shape_cast %25 : vector<1x1x8xf32> to vector<1x8xf32>
    %27 = vector.broadcast %26 : vector<1x8xf32> to vector<16x8xf32>
    %28 = arith.addf %24, %27 : vector<16x8xf32>
    %29 = vector.extract_strided_slice %18 {offsets = [0, 0], sizes = [8, 8], strides = [1, 1]} : vector<16x8xf32> to vector<8x8xf32>
    %30 = vector.extract_strided_slice %23 {offsets = [0, 0], sizes = [8, 8], strides = [1, 1]} : vector<16x8xf32> to vector<8x8xf32>
    %31 = vector.extract_strided_slice %28 {offsets = [0, 0], sizes = [8, 8], strides = [1, 1]} : vector<16x8xf32> to vector<8x8xf32>
    %cst_30 = arith.constant dense<0.000000e+00> : vector<8x8xf32>
    %32 = tpu.matmul %29, %30, %cst_30 {dimension_numbers = #tpu.dot_dimension_numbers<[1], [1], [0], [0], [0, 0, 1, 0], [], []>} : vector<8x8xf32>, vector<8x8xf32>, vector<8x8xf32> -> vector<8x8xf32>
    %c0_31 = arith.constant 0 : index
    %c0_32 = arith.constant 0 : index
    %c0_33 = arith.constant 0 : index
    %33 = vector.load %arg3[%c0_31, %c0_32, %c0_33] : memref<2x8x8xf32, #tpu.memory_space<vmem>>, vector<1x8x8xf32>
    %34 = vector.shape_cast %33 : vector<1x8x8xf32> to vector<8x8xf32>
    %35 = arith.addf %32, %34 : vector<8x8xf32>
    %cst_34 = arith.constant dense<0xFF800000> : vector<8xf32>
    %36 = vector.multi_reduction <maximumf>, %35, %cst_34 [1] : vector<8x8xf32> to vector<8xf32>
    %37 = vector.shape_cast %36 : vector<8xf32> to vector<8x1xf32>
    %38 = vector.broadcast %37 : vector<8x1xf32> to vector<8x8xf32>
    %39 = arith.subf %35, %38 : vector<8x8xf32>
    %40 = math.exp %39 : vector<8x8xf32>
    %cst_35 = arith.constant dense<0.000000e+00> : vector<8xf32>
    %41 = vector.multi_reduction <add>, %40, %cst_35 [1] : vector<8x8xf32> to vector<8xf32>
    %42 = vector.shape_cast %41 : vector<8xf32> to vector<8x1xf32>
    %43 = tpu.reciprocal %42 {approx = true} : vector<8x1xf32> -> vector<8x1xf32>
    %44 = vector.broadcast %43 : vector<8x1xf32> to vector<8x8xf32>
    %45 = arith.mulf %40, %44 : vector<8x8xf32>
    %cst_36 = arith.constant dense<0.000000e+00> : vector<8x8xf32>
    %46 = tpu.matmul %45, %31, %cst_36 {dimension_numbers = #tpu.dot_dimension_numbers<[1], [0], [0], [1], [0, 0, 1, 1], [], []>} : vector<8x8xf32>, vector<8x8xf32>, vector<8x8xf32> -> vector<8x8xf32>
    %47 = vector.extract_strided_slice %18 {offsets = [8, 0], sizes = [8, 8], strides = [1, 1]} : vector<16x8xf32> to vector<8x8xf32>
    %48 = vector.extract_strided_slice %23 {offsets = [8, 0], sizes = [8, 8], strides = [1, 1]} : vector<16x8xf32> to vector<8x8xf32>
    %49 = vector.extract_strided_slice %28 {offsets = [8, 0], sizes = [8, 8], strides = [1, 1]} : vector<16x8xf32> to vector<8x8xf32>
    %cst_37 = arith.constant dense<0.000000e+00> : vector<8x8xf32>
    %50 = tpu.matmul %47, %48, %cst_37 {dimension_numbers = #tpu.dot_dimension_numbers<[1], [1], [0], [0], [0, 0, 1, 0], [], []>} : vector<8x8xf32>, vector<8x8xf32>, vector<8x8xf32> -> vector<8x8xf32>
    %c1 = arith.constant 1 : index
    %c0_38 = arith.constant 0 : index
    %c0_39 = arith.constant 0 : index
    %51 = vector.load %arg3[%c1, %c0_38, %c0_39] : memref<2x8x8xf32, #tpu.memory_space<vmem>>, vector<1x8x8xf32>
    %52 = vector.shape_cast %51 : vector<1x8x8xf32> to vector<8x8xf32>
    %53 = arith.addf %50, %52 : vector<8x8xf32>
    %cst_40 = arith.constant dense<0xFF800000> : vector<8xf32>
    %54 = vector.multi_reduction <maximumf>, %53, %cst_40 [1] : vector<8x8xf32> to vector<8xf32>
    %55 = vector.shape_cast %54 : vector<8xf32> to vector<8x1xf32>
    %56 = vector.broadcast %55 : vector<8x1xf32> to vector<8x8xf32>
    %57 = arith.subf %53, %56 : vector<8x8xf32>
    %58 = math.exp %57 : vector<8x8xf32>
    %cst_41 = arith.constant dense<0.000000e+00> : vector<8xf32>
    %59 = vector.multi_reduction <add>, %58, %cst_41 [1] : vector<8x8xf32> to vector<8xf32>
    %60 = vector.shape_cast %59 : vector<8xf32> to vector<8x1xf32>
    %61 = tpu.reciprocal %60 {approx = true} : vector<8x1xf32> -> vector<8x1xf32>
    %62 = vector.broadcast %61 : vector<8x1xf32> to vector<8x8xf32>
    %63 = arith.mulf %58, %62 : vector<8x8xf32>
    %cst_42 = arith.constant dense<0.000000e+00> : vector<8x8xf32>
    %64 = tpu.matmul %63, %49, %cst_42 {dimension_numbers = #tpu.dot_dimension_numbers<[1], [0], [0], [1], [0, 0, 1, 1], [], []>} : vector<8x8xf32>, vector<8x8xf32>, vector<8x8xf32> -> vector<8x8xf32>
    %65 = tpu.concatenate %46, %64 in 0 : vector<8x8xf32>, vector<8x8xf32> -> vector<16x8xf32>
    %cst_43 = arith.constant dense<0.000000e+00> : vector<16x32xf32>
    %66 = tpu.matmul %65, %11, %cst_43 {dimension_numbers = #tpu.dot_dimension_numbers<[1], [0], [0], [1], [0, 0, 1, 1], [], []>} : vector<16x8xf32>, vector<8x32xf32>, vector<16x32xf32> -> vector<16x32xf32>
    %67 = arith.addf %3, %66 : vector<16x32xf32>
    %c1_44 = arith.constant 1 : index
    %c0_45 = arith.constant 0 : index
    %c0_46 = arith.constant 0 : index
    %68 = vector.load %arg4[%c1_44, %c0_45, %c0_46] : memref<4x32x8xf32, #tpu.memory_space<vmem>>, vector<1x32x8xf32>
    %69 = vector.shape_cast %68 : vector<1x32x8xf32> to vector<32x8xf32>
    %c1_47 = arith.constant 1 : index
    %c0_48 = arith.constant 0 : index
    %c0_49 = arith.constant 0 : index
    %70 = vector.load %arg6[%c1_47, %c0_48, %c0_49] : memref<4x32x8xf32, #tpu.memory_space<vmem>>, vector<1x32x8xf32>
    %71 = vector.shape_cast %70 : vector<1x32x8xf32> to vector<32x8xf32>
    %c1_50 = arith.constant 1 : index
    %c0_51 = arith.constant 0 : index
    %c0_52 = arith.constant 0 : index
    %72 = vector.load %arg8[%c1_50, %c0_51, %c0_52] : memref<4x32x8xf32, #tpu.memory_space<vmem>>, vector<1x32x8xf32>
    %73 = vector.shape_cast %72 : vector<1x32x8xf32> to vector<32x8xf32>
    %c1_53 = arith.constant 1 : index
    %c0_54 = arith.constant 0 : index
    %c0_55 = arith.constant 0 : index
    %74 = vector.load %arg10[%c1_53, %c0_54, %c0_55] : memref<4x8x32xf32, #tpu.memory_space<vmem>>, vector<1x8x32xf32>
    %75 = vector.shape_cast %74 : vector<1x8x32xf32> to vector<8x32xf32>
    %cst_56 = arith.constant dense<0.000000e+00> : vector<16x8xf32>
    %76 = tpu.matmul %0, %69, %cst_56 {dimension_numbers = #tpu.dot_dimension_numbers<[1], [0], [0], [1], [0, 0, 1, 1], [], []>} : vector<16x32xf32>, vector<32x8xf32>, vector<16x8xf32> -> vector<16x8xf32>
    %c1_57 = arith.constant 1 : index
    %c0_58 = arith.constant 0 : index
    %c0_59 = arith.constant 0 : index
    %77 = vector.load %arg5[%c1_57, %c0_58, %c0_59] : memref<4x1x8xf32, #tpu.memory_space<vmem>>, vector<1x1x8xf32>
    %78 = vector.shape_cast %77 : vector<1x1x8xf32> to vector<1x8xf32>
    %79 = vector.broadcast %78 : vector<1x8xf32> to vector<16x8xf32>
    %80 = arith.addf %76, %79 : vector<16x8xf32>
    %cst_60 = arith.constant 0.353553385 : f32
    %81 = vector.broadcast %cst_60 : f32 to vector<16x8xf32>
    %82 = arith.mulf %80, %81 : vector<16x8xf32>
    %cst_61 = arith.constant dense<0.000000e+00> : vector<16x8xf32>
    %83 = tpu.matmul %1, %71, %cst_61 {dimension_numbers = #tpu.dot_dimension_numbers<[1], [0], [0], [1], [0, 0, 1, 1], [], []>} : vector<16x32xf32>, vector<32x8xf32>, vector<16x8xf32> -> vector<16x8xf32>
    %c1_62 = arith.constant 1 : index
    %c0_63 = arith.constant 0 : index
    %c0_64 = arith.constant 0 : index
    %84 = vector.load %arg7[%c1_62, %c0_63, %c0_64] : memref<4x1x8xf32, #tpu.memory_space<vmem>>, vector<1x1x8xf32>
    %85 = vector.shape_cast %84 : vector<1x1x8xf32> to vector<1x8xf32>
    %86 = vector.broadcast %85 : vector<1x8xf32> to vector<16x8xf32>
    %87 = arith.addf %83, %86 : vector<16x8xf32>
    %cst_65 = arith.constant dense<0.000000e+00> : vector<16x8xf32>
    %88 = tpu.matmul %2, %73, %cst_65 {dimension_numbers = #tpu.dot_dimension_numbers<[1], [0], [0], [1], [0, 0, 1, 1], [], []>} : vector<16x32xf32>, vector<32x8xf32>, vector<16x8xf32> -> vector<16x8xf32>
    %c1_66 = arith.constant 1 : index
    %c0_67 = arith.constant 0 : index
    %c0_68 = arith.constant 0 : index
    %89 = vector.load %arg9[%c1_66, %c0_67, %c0_68] : memref<4x1x8xf32, #tpu.memory_space<vmem>>, vector<1x1x8xf32>
    %90 = vector.shape_cast %89 : vector<1x1x8xf32> to vector<1x8xf32>
    %91 = vector.broadcast %90 : vector<1x8xf32> to vector<16x8xf32>
    %92 = arith.addf %88, %91 : vector<16x8xf32>
    %93 = vector.extract_strided_slice %82 {offsets = [0, 0], sizes = [8, 8], strides = [1, 1]} : vector<16x8xf32> to vector<8x8xf32>
    %94 = vector.extract_strided_slice %87 {offsets = [0, 0], sizes = [8, 8], strides = [1, 1]} : vector<16x8xf32> to vector<8x8xf32>
    %95 = vector.extract_strided_slice %92 {offsets = [0, 0], sizes = [8, 8], strides = [1, 1]} : vector<16x8xf32> to vector<8x8xf32>
    %cst_69 = arith.constant dense<0.000000e+00> : vector<8x8xf32>
    %96 = tpu.matmul %93, %94, %cst_69 {dimension_numbers = #tpu.dot_dimension_numbers<[1], [1], [0], [0], [0, 0, 1, 0], [], []>} : vector<8x8xf32>, vector<8x8xf32>, vector<8x8xf32> -> vector<8x8xf32>
    %c0_70 = arith.constant 0 : index
    %c0_71 = arith.constant 0 : index
    %c0_72 = arith.constant 0 : index
    %97 = vector.load %arg3[%c0_70, %c0_71, %c0_72] : memref<2x8x8xf32, #tpu.memory_space<vmem>>, vector<1x8x8xf32>
    %98 = vector.shape_cast %97 : vector<1x8x8xf32> to vector<8x8xf32>
    %99 = arith.addf %96, %98 : vector<8x8xf32>
    %cst_73 = arith.constant dense<0xFF800000> : vector<8xf32>
    %100 = vector.multi_reduction <maximumf>, %99, %cst_73 [1] : vector<8x8xf32> to vector<8xf32>
    %101 = vector.shape_cast %100 : vector<8xf32> to vector<8x1xf32>
    %102 = vector.broadcast %101 : vector<8x1xf32> to vector<8x8xf32>
    %103 = arith.subf %99, %102 : vector<8x8xf32>
    %104 = math.exp %103 : vector<8x8xf32>
    %cst_74 = arith.constant dense<0.000000e+00> : vector<8xf32>
    %105 = vector.multi_reduction <add>, %104, %cst_74 [1] : vector<8x8xf32> to vector<8xf32>
    %106 = vector.shape_cast %105 : vector<8xf32> to vector<8x1xf32>
    %107 = tpu.reciprocal %106 {approx = true} : vector<8x1xf32> -> vector<8x1xf32>
    %108 = vector.broadcast %107 : vector<8x1xf32> to vector<8x8xf32>
    %109 = arith.mulf %104, %108 : vector<8x8xf32>
    %cst_75 = arith.constant dense<0.000000e+00> : vector<8x8xf32>
    %110 = tpu.matmul %109, %95, %cst_75 {dimension_numbers = #tpu.dot_dimension_numbers<[1], [0], [0], [1], [0, 0, 1, 1], [], []>} : vector<8x8xf32>, vector<8x8xf32>, vector<8x8xf32> -> vector<8x8xf32>
    %111 = vector.extract_strided_slice %82 {offsets = [8, 0], sizes = [8, 8], strides = [1, 1]} : vector<16x8xf32> to vector<8x8xf32>
    %112 = vector.extract_strided_slice %87 {offsets = [8, 0], sizes = [8, 8], strides = [1, 1]} : vector<16x8xf32> to vector<8x8xf32>
    %113 = vector.extract_strided_slice %92 {offsets = [8, 0], sizes = [8, 8], strides = [1, 1]} : vector<16x8xf32> to vector<8x8xf32>
    %cst_76 = arith.constant dense<0.000000e+00> : vector<8x8xf32>
    %114 = tpu.matmul %111, %112, %cst_76 {dimension_numbers = #tpu.dot_dimension_numbers<[1], [1], [0], [0], [0, 0, 1, 0], [], []>} : vector<8x8xf32>, vector<8x8xf32>, vector<8x8xf32> -> vector<8x8xf32>
    %c1_77 = arith.constant 1 : index
    %c0_78 = arith.constant 0 : index
    %c0_79 = arith.constant 0 : index
    %115 = vector.load %arg3[%c1_77, %c0_78, %c0_79] : memref<2x8x8xf32, #tpu.memory_space<vmem>>, vector<1x8x8xf32>
    %116 = vector.shape_cast %115 : vector<1x8x8xf32> to vector<8x8xf32>
    %117 = arith.addf %114, %116 : vector<8x8xf32>
    %cst_80 = arith.constant dense<0xFF800000> : vector<8xf32>
    %118 = vector.multi_reduction <maximumf>, %117, %cst_80 [1] : vector<8x8xf32> to vector<8xf32>
    %119 = vector.shape_cast %118 : vector<8xf32> to vector<8x1xf32>
    %120 = vector.broadcast %119 : vector<8x1xf32> to vector<8x8xf32>
    %121 = arith.subf %117, %120 : vector<8x8xf32>
    %122 = math.exp %121 : vector<8x8xf32>
    %cst_81 = arith.constant dense<0.000000e+00> : vector<8xf32>
    %123 = vector.multi_reduction <add>, %122, %cst_81 [1] : vector<8x8xf32> to vector<8xf32>
    %124 = vector.shape_cast %123 : vector<8xf32> to vector<8x1xf32>
    %125 = tpu.reciprocal %124 {approx = true} : vector<8x1xf32> -> vector<8x1xf32>
    %126 = vector.broadcast %125 : vector<8x1xf32> to vector<8x8xf32>
    %127 = arith.mulf %122, %126 : vector<8x8xf32>
    %cst_82 = arith.constant dense<0.000000e+00> : vector<8x8xf32>
    %128 = tpu.matmul %127, %113, %cst_82 {dimension_numbers = #tpu.dot_dimension_numbers<[1], [0], [0], [1], [0, 0, 1, 1], [], []>} : vector<8x8xf32>, vector<8x8xf32>, vector<8x8xf32> -> vector<8x8xf32>
    %129 = tpu.concatenate %110, %128 in 0 : vector<8x8xf32>, vector<8x8xf32> -> vector<16x8xf32>
    %cst_83 = arith.constant dense<0.000000e+00> : vector<16x32xf32>
    %130 = tpu.matmul %129, %75, %cst_83 {dimension_numbers = #tpu.dot_dimension_numbers<[1], [0], [0], [1], [0, 0, 1, 1], [], []>} : vector<16x8xf32>, vector<8x32xf32>, vector<16x32xf32> -> vector<16x32xf32>
    %131 = arith.addf %67, %130 : vector<16x32xf32>
    %c2 = arith.constant 2 : index
    %c0_84 = arith.constant 0 : index
    %c0_85 = arith.constant 0 : index
    %132 = vector.load %arg4[%c2, %c0_84, %c0_85] : memref<4x32x8xf32, #tpu.memory_space<vmem>>, vector<1x32x8xf32>
    %133 = vector.shape_cast %132 : vector<1x32x8xf32> to vector<32x8xf32>
    %c2_86 = arith.constant 2 : index
    %c0_87 = arith.constant 0 : index
    %c0_88 = arith.constant 0 : index
    %134 = vector.load %arg6[%c2_86, %c0_87, %c0_88] : memref<4x32x8xf32, #tpu.memory_space<vmem>>, vector<1x32x8xf32>
    %135 = vector.shape_cast %134 : vector<1x32x8xf32> to vector<32x8xf32>
    %c2_89 = arith.constant 2 : index
    %c0_90 = arith.constant 0 : index
    %c0_91 = arith.constant 0 : index
    %136 = vector.load %arg8[%c2_89, %c0_90, %c0_91] : memref<4x32x8xf32, #tpu.memory_space<vmem>>, vector<1x32x8xf32>
    %137 = vector.shape_cast %136 : vector<1x32x8xf32> to vector<32x8xf32>
    %c2_92 = arith.constant 2 : index
    %c0_93 = arith.constant 0 : index
    %c0_94 = arith.constant 0 : index
    %138 = vector.load %arg10[%c2_92, %c0_93, %c0_94] : memref<4x8x32xf32, #tpu.memory_space<vmem>>, vector<1x8x32xf32>
    %139 = vector.shape_cast %138 : vector<1x8x32xf32> to vector<8x32xf32>
    %cst_95 = arith.constant dense<0.000000e+00> : vector<16x8xf32>
    %140 = tpu.matmul %0, %133, %cst_95 {dimension_numbers = #tpu.dot_dimension_numbers<[1], [0], [0], [1], [0, 0, 1, 1], [], []>} : vector<16x32xf32>, vector<32x8xf32>, vector<16x8xf32> -> vector<16x8xf32>
    %c2_96 = arith.constant 2 : index
    %c0_97 = arith.constant 0 : index
    %c0_98 = arith.constant 0 : index
    %141 = vector.load %arg5[%c2_96, %c0_97, %c0_98] : memref<4x1x8xf32, #tpu.memory_space<vmem>>, vector<1x1x8xf32>
    %142 = vector.shape_cast %141 : vector<1x1x8xf32> to vector<1x8xf32>
    %143 = vector.broadcast %142 : vector<1x8xf32> to vector<16x8xf32>
    %144 = arith.addf %140, %143 : vector<16x8xf32>
    %cst_99 = arith.constant 0.353553385 : f32
    %145 = vector.broadcast %cst_99 : f32 to vector<16x8xf32>
    %146 = arith.mulf %144, %145 : vector<16x8xf32>
    %cst_100 = arith.constant dense<0.000000e+00> : vector<16x8xf32>
    %147 = tpu.matmul %1, %135, %cst_100 {dimension_numbers = #tpu.dot_dimension_numbers<[1], [0], [0], [1], [0, 0, 1, 1], [], []>} : vector<16x32xf32>, vector<32x8xf32>, vector<16x8xf32> -> vector<16x8xf32>
    %c2_101 = arith.constant 2 : index
    %c0_102 = arith.constant 0 : index
    %c0_103 = arith.constant 0 : index
    %148 = vector.load %arg7[%c2_101, %c0_102, %c0_103] : memref<4x1x8xf32, #tpu.memory_space<vmem>>, vector<1x1x8xf32>
    %149 = vector.shape_cast %148 : vector<1x1x8xf32> to vector<1x8xf32>
    %150 = vector.broadcast %149 : vector<1x8xf32> to vector<16x8xf32>
    %151 = arith.addf %147, %150 : vector<16x8xf32>
    %cst_104 = arith.constant dense<0.000000e+00> : vector<16x8xf32>
    %152 = tpu.matmul %2, %137, %cst_104 {dimension_numbers = #tpu.dot_dimension_numbers<[1], [0], [0], [1], [0, 0, 1, 1], [], []>} : vector<16x32xf32>, vector<32x8xf32>, vector<16x8xf32> -> vector<16x8xf32>
    %c2_105 = arith.constant 2 : index
    %c0_106 = arith.constant 0 : index
    %c0_107 = arith.constant 0 : index
    %153 = vector.load %arg9[%c2_105, %c0_106, %c0_107] : memref<4x1x8xf32, #tpu.memory_space<vmem>>, vector<1x1x8xf32>
    %154 = vector.shape_cast %153 : vector<1x1x8xf32> to vector<1x8xf32>
    %155 = vector.broadcast %154 : vector<1x8xf32> to vector<16x8xf32>
    %156 = arith.addf %152, %155 : vector<16x8xf32>
    %157 = vector.extract_strided_slice %146 {offsets = [0, 0], sizes = [8, 8], strides = [1, 1]} : vector<16x8xf32> to vector<8x8xf32>
    %158 = vector.extract_strided_slice %151 {offsets = [0, 0], sizes = [8, 8], strides = [1, 1]} : vector<16x8xf32> to vector<8x8xf32>
    %159 = vector.extract_strided_slice %156 {offsets = [0, 0], sizes = [8, 8], strides = [1, 1]} : vector<16x8xf32> to vector<8x8xf32>
    %cst_108 = arith.constant dense<0.000000e+00> : vector<8x8xf32>
    %160 = tpu.matmul %157, %158, %cst_108 {dimension_numbers = #tpu.dot_dimension_numbers<[1], [1], [0], [0], [0, 0, 1, 0], [], []>} : vector<8x8xf32>, vector<8x8xf32>, vector<8x8xf32> -> vector<8x8xf32>
    %c0_109 = arith.constant 0 : index
    %c0_110 = arith.constant 0 : index
    %c0_111 = arith.constant 0 : index
    %161 = vector.load %arg3[%c0_109, %c0_110, %c0_111] : memref<2x8x8xf32, #tpu.memory_space<vmem>>, vector<1x8x8xf32>
    %162 = vector.shape_cast %161 : vector<1x8x8xf32> to vector<8x8xf32>
    %163 = arith.addf %160, %162 : vector<8x8xf32>
    %cst_112 = arith.constant dense<0xFF800000> : vector<8xf32>
    %164 = vector.multi_reduction <maximumf>, %163, %cst_112 [1] : vector<8x8xf32> to vector<8xf32>
    %165 = vector.shape_cast %164 : vector<8xf32> to vector<8x1xf32>
    %166 = vector.broadcast %165 : vector<8x1xf32> to vector<8x8xf32>
    %167 = arith.subf %163, %166 : vector<8x8xf32>
    %168 = math.exp %167 : vector<8x8xf32>
    %cst_113 = arith.constant dense<0.000000e+00> : vector<8xf32>
    %169 = vector.multi_reduction <add>, %168, %cst_113 [1] : vector<8x8xf32> to vector<8xf32>
    %170 = vector.shape_cast %169 : vector<8xf32> to vector<8x1xf32>
    %171 = tpu.reciprocal %170 {approx = true} : vector<8x1xf32> -> vector<8x1xf32>
    %172 = vector.broadcast %171 : vector<8x1xf32> to vector<8x8xf32>
    %173 = arith.mulf %168, %172 : vector<8x8xf32>
    %cst_114 = arith.constant dense<0.000000e+00> : vector<8x8xf32>
    %174 = tpu.matmul %173, %159, %cst_114 {dimension_numbers = #tpu.dot_dimension_numbers<[1], [0], [0], [1], [0, 0, 1, 1], [], []>} : vector<8x8xf32>, vector<8x8xf32>, vector<8x8xf32> -> vector<8x8xf32>
    %175 = vector.extract_strided_slice %146 {offsets = [8, 0], sizes = [8, 8], strides = [1, 1]} : vector<16x8xf32> to vector<8x8xf32>
    %176 = vector.extract_strided_slice %151 {offsets = [8, 0], sizes = [8, 8], strides = [1, 1]} : vector<16x8xf32> to vector<8x8xf32>
    %177 = vector.extract_strided_slice %156 {offsets = [8, 0], sizes = [8, 8], strides = [1, 1]} : vector<16x8xf32> to vector<8x8xf32>
    %cst_115 = arith.constant dense<0.000000e+00> : vector<8x8xf32>
    %178 = tpu.matmul %175, %176, %cst_115 {dimension_numbers = #tpu.dot_dimension_numbers<[1], [1], [0], [0], [0, 0, 1, 0], [], []>} : vector<8x8xf32>, vector<8x8xf32>, vector<8x8xf32> -> vector<8x8xf32>
    %c1_116 = arith.constant 1 : index
    %c0_117 = arith.constant 0 : index
    %c0_118 = arith.constant 0 : index
    %179 = vector.load %arg3[%c1_116, %c0_117, %c0_118] : memref<2x8x8xf32, #tpu.memory_space<vmem>>, vector<1x8x8xf32>
    %180 = vector.shape_cast %179 : vector<1x8x8xf32> to vector<8x8xf32>
    %181 = arith.addf %178, %180 : vector<8x8xf32>
    %cst_119 = arith.constant dense<0xFF800000> : vector<8xf32>
    %182 = vector.multi_reduction <maximumf>, %181, %cst_119 [1] : vector<8x8xf32> to vector<8xf32>
    %183 = vector.shape_cast %182 : vector<8xf32> to vector<8x1xf32>
    %184 = vector.broadcast %183 : vector<8x1xf32> to vector<8x8xf32>
    %185 = arith.subf %181, %184 : vector<8x8xf32>
    %186 = math.exp %185 : vector<8x8xf32>
    %cst_120 = arith.constant dense<0.000000e+00> : vector<8xf32>
    %187 = vector.multi_reduction <add>, %186, %cst_120 [1] : vector<8x8xf32> to vector<8xf32>
    %188 = vector.shape_cast %187 : vector<8xf32> to vector<8x1xf32>
    %189 = tpu.reciprocal %188 {approx = true} : vector<8x1xf32> -> vector<8x1xf32>
    %190 = vector.broadcast %189 : vector<8x1xf32> to vector<8x8xf32>
    %191 = arith.mulf %186, %190 : vector<8x8xf32>
    %cst_121 = arith.constant dense<0.000000e+00> : vector<8x8xf32>
    %192 = tpu.matmul %191, %177, %cst_121 {dimension_numbers = #tpu.dot_dimension_numbers<[1], [0], [0], [1], [0, 0, 1, 1], [], []>} : vector<8x8xf32>, vector<8x8xf32>, vector<8x8xf32> -> vector<8x8xf32>
    %193 = tpu.concatenate %174, %192 in 0 : vector<8x8xf32>, vector<8x8xf32> -> vector<16x8xf32>
    %cst_122 = arith.constant dense<0.000000e+00> : vector<16x32xf32>
    %194 = tpu.matmul %193, %139, %cst_122 {dimension_numbers = #tpu.dot_dimension_numbers<[1], [0], [0], [1], [0, 0, 1, 1], [], []>} : vector<16x8xf32>, vector<8x32xf32>, vector<16x32xf32> -> vector<16x32xf32>
    %195 = arith.addf %131, %194 : vector<16x32xf32>
    %c3 = arith.constant 3 : index
    %c0_123 = arith.constant 0 : index
    %c0_124 = arith.constant 0 : index
    %196 = vector.load %arg4[%c3, %c0_123, %c0_124] : memref<4x32x8xf32, #tpu.memory_space<vmem>>, vector<1x32x8xf32>
    %197 = vector.shape_cast %196 : vector<1x32x8xf32> to vector<32x8xf32>
    %c3_125 = arith.constant 3 : index
    %c0_126 = arith.constant 0 : index
    %c0_127 = arith.constant 0 : index
    %198 = vector.load %arg6[%c3_125, %c0_126, %c0_127] : memref<4x32x8xf32, #tpu.memory_space<vmem>>, vector<1x32x8xf32>
    %199 = vector.shape_cast %198 : vector<1x32x8xf32> to vector<32x8xf32>
    %c3_128 = arith.constant 3 : index
    %c0_129 = arith.constant 0 : index
    %c0_130 = arith.constant 0 : index
    %200 = vector.load %arg8[%c3_128, %c0_129, %c0_130] : memref<4x32x8xf32, #tpu.memory_space<vmem>>, vector<1x32x8xf32>
    %201 = vector.shape_cast %200 : vector<1x32x8xf32> to vector<32x8xf32>
    %c3_131 = arith.constant 3 : index
    %c0_132 = arith.constant 0 : index
    %c0_133 = arith.constant 0 : index
    %202 = vector.load %arg10[%c3_131, %c0_132, %c0_133] : memref<4x8x32xf32, #tpu.memory_space<vmem>>, vector<1x8x32xf32>
    %203 = vector.shape_cast %202 : vector<1x8x32xf32> to vector<8x32xf32>
    %cst_134 = arith.constant dense<0.000000e+00> : vector<16x8xf32>
    %204 = tpu.matmul %0, %197, %cst_134 {dimension_numbers = #tpu.dot_dimension_numbers<[1], [0], [0], [1], [0, 0, 1, 1], [], []>} : vector<16x32xf32>, vector<32x8xf32>, vector<16x8xf32> -> vector<16x8xf32>
    %c3_135 = arith.constant 3 : index
    %c0_136 = arith.constant 0 : index
    %c0_137 = arith.constant 0 : index
    %205 = vector.load %arg5[%c3_135, %c0_136, %c0_137] : memref<4x1x8xf32, #tpu.memory_space<vmem>>, vector<1x1x8xf32>
    %206 = vector.shape_cast %205 : vector<1x1x8xf32> to vector<1x8xf32>
    %207 = vector.broadcast %206 : vector<1x8xf32> to vector<16x8xf32>
    %208 = arith.addf %204, %207 : vector<16x8xf32>
    %cst_138 = arith.constant 0.353553385 : f32
    %209 = vector.broadcast %cst_138 : f32 to vector<16x8xf32>
    %210 = arith.mulf %208, %209 : vector<16x8xf32>
    %cst_139 = arith.constant dense<0.000000e+00> : vector<16x8xf32>
    %211 = tpu.matmul %1, %199, %cst_139 {dimension_numbers = #tpu.dot_dimension_numbers<[1], [0], [0], [1], [0, 0, 1, 1], [], []>} : vector<16x32xf32>, vector<32x8xf32>, vector<16x8xf32> -> vector<16x8xf32>
    %c3_140 = arith.constant 3 : index
    %c0_141 = arith.constant 0 : index
    %c0_142 = arith.constant 0 : index
    %212 = vector.load %arg7[%c3_140, %c0_141, %c0_142] : memref<4x1x8xf32, #tpu.memory_space<vmem>>, vector<1x1x8xf32>
    %213 = vector.shape_cast %212 : vector<1x1x8xf32> to vector<1x8xf32>
    %214 = vector.broadcast %213 : vector<1x8xf32> to vector<16x8xf32>
    %215 = arith.addf %211, %214 : vector<16x8xf32>
    %cst_143 = arith.constant dense<0.000000e+00> : vector<16x8xf32>
    %216 = tpu.matmul %2, %201, %cst_143 {dimension_numbers = #tpu.dot_dimension_numbers<[1], [0], [0], [1], [0, 0, 1, 1], [], []>} : vector<16x32xf32>, vector<32x8xf32>, vector<16x8xf32> -> vector<16x8xf32>
    %c3_144 = arith.constant 3 : index
    %c0_145 = arith.constant 0 : index
    %c0_146 = arith.constant 0 : index
    %217 = vector.load %arg9[%c3_144, %c0_145, %c0_146] : memref<4x1x8xf32, #tpu.memory_space<vmem>>, vector<1x1x8xf32>
    %218 = vector.shape_cast %217 : vector<1x1x8xf32> to vector<1x8xf32>
    %219 = vector.broadcast %218 : vector<1x8xf32> to vector<16x8xf32>
    %220 = arith.addf %216, %219 : vector<16x8xf32>
    %221 = vector.extract_strided_slice %210 {offsets = [0, 0], sizes = [8, 8], strides = [1, 1]} : vector<16x8xf32> to vector<8x8xf32>
    %222 = vector.extract_strided_slice %215 {offsets = [0, 0], sizes = [8, 8], strides = [1, 1]} : vector<16x8xf32> to vector<8x8xf32>
    %223 = vector.extract_strided_slice %220 {offsets = [0, 0], sizes = [8, 8], strides = [1, 1]} : vector<16x8xf32> to vector<8x8xf32>
    %cst_147 = arith.constant dense<0.000000e+00> : vector<8x8xf32>
    %224 = tpu.matmul %221, %222, %cst_147 {dimension_numbers = #tpu.dot_dimension_numbers<[1], [1], [0], [0], [0, 0, 1, 0], [], []>} : vector<8x8xf32>, vector<8x8xf32>, vector<8x8xf32> -> vector<8x8xf32>
    %c0_148 = arith.constant 0 : index
    %c0_149 = arith.constant 0 : index
    %c0_150 = arith.constant 0 : index
    %225 = vector.load %arg3[%c0_148, %c0_149, %c0_150] : memref<2x8x8xf32, #tpu.memory_space<vmem>>, vector<1x8x8xf32>
    %226 = vector.shape_cast %225 : vector<1x8x8xf32> to vector<8x8xf32>
    %227 = arith.addf %224, %226 : vector<8x8xf32>
    %cst_151 = arith.constant dense<0xFF800000> : vector<8xf32>
    %228 = vector.multi_reduction <maximumf>, %227, %cst_151 [1] : vector<8x8xf32> to vector<8xf32>
    %229 = vector.shape_cast %228 : vector<8xf32> to vector<8x1xf32>
    %230 = vector.broadcast %229 : vector<8x1xf32> to vector<8x8xf32>
    %231 = arith.subf %227, %230 : vector<8x8xf32>
    %232 = math.exp %231 : vector<8x8xf32>
    %cst_152 = arith.constant dense<0.000000e+00> : vector<8xf32>
    %233 = vector.multi_reduction <add>, %232, %cst_152 [1] : vector<8x8xf32> to vector<8xf32>
    %234 = vector.shape_cast %233 : vector<8xf32> to vector<8x1xf32>
    %235 = tpu.reciprocal %234 {approx = true} : vector<8x1xf32> -> vector<8x1xf32>
    %236 = vector.broadcast %235 : vector<8x1xf32> to vector<8x8xf32>
    %237 = arith.mulf %232, %236 : vector<8x8xf32>
    %cst_153 = arith.constant dense<0.000000e+00> : vector<8x8xf32>
    %238 = tpu.matmul %237, %223, %cst_153 {dimension_numbers = #tpu.dot_dimension_numbers<[1], [0], [0], [1], [0, 0, 1, 1], [], []>} : vector<8x8xf32>, vector<8x8xf32>, vector<8x8xf32> -> vector<8x8xf32>
    %239 = vector.extract_strided_slice %210 {offsets = [8, 0], sizes = [8, 8], strides = [1, 1]} : vector<16x8xf32> to vector<8x8xf32>
    %240 = vector.extract_strided_slice %215 {offsets = [8, 0], sizes = [8, 8], strides = [1, 1]} : vector<16x8xf32> to vector<8x8xf32>
    %241 = vector.extract_strided_slice %220 {offsets = [8, 0], sizes = [8, 8], strides = [1, 1]} : vector<16x8xf32> to vector<8x8xf32>
    %cst_154 = arith.constant dense<0.000000e+00> : vector<8x8xf32>
    %242 = tpu.matmul %239, %240, %cst_154 {dimension_numbers = #tpu.dot_dimension_numbers<[1], [1], [0], [0], [0, 0, 1, 0], [], []>} : vector<8x8xf32>, vector<8x8xf32>, vector<8x8xf32> -> vector<8x8xf32>
    %c1_155 = arith.constant 1 : index
    %c0_156 = arith.constant 0 : index
    %c0_157 = arith.constant 0 : index
    %243 = vector.load %arg3[%c1_155, %c0_156, %c0_157] : memref<2x8x8xf32, #tpu.memory_space<vmem>>, vector<1x8x8xf32>
    %244 = vector.shape_cast %243 : vector<1x8x8xf32> to vector<8x8xf32>
    %245 = arith.addf %242, %244 : vector<8x8xf32>
    %cst_158 = arith.constant dense<0xFF800000> : vector<8xf32>
    %246 = vector.multi_reduction <maximumf>, %245, %cst_158 [1] : vector<8x8xf32> to vector<8xf32>
    %247 = vector.shape_cast %246 : vector<8xf32> to vector<8x1xf32>
    %248 = vector.broadcast %247 : vector<8x1xf32> to vector<8x8xf32>
    %249 = arith.subf %245, %248 : vector<8x8xf32>
    %250 = math.exp %249 : vector<8x8xf32>
    %cst_159 = arith.constant dense<0.000000e+00> : vector<8xf32>
    %251 = vector.multi_reduction <add>, %250, %cst_159 [1] : vector<8x8xf32> to vector<8xf32>
    %252 = vector.shape_cast %251 : vector<8xf32> to vector<8x1xf32>
    %253 = tpu.reciprocal %252 {approx = true} : vector<8x1xf32> -> vector<8x1xf32>
    %254 = vector.broadcast %253 : vector<8x1xf32> to vector<8x8xf32>
    %255 = arith.mulf %250, %254 : vector<8x8xf32>
    %cst_160 = arith.constant dense<0.000000e+00> : vector<8x8xf32>
    %256 = tpu.matmul %255, %241, %cst_160 {dimension_numbers = #tpu.dot_dimension_numbers<[1], [0], [0], [1], [0, 0, 1, 1], [], []>} : vector<8x8xf32>, vector<8x8xf32>, vector<8x8xf32> -> vector<8x8xf32>
    %257 = tpu.concatenate %238, %256 in 0 : vector<8x8xf32>, vector<8x8xf32> -> vector<16x8xf32>
    %cst_161 = arith.constant dense<0.000000e+00> : vector<16x32xf32>
    %258 = tpu.matmul %257, %203, %cst_161 {dimension_numbers = #tpu.dot_dimension_numbers<[1], [0], [0], [1], [0, 0, 1, 1], [], []>} : vector<16x8xf32>, vector<8x32xf32>, vector<16x32xf32> -> vector<16x32xf32>
    %259 = arith.addf %195, %258 : vector<16x32xf32>
    %c0_162 = arith.constant 0 : index
    %c0_163 = arith.constant 0 : index
    %260 = vector.load %arg11[%c0_162, %c0_163] : memref<1x32xf32, #tpu.memory_space<vmem>>, vector<1x32xf32>
    %261 = vector.broadcast %260 : vector<1x32xf32> to vector<16x32xf32>
    %262 = arith.addf %259, %261 : vector<16x32xf32>
    %c0_164 = arith.constant 0 : index
    %c0_165 = arith.constant 0 : index
    %263 = vector.load %arg12[%c0_164, %c0_165] : memref<16x32xf32, #tpu.memory_space<vmem>>, vector<16x32xf32>
    tpu.vector_store %arg12[%c0_164, %c0_165], %262 {strides = array<i32>} : memref<16x32xf32, #tpu.memory_space<vmem>>, vector<16x32xf32>,
    return
  }
}

</mosaic_0001>

<llo_original>
// kernel: tpu_custom_call.1
$region0: #{tpu_custom_call.1}
  #allocation0 [shape = 'u32[]', space=smem, size = 0x4, offset = 0x4, fixed_abs, tag = 'smem constant byte address 0x4 - core index']
  #allocation1 [shape = 'u32[144,128]{1,0:T(1,128)}', space=vmem, size = 0x12000, scoped, tag = 'internal scratch']
  %s0 = inlined_call_operand.vmem [shape: f32[16,32], index: 0, kind: input, shape index: {}]
  %s1 = inlined_call_operand.vmem [shape: f32[16,32], index: 1, kind: input, shape index: {}]
  %s2 = inlined_call_operand.vmem [shape: f32[16,32], index: 2, kind: input, shape index: {}]
  %s3 = inlined_call_operand.vmem [shape: f32[2,8,8], index: 3, kind: input, shape index: {}]
  %s4 = inlined_call_operand.vmem [shape: f32[4,32,8], index: 4, kind: input, shape index: {}]
  %s5 = inlined_call_operand.vmem [shape: f32[4,1,8], index: 5, kind: input, shape index: {}]
  %s6 = inlined_call_operand.vmem [shape: f32[4,32,8], index: 6, kind: input, shape index: {}]
  %s7 = inlined_call_operand.vmem [shape: f32[4,1,8], index: 7, kind: input, shape index: {}]
  %s8 = inlined_call_operand.vmem [shape: f32[4,32,8], index: 8, kind: input, shape index: {}]
  %s9 = inlined_call_operand.vmem [shape: f32[4,1,8], index: 9, kind: input, shape index: {}]
  %s10 = inlined_call_operand.vmem [shape: f32[4,8,32], index: 10, kind: input, shape index: {}]
  %s11 = inlined_call_operand.vmem [shape: f32[1,32], index: 11, kind: input, shape index: {}]
  %s12 = inlined_call_operand.hbm [shape: f32[16,32], index: 12, kind: output, shape index: {}]
  %s13 = sld [smem:[#allocation0]]
  $region58: #{tpu_custom_call.1} parent=0
    _
  %s15 = ssub.s32 1, %s13
  %s16 = scalar_select 0, %s15, %s13
  $region1: #{tpu_custom_call.1} parent=0
    #allocation2 [shape = 'u8[8192]{0}', space=vmem, size = 0x2000, scoped, tag = 'output window, operand 0, single buffered']
    #allocation3 [shape = 's32[1]{0}', space=sflag, size = 0x4, scoped, tag = 'scoped memory for tpu_custom_call.1']
    %17 = vsyncpa [#allocation3], 0
    // Predicated region
    $region2: #{tpu_custom_call.1} parent=1 // pred_check
      _
    $region3: #{tpu_custom_call.1} parent=1 // pred_check_branch
      %19 = sbr.rel (0) target = $region5
    $region4: #{tpu_custom_call.1} parent=1 // pred_region
      _
    $region5: #{tpu_custom_call.1} parent=1 // pred_fallthru
      _
    // Predicated region
    $region6: #{tpu_custom_call.1} parent=1 // pred_check
      _
    $region7: #{tpu_custom_call.1} parent=1 // pred_check_branch
      %21 = sbr.rel (0) target = $region9
    $region8: #{tpu_custom_call.1} parent=1 // pred_region
      _
    $region9: #{tpu_custom_call.1} parent=1 // pred_fallthru
      _
    // Predicated region
    $region10: #{tpu_custom_call.1} parent=1 // pred_check
      _
    $region11: #{tpu_custom_call.1} parent=1 // pred_check_branch
      %23 = sbr.rel (0) target = $region13
    $region12: #{tpu_custom_call.1} parent=1 // pred_region
      _
    $region13: #{tpu_custom_call.1} parent=1 // pred_fallthru
      _
    // Predicated region
    $region14: #{tpu_custom_call.1} parent=1 // pred_check
      _
    $region15: #{tpu_custom_call.1} parent=1 // pred_check_branch
      %25 = sbr.rel (0) target = $region17
    $region16: #{tpu_custom_call.1} parent=1 // pred_region
      _
    $region17: #{tpu_custom_call.1} parent=1 // pred_fallthru
      _
    // Predicated region
    $region18: #{tpu_custom_call.1} parent=1 // pred_check
      _
    $region19: #{tpu_custom_call.1} parent=1 // pred_check_branch
      %27 = sbr.rel (0) target = $region21
    $region20: #{tpu_custom_call.1} parent=1 // pred_region
      _
    $region21: #{tpu_custom_call.1} parent=1 // pred_fallthru
      _
    // Predicated region
    $region22: #{tpu_custom_call.1} parent=1 // pred_check
      _
    $region23: #{tpu_custom_call.1} parent=1 // pred_check_branch
      %29 = sbr.rel (0) target = $region25
    $region24: #{tpu_custom_call.1} parent=1 // pred_region
      _
    $region25: #{tpu_custom_call.1} parent=1 // pred_fallthru
      _
    // Predicated region
    $region26: #{tpu_custom_call.1} parent=1 // pred_check
      _
    $region27: #{tpu_custom_call.1} parent=1 // pred_check_branch
      %31 = sbr.rel (0) target = $region29
    $region28: #{tpu_custom_call.1} parent=1 // pred_region
      _
    $region29: #{tpu_custom_call.1} parent=1 // pred_fallthru
      _
    // Predicated region
    $region30: #{tpu_custom_call.1} parent=1 // pred_check
      _
    $region31: #{tpu_custom_call.1} parent=1 // pred_check_branch
      %33 = sbr.rel (0) target = $region33
    $region32: #{tpu_custom_call.1} parent=1 // pred_region
      _
    $region33: #{tpu_custom_call.1} parent=1 // pred_fallthru
      _
    // Predicated region
    $region34: #{tpu_custom_call.1} parent=1 // pred_check
      _
    $region35: #{tpu_custom_call.1} parent=1 // pred_check_branch
      %35 = sbr.rel (0) target = $region37
    $region36: #{tpu_custom_call.1} parent=1 // pred_region
      _
    $region37: #{tpu_custom_call.1} parent=1 // pred_fallthru
      _
    // Predicated region
    $region38: #{tpu_custom_call.1} parent=1 // pred_check
      _
    $region39: #{tpu_custom_call.1} parent=1 // pred_check_branch
      %37 = sbr.rel (0) target = $region41
    $region40: #{tpu_custom_call.1} parent=1 // pred_region
      _
    $region41: #{tpu_custom_call.1} parent=1 // pred_fallthru
      _
    // Predicated region
    $region42: #{tpu_custom_call.1} parent=1 // pred_check
      _
    $region43: #{tpu_custom_call.1} parent=1 // pred_check_branch
      %39 = sbr.rel (0) target = $region45
    $region44: #{tpu_custom_call.1} parent=1 // pred_region
      _
    $region45: #{tpu_custom_call.1} parent=1 // pred_fallthru
      _
    // Predicated region
    $region46: #{tpu_custom_call.1} parent=1 // pred_check
      _
    $region47: #{tpu_custom_call.1} parent=1 // pred_check_branch
      %41 = sbr.rel (0) target = $region49
    $region48: #{tpu_custom_call.1} parent=1 // pred_region
      _
    $region49: #{tpu_custom_call.1} parent=1 // pred_fallthru
      _
    %v42 = vld [vmem:[%s0] sm:$0xff]
    %v43 = vld [vmem:[%s0 + $0x8] sm:$0xff]
    %v44 = vld [vmem:[%s1] sm:$0xff]
    %v45 = vld [vmem:[%s1 + $0x8] sm:$0xff]
    %v46 = vld [vmem:[%s2] sm:$0xff]
    %v47 = vld [vmem:[%s2 + $0x8] sm:$0xff]
    %v48 = vld [vmem:[%s4] sm:$0xff]
    %v49 = vld [vmem:[%s4 + $0x8] sm:$0xff]
    %v50 = vld [vmem:[%s4 + $0x10] sm:$0xff]
    %v51 = vld [vmem:[%s4 + $0x18] sm:$0xff]
    %v52 = vld [vmem:[%s6] sm:$0xff]
    %v53 = vld [vmem:[%s6 + $0x8] sm:$0xff]
    %v54 = vld [vmem:[%s6 + $0x10] sm:$0xff]
    %v55 = vld [vmem:[%s6 + $0x18] sm:$0xff]
    %v56 = vld [vmem:[%s8] sm:$0xff]
    %v57 = vld [vmem:[%s8 + $0x8] sm:$0xff]
    %v58 = vld [vmem:[%s8 + $0x10] sm:$0xff]
    %v59 = vld [vmem:[%s8 + $0x18] sm:$0xff]
    %v60 = vld [vmem:[%s10] sm:$0xff]
    %v61 = vld [vmem:[%s5] sm:$0x1]
    %v63 = vlaneseq
    %v64 = vshrl.u32 %v63, 7
    %v65 = vsub.s32 0, %v64
    %v66 = vrot.slane %v61, %v65
    %vm68 = vcmask 261120
    %v70 = vsel %vm68, %v42, 0
    %v73 = vsel %vm68, %v43, 0
    %75 = vmatprep.subr.mxu0 0.0
    %76 = vmatpush1.msra.mxu0 %v48
    %77 = vmatprep.subr.mxu0 0.0
    %78 = vmatpush1.msra.mxu0 %v49
    %79 = vmatprep.subr.mxu0 0.0
    %80 = vmatpush1.msra.mxu0 %v50
    %81 = vmatprep.subr.mxu0 0.0
    %82 = vmatpush1.msra.mxu0 %v51
    %83 = vmatprep.subr.mxu0 0.0
    %84 = vmatpush1.msra.mxu0 0.0
    %85 = vmatprep.subr.mxu0 0.0
    %86 = vmatpush1.msra.mxu0 0.0
    %87 = vmatprep.subr.mxu0 0.0
    %88 = vmatpush1.msra.mxu0 0.0
    %89 = vmatprep.subr.mxu0 0.0
    %90 = vmatpush1.msra.mxu0 0.0
    %91 = vmatprep.subr.mxu0 0.0
    %92 = vmatpush1.msra.mxu0 0.0
    %93 = vmatprep.subr.mxu0 0.0
    %94 = vmatpush1.msra.mxu0 0.0
    %95 = vmatprep.subr.mxu0 0.0
    %96 = vmatpush1.msra.mxu0 0.0
    %97 = vmatprep.subr.mxu0 0.0
    %98 = vmatpush1.msra.mxu0 0.0
    %99 = vmatprep.subr.mxu0 0.0
    %100 = vmatpush1.msra.mxu0 0.0
    %101 = vmatprep.subr.mxu0 0.0
    %102 = vmatpush1.msra.mxu0 0.0
    %103 = vmatprep.subr.mxu0 0.0
    %104 = vmatpush1.msra.mxu0 0.0
    %105 = vmatprep.subr.mxu0 0.0
    %106 = vmatpush1.msra.mxu0 0.0
    %107 = vmatprep.subr.mxu0 0.0
    %108 = vmatpush1.msra.mxu0 0.0
    %109 = vmatprep.subr.mxu0 0.0
    %110 = vmatpush1.msra.mxu0 0.0
    %111 = vmatprep.subr.mxu0 0.0
    %112 = vmatpush1.msra.mxu0 0.0
    %113 = vmatprep.subr.mxu0 0.0
    %114 = vmatpush1.msra.mxu0 0.0
    %115 = vmatprep.subr.mxu0 0.0
    %116 = vmatpush1.msra.mxu0 0.0
    %117 = vmatprep.subr.mxu0 0.0
    %118 = vmatpush1.msra.mxu0 0.0
    %119 = vmatprep.subr.mxu0 0.0
    %120 = vmatpush1.msra.mxu0 0.0
    %121 = vmatprep.subr.mxu0 0.0
    %122 = vmatpush1.msra.mxu0 0.0
    %123 = vmatprep.subr.mxu0 0.0
    %124 = vmatpush1.msra.mxu0 0.0
    %125 = vmatprep.subr.mxu0 0.0
    %126 = vmatpush1.msra.mxu0 0.0
    %127 = vmatprep.subr.mxu0 0.0
    %128 = vmatpush1.msra.mxu0 0.0
    %129 = vmatprep.subr.mxu0 0.0
    %130 = vmatpush1.msra.mxu0 0.0
    %131 = vmatprep.subr.mxu0 0.0
    %132 = vmatpush1.msra.mxu0 0.0
    %133 = vmatprep.subr.mxu0 0.0
    %134 = vmatpush1.msra.mxu0 0.0
    %135 = vmatprep.subr.mxu0 0.0
    %136 = vmatpush1.msra.mxu0 0.0
    %137 = vmatprep.subr.mxu0 0.0
    %138 = vmatpush1.msra.mxu0 0.0
    %139 = vmatprep.mubr.f32.mxu0 0.0
    %140 = vmatmul.mubr.f32.gmra.mrb[0].mxu0 %v70
    %v141 = vpop.f32.mrb[0].mxu0
    %v142 = vadd.f32 %v66, %v141
    %v143 = vpop.f32.mrb[0].mxu0
    %144 = vmatprep.mubr.f32.mxu0 0.0
    %145 = vmatmul.mubr.f32.gmra.mrb[0].mxu0 %v73
    %v146 = vpop.f32.mrb[0].mxu0
    %v147 = vadd.f32 %v66, %v146
    %v148 = vpop.f32.mrb[0].mxu0
    %149 = vdwg.mxu0
    %v150 = vmul.f32 %v142, 0.35355338
    %v151 = vmul.f32 %v147, 0.35355338
    %v152 = vld [vmem:[%s7] sm:$0x1]
    %v154 = vlaneseq
    %v155 = vshrl.u32 %v154, 7
    %v156 = vsub.s32 0, %v155
    %v157 = vrot.slane %v152, %v156
    %v160 = vsel %vm68, %v44, 0
    %v163 = vsel %vm68, %v45, 0
    %165 = vmatprep.subr.mxu0 0.0
    %166 = vmatpush1.msra.mxu0 %v52
    %167 = vmatprep.subr.mxu0 0.0
    %168 = vmatpush1.msra.mxu0 %v53
    %169 = vmatprep.subr.mxu0 0.0
    %170 = vmatpush1.msra.mxu0 %v54
    %171 = vmatprep.subr.mxu0 0.0
    %172 = vmatpush1.msra.mxu0 %v55
    %173 = vmatprep.subr.mxu0 0.0
    %174 = vmatpush1.msra.mxu0 0.0
    %175 = vmatprep.subr.mxu0 0.0
    %176 = vmatpush1.msra.mxu0 0.0
    %177 = vmatprep.subr.mxu0 0.0
    %178 = vmatpush1.msra.mxu0 0.0
    %179 = vmatprep.subr.mxu0 0.0
    %180 = vmatpush1.msra.mxu0 0.0
    %181 = vmatprep.subr.mxu0 0.0
    %182 = vmatpush1.msra.mxu0 0.0
    %183 = vmatprep.subr.mxu0 0.0
    %184 = vmatpush1.msra.mxu0 0.0
    %185 = vmatprep.subr.mxu0 0.0
    %186 = vmatpush1.msra.mxu0 0.0
    %187 = vmatprep.subr.mxu0 0.0
    %188 = vmatpush1.msra.mxu0 0.0
    %189 = vmatprep.subr.mxu0 0.0
    %190 = vmatpush1.msra.mxu0 0.0
    %191 = vmatprep.subr.mxu0 0.0
    %192 = vmatpush1.msra.mxu0 0.0
    %193 = vmatprep.subr.mxu0 0.0
    %194 = vmatpush1.msra.mxu0 0.0
    %195 = vmatprep.subr.mxu0 0.0
    %196 = vmatpush1.msra.mxu0 0.0
    %197 = vmatprep.subr.mxu0 0.0
    %198 = vmatpush1.msra.mxu0 0.0
    %199 = vmatprep.subr.mxu0 0.0
    %200 = vmatpush1.msra.mxu0 0.0
    %201 = vmatprep.subr.mxu0 0.0
    %202 = vmatpush1.msra.mxu0 0.0
    %203 = vmatprep.subr.mxu0 0.0
    %204 = vmatpush1.msra.mxu0 0.0
    %205 = vmatprep.subr.mxu0 0.0
    %206 = vmatpush1.msra.mxu0 0.0
    %207 = vmatprep.subr.mxu0 0.0
    %208 = vmatpush1.msra.mxu0 0.0
    %209 = vmatprep.subr.mxu0 0.0
    %210 = vmatpush1.msra.mxu0 0.0
    %211 = vmatprep.subr.mxu0 0.0
    %212 = vmatpush1.msra.mxu0 0.0
    %213 = vmatprep.subr.mxu0 0.0
    %214 = vmatpush1.msra.mxu0 0.0
    %215 = vmatprep.subr.mxu0 0.0
    %216 = vmatpush1.msra.mxu0 0.0
    %217 = vmatprep.subr.mxu0 0.0
    %218 = vmatpush1.msra.mxu0 0.0
    %219 = vmatprep.subr.mxu0 0.0
    %220 = vmatpush1.msra.mxu0 0.0
    %221 = vmatprep.subr.mxu0 0.0
    %222 = vmatpush1.msra.mxu0 0.0
    %223 = vmatprep.subr.mxu0 0.0
    %224 = vmatpush1.msra.mxu0 0.0
    %225 = vmatprep.subr.mxu0 0.0
    %226 = vmatpush1.msra.mxu0 0.0
    %227 = vmatprep.subr.mxu0 0.0
    %228 = vmatpush1.msra.mxu0 0.0
    %229 = vmatprep.mubr.f32.mxu0 0.0
    %230 = vmatmul.mubr.f32.gmra.mrb[0].mxu0 %v160
    %v231 = vpop.f32.mrb[0].mxu0
    %v232 = vadd.f32 %v157, %v231
    %v233 = vpop.f32.mrb[0].mxu0
    %234 = vmatprep.mubr.f32.mxu0 0.0
    %235 = vmatmul.mubr.f32.gmra.mrb[0].mxu0 %v163
    %v236 = vpop.f32.mrb[0].mxu0
    %v237 = vadd.f32 %v157, %v236
    %v238 = vpop.f32.mrb[0].mxu0
    %239 = vdwg.mxu0
    %v240 = vld [vmem:[%s9] sm:$0x1]
    %v242 = vlaneseq
    %v243 = vshrl.u32 %v242, 7
    %v244 = vsub.s32 0, %v243
    %v245 = vrot.slane %v240, %v244
    %v248 = vsel %vm68, %v46, 0
    %v251 = vsel %vm68, %v47, 0
    %253 = vmatprep.subr.mxu0 0.0
    %254 = vmatpush1.msra.mxu0 %v56
    %255 = vmatprep.subr.mxu0 0.0
    %256 = vmatpush1.msra.mxu0 %v57
    %257 = vmatprep.subr.mxu0 0.0
    %258 = vmatpush1.msra.mxu0 %v58
    %259 = vmatprep.subr.mxu0 0.0
    %260 = vmatpush1.msra.mxu0 %v59
    %261 = vmatprep.subr.mxu0 0.0
    %262 = vmatpush1.msra.mxu0 0.0
    %263 = vmatprep.subr.mxu0 0.0
    %264 = vmatpush1.msra.mxu0 0.0
    %265 = vmatprep.subr.mxu0 0.0
    %266 = vmatpush1.msra.mxu0 0.0
    %267 = vmatprep.subr.mxu0 0.0
    %268 = vmatpush1.msra.mxu0 0.0
    %269 = vmatprep.subr.mxu0 0.0
    %270 = vmatpush1.msra.mxu0 0.0
    %271 = vmatprep.subr.mxu0 0.0
    %272 = vmatpush1.msra.mxu0 0.0
    %273 = vmatprep.subr.mxu0 0.0
    %274 = vmatpush1.msra.mxu0 0.0
    %275 = vmatprep.subr.mxu0 0.0
    %276 = vmatpush1.msra.mxu0 0.0
    %277 = vmatprep.subr.mxu0 0.0
    %278 = vmatpush1.msra.mxu0 0.0
    %279 = vmatprep.subr.mxu0 0.0
    %280 = vmatpush1.msra.mxu0 0.0
    %281 = vmatprep.subr.mxu0 0.0
    %282 = vmatpush1.msra.mxu0 0.0
    %283 = vmatprep.subr.mxu0 0.0
    %284 = vmatpush1.msra.mxu0 0.0
    %285 = vmatprep.subr.mxu0 0.0
    %286 = vmatpush1.msra.mxu0 0.0
    %287 = vmatprep.subr.mxu0 0.0
    %288 = vmatpush1.msra.mxu0 0.0
    %289 = vmatprep.subr.mxu0 0.0
    %290 = vmatpush1.msra.mxu0 0.0
    %291 = vmatprep.subr.mxu0 0.0
    %292 = vmatpush1.msra.mxu0 0.0
    %293 = vmatprep.subr.mxu0 0.0
    %294 = vmatpush1.msra.mxu0 0.0
    %295 = vmatprep.subr.mxu0 0.0
    %296 = vmatpush1.msra.mxu0 0.0
    %297 = vmatprep.subr.mxu0 0.0
    %298 = vmatpush1.msra.mxu0 0.0
    %299 = vmatprep.subr.mxu0 0.0
    %300 = vmatpush1.msra.mxu0 0.0
    %301 = vmatprep.subr.mxu0 0.0
    %302 = vmatpush1.msra.mxu0 0.0
    %303 = vmatprep.subr.mxu0 0.0
    %304 = vmatpush1.msra.mxu0 0.0
    %305 = vmatprep.subr.mxu0 0.0
    %306 = vmatpush1.msra.mxu0 0.0
    %307 = vmatprep.subr.mxu0 0.0
    %308 = vmatpush1.msra.mxu0 0.0
    %309 = vmatprep.subr.mxu0 0.0
    %310 = vmatpush1.msra.mxu0 0.0
    %311 = vmatprep.subr.mxu0 0.0
    %312 = vmatpush1.msra.mxu0 0.0
    %313 = vmatprep.subr.mxu0 0.0
    %314 = vmatpush1.msra.mxu0 0.0
    %315 = vmatprep.subr.mxu0 0.0
    %316 = vmatpush1.msra.mxu0 0.0
    %317 = vmatprep.mubr.f32.mxu0 0.0
    %318 = vmatmul.mubr.f32.gmra.mrb[0].mxu0 %v248
    %v319 = vpop.f32.mrb[0].mxu0
    %v320 = vadd.f32 %v245, %v319
    %v321 = vpop.f32.mrb[0].mxu0
    %322 = vmatprep.mubr.f32.mxu0 0.0
    %323 = vmatmul.mubr.f32.gmra.mrb[0].mxu0 %v251
    %v324 = vpop.f32.mrb[0].mxu0
    %v325 = vadd.f32 %v245, %v324
    %v326 = vpop.f32.mrb[0].mxu0
    %327 = vdwg.mxu0
    %v328 = vld [vmem:[%s3] sm:$0xff]
    %vm329 = vcmask 64512
    %v331 = vsel %vm329, %v150, 0
    %v334 = vsel %vm329, %v232, 0
    %336 = vmatprep.subr.mxu0 0.0
    %337 = vmatpush1.xpose.msra.mxu0 %v334
    %338 = vmatprep.subr.mxu0 0.0
    %339 = vmatpush1.xpose.msra.mxu0 0.0
    %340 = vmatprep.subr.mxu0 0.0
    %341 = vmatpush1.xpose.msra.mxu0 0.0
    %342 = vmatprep.subr.mxu0 0.0
    %343 = vmatpush1.xpose.msra.mxu0 0.0
    %344 = vmatprep.subr.mxu0 0.0
    %345 = vmatpush1.xpose.msra.mxu0 0.0
    %346 = vmatprep.subr.mxu0 0.0
    %347 = vmatpush1.xpose.msra.mxu0 0.0
    %348 = vmatprep.subr.mxu0 0.0
    %349 = vmatpush1.xpose.msra.mxu0 0.0
    %350 = vmatprep.subr.mxu0 0.0
    %351 = vmatpush1.xpose.msra.mxu0 0.0
    %352 = vmatprep.subr.mxu0 0.0
    %353 = vmatpush1.xpose.msra.mxu0 0.0
    %354 = vmatprep.subr.mxu0 0.0
    %355 = vmatpush1.xpose.msra.mxu0 0.0
    %356 = vmatprep.subr.mxu0 0.0
    %357 = vmatpush1.xpose.msra.mxu0 0.0
    %358 = vmatprep.subr.mxu0 0.0
    %359 = vmatpush1.xpose.msra.mxu0 0.0
    %360 = vmatprep.subr.mxu0 0.0
    %361 = vmatpush1.xpose.msra.mxu0 0.0
    %362 = vmatprep.subr.mxu0 0.0
    %363 = vmatpush1.xpose.msra.mxu0 0.0
    %364 = vmatprep.subr.mxu0 0.0
    %365 = vmatpush1.xpose.msra.mxu0 0.0
    %366 = vmatprep.subr.mxu0 0.0
    %367 = vmatpush1.xpose.msra.mxu0 0.0
    %368 = vmatprep.subr.mxu0 0.0
    %369 = vmatpush1.xpose.msra.mxu0 0.0
    %370 = vmatprep.subr.mxu0 0.0
    %371 = vmatpush1.xpose.msra.mxu0 0.0
    %372 = vmatprep.subr.mxu0 0.0
    %373 = vmatpush1.xpose.msra.mxu0 0.0
    %374 = vmatprep.subr.mxu0 0.0
    %375 = vmatpush1.xpose.msra.mxu0 0.0
    %376 = vmatprep.subr.mxu0 0.0
    %377 = vmatpush1.xpose.msra.mxu0 0.0
    %378 = vmatprep.subr.mxu0 0.0
    %379 = vmatpush1.xpose.msra.mxu0 0.0
    %380 = vmatprep.subr.mxu0 0.0
    %381 = vmatpush1.xpose.msra.mxu0 0.0
    %382 = vmatprep.subr.mxu0 0.0
    %383 = vmatpush1.xpose.msra.mxu0 0.0
    %384 = vmatprep.subr.mxu0 0.0
    %385 = vmatpush1.xpose.msra.mxu0 0.0
    %386 = vmatprep.subr.mxu0 0.0
    %387 = vmatpush1.xpose.msra.mxu0 0.0
    %388 = vmatprep.subr.mxu0 0.0
    %389 = vmatpush1.xpose.msra.mxu0 0.0
    %390 = vmatprep.subr.mxu0 0.0
    %391 = vmatpush1.xpose.msra.mxu0 0.0
    %392 = vmatprep.subr.mxu0 0.0
    %393 = vmatpush1.xpose.msra.mxu0 0.0
    %394 = vmatprep.subr.mxu0 0.0
    %395 = vmatpush1.xpose.msra.mxu0 0.0
    %396 = vmatprep.subr.mxu0 0.0
    %397 = vmatpush1.xpose.msra.mxu0 0.0
    %398 = vmatprep.subr.mxu0 0.0
    %399 = vmatpush1.xpose.msra.mxu0 0.0
    %400 = vmatprep.mubr.f32.mxu0 0.0
    %401 = vmatmul.mubr.f32.gmra.mrb[0].mxu0 %v331
    %v402 = vpop.f32.mrb[0].mxu0
    %v403 = vadd.f32 %v328, %v402
    %v404 = vpop.f32.mrb[0].mxu0
    %405 = vdwg.mxu0
    %v406 = vsel %vm329, %v403, -inf
    %407 = vmax.xlane.f32.xlu0 %v406
    %v408 = vpop.xlane.xlu0 %407
    %v409 = vsub.f32 %v403, %v408
    %v410 = vmul.f32 %v409, 1.442695
    %v411 = vpow.pop %v410
    %v412 = vsel %vm329, %v411, 0.0
    %413 = vadd.xlane.f32.xlu0 %v412
    %v414 = vpop.xlane.xlu0 %413
    %v415 = vrcp.pop %v414
    %v416 = vmul.f32 %v411, %v415
    %v418 = vsel %vm329, %v416, 0
    %420 = vmatprep.subr.mxu0 0.0
    %421 = vmatpush1.msra.mxu0 %v320
    %422 = vmatprep.subr.mxu0 0.0
    %423 = vmatpush1.msra.mxu0 0.0
    %424 = vmatprep.subr.mxu0 0.0
    %425 = vmatpush1.msra.mxu0 0.0
    %426 = vmatprep.subr.mxu0 0.0
    %427 = vmatpush1.msra.mxu0 0.0
    %428 = vmatprep.subr.mxu0 0.0
    %429 = vmatpush1.msra.mxu0 0.0
    %430 = vmatprep.subr.mxu0 0.0
    %431 = vmatpush1.msra.mxu0 0.0
    %432 = vmatprep.subr.mxu0 0.0
    %433 = vmatpush1.msra.mxu0 0.0
    %434 = vmatprep.subr.mxu0 0.0
    %435 = vmatpush1.msra.mxu0 0.0
    %436 = vmatprep.subr.mxu0 0.0
    %437 = vmatpush1.msra.mxu0 0.0
    %438 = vmatprep.subr.mxu0 0.0
    %439 = vmatpush1.msra.mxu0 0.0
    %440 = vmatprep.subr.mxu0 0.0
    %441 = vmatpush1.msra.mxu0 0.0
    %442 = vmatprep.subr.mxu0 0.0
    %443 = vmatpush1.msra.mxu0 0.0
    %444 = vmatprep.subr.mxu0 0.0
    %445 = vmatpush1.msra.mxu0 0.0
    %446 = vmatprep.subr.mxu0 0.0
    %447 = vmatpush1.msra.mxu0 0.0
    %448 = vmatprep.subr.mxu0 0.0
    %449 = vmatpush1.msra.mxu0 0.0
    %450 = vmatprep.subr.mxu0 0.0
    %451 = vmatpush1.msra.mxu0 0.0
    %452 = vmatprep.subr.mxu0 0.0
    %453 = vmatpush1.msra.mxu0 0.0
    %454 = vmatprep.subr.mxu0 0.0
    %455 = vmatpush1.msra.mxu0 0.0
    %456 = vmatprep.subr.mxu0 0.0
    %457 = vmatpush1.msra.mxu0 0.0
    %458 = vmatprep.subr.mxu0 0.0
    %459 = vmatpush1.msra.mxu0 0.0
    %460 = vmatprep.subr.mxu0 0.0
    %461 = vmatpush1.msra.mxu0 0.0
    %462 = vmatprep.subr.mxu0 0.0
    %463 = vmatpush1.msra.mxu0 0.0
    %464 = vmatprep.subr.mxu0 0.0
    %465 = vmatpush1.msra.mxu0 0.0
    %466 = vmatprep.subr.mxu0 0.0
    %467 = vmatpush1.msra.mxu0 0.0
    %468 = vmatprep.subr.mxu0 0.0
    %469 = vmatpush1.msra.mxu0 0.0
    %470 = vmatprep.subr.mxu0 0.0
    %471 = vmatpush1.msra.mxu0 0.0
    %472 = vmatprep.subr.mxu0 0.0
    %473 = vmatpush1.msra.mxu0 0.0
    %474 = vmatprep.subr.mxu0 0.0
    %475 = vmatpush1.msra.mxu0 0.0
    %476 = vmatprep.subr.mxu0 0.0
    %477 = vmatpush1.msra.mxu0 0.0
    %478 = vmatprep.subr.mxu0 0.0
    %479 = vmatpush1.msra.mxu0 0.0
    %480 = vmatprep.subr.mxu0 0.0
    %481 = vmatpush1.msra.mxu0 0.0
    %482 = vmatprep.subr.mxu0 0.0
    %483 = vmatpush1.msra.mxu0 0.0
    %484 = vmatprep.mubr.f32.mxu0 0.0
    %485 = vmatmul.mubr.f32.gmra.mrb[0].mxu0 %v418
    %v486 = vpop.f32.mrb[0].mxu0
    %v487 = vadd.f32 0.0, %v486
    %v488 = vpop.f32.mrb[0].mxu0
    %489 = vdwg.mxu0
    %s490 = scalar_lea.vmem %s3, 8
    %v491 = vld [vmem:[%s490] sm:$0xff]
    %v493 = vsel %vm329, %v151, 0
    %v496 = vsel %vm329, %v237, 0
    %498 = vmatprep.subr.mxu0 0.0
    %499 = vmatpush1.xpose.msra.mxu0 %v496
    %500 = vmatprep.subr.mxu0 0.0
    %501 = vmatpush1.xpose.msra.mxu0 0.0
    %502 = vmatprep.subr.mxu0 0.0
    %503 = vmatpush1.xpose.msra.mxu0 0.0
    %504 = vmatprep.subr.mxu0 0.0
    %505 = vmatpush1.xpose.msra.mxu0 0.0
    %506 = vmatprep.subr.mxu0 0.0
    %507 = vmatpush1.xpose.msra.mxu0 0.0
    %508 = vmatprep.subr.mxu0 0.0
    %509 = vmatpush1.xpose.msra.mxu0 0.0
    %510 = vmatprep.subr.mxu0 0.0
    %511 = vmatpush1.xpose.msra.mxu0 0.0
    %512 = vmatprep.subr.mxu0 0.0
    %513 = vmatpush1.xpose.msra.mxu0 0.0
    %514 = vmatprep.subr.mxu0 0.0
    %515 = vmatpush1.xpose.msra.mxu0 0.0
    %516 = vmatprep.subr.mxu0 0.0
    %517 = vmatpush1.xpose.msra.mxu0 0.0
    %518 = vmatprep.subr.mxu0 0.0
    %519 = vmatpush1.xpose.msra.mxu0 0.0
    %520 = vmatprep.subr.mxu0 0.0
    %521 = vmatpush1.xpose.msra.mxu0 0.0
    %522 = vmatprep.subr.mxu0 0.0
    %523 = vmatpush1.xpose.msra.mxu0 0.0
    %524 = vmatprep.subr.mxu0 0.0
    %525 = vmatpush1.xpose.msra.mxu0 0.0
    %526 = vmatprep.subr.mxu0 0.0
    %527 = vmatpush1.xpose.msra.mxu0 0.0
    %528 = vmatprep.subr.mxu0 0.0
    %529 = vmatpush1.xpose.msra.mxu0 0.0
    %530 = vmatprep.subr.mxu0 0.0
    %531 = vmatpush1.xpose.msra.mxu0 0.0
    %532 = vmatprep.subr.mxu0 0.0
    %533 = vmatpush1.xpose.msra.mxu0 0.0
    %534 = vmatprep.subr.mxu0 0.0
    %535 = vmatpush1.xpose.msra.mxu0 0.0
    %536 = vmatprep.subr.mxu0 0.0
    %537 = vmatpush1.xpose.msra.mxu0 0.0
    %538 = vmatprep.subr.mxu0 0.0
    %539 = vmatpush1.xpose.msra.mxu0 0.0
    %540 = vmatprep.subr.mxu0 0.0
    %541 = vmatpush1.xpose.msra.mxu0 0.0
    %542 = vmatprep.subr.mxu0 0.0
    %543 = vmatpush1.xpose.msra.mxu0 0.0
    %544 = vmatprep.subr.mxu0 0.0
    %545 = vmatpush1.xpose.msra.mxu0 0.0
    %546 = vmatprep.subr.mxu0 0.0
    %547 = vmatpush1.xpose.msra.mxu0 0.0
    %548 = vmatprep.subr.mxu0 0.0
    %549 = vmatpush1.xpose.msra.mxu0 0.0
    %550 = vmatprep.subr.mxu0 0.0
    %551 = vmatpush1.xpose.msra.mxu0 0.0
    %552 = vmatprep.subr.mxu0 0.0
    %553 = vmatpush1.xpose.msra.mxu0 0.0
    %554 = vmatprep.subr.mxu0 0.0
    %555 = vmatpush1.xpose.msra.mxu0 0.0
    %556 = vmatprep.subr.mxu0 0.0
    %557 = vmatpush1.xpose.msra.mxu0 0.0
    %558 = vmatprep.subr.mxu0 0.0
    %559 = vmatpush1.xpose.msra.mxu0 0.0
    %560 = vmatprep.subr.mxu0 0.0
    %561 = vmatpush1.xpose.msra.mxu0 0.0
    %562 = vmatprep.mubr.f32.mxu0 0.0
    %563 = vmatmul.mubr.f32.gmra.mrb[0].mxu0 %v493
    %v564 = vpop.f32.mrb[0].mxu0
    %v565 = vadd.f32 %v491, %v564
    %v566 = vpop.f32.mrb[0].mxu0
    %567 = vdwg.mxu0
    %v568 = vsel %vm329, %v565, -inf
    %569 = vmax.xlane.f32.xlu0 %v568
    %v570 = vpop.xlane.xlu0 %569
    %v571 = vsub.f32 %v565, %v570
    %v572 = vmul.f32 %v571, 1.442695
    %v573 = vpow.pop %v572
    %v574 = vsel %vm329, %v573, 0.0
    %575 = vadd.xlane.f32.xlu0 %v574
    %v576 = vpop.xlane.xlu0 %575
    %v577 = vrcp.pop %v576
    %v578 = vmul.f32 %v573, %v577
    %v580 = vsel %vm329, %v578, 0
    %582 = vmatprep.subr.mxu0 0.0
    %583 = vmatpush1.msra.mxu0 %v325
    %584 = vmatprep.subr.mxu0 0.0
    %585 = vmatpush1.msra.mxu0 0.0
    %586 = vmatprep.subr.mxu0 0.0
    %587 = vmatpush1.msra.mxu0 0.0
    %588 = vmatprep.subr.mxu0 0.0
    %589 = vmatpush1.msra.mxu0 0.0
    %590 = vmatprep.subr.mxu0 0.0
    %591 = vmatpush1.msra.mxu0 0.0
    %592 = vmatprep.subr.mxu0 0.0
    %593 = vmatpush1.msra.mxu0 0.0
    %594 = vmatprep.subr.mxu0 0.0
    %595 = vmatpush1.msra.mxu0 0.0
    %596 = vmatprep.subr.mxu0 0.0
    %597 = vmatpush1.msra.mxu0 0.0
    %598 = vmatprep.subr.mxu0 0.0
    %599 = vmatpush1.msra.mxu0 0.0
    %600 = vmatprep.subr.mxu0 0.0
    %601 = vmatpush1.msra.mxu0 0.0
    %602 = vmatprep.subr.mxu0 0.0
    %603 = vmatpush1.msra.mxu0 0.0
    %604 = vmatprep.subr.mxu0 0.0
    %605 = vmatpush1.msra.mxu0 0.0
    %606 = vmatprep.subr.mxu0 0.0
    %607 = vmatpush1.msra.mxu0 0.0
    %608 = vmatprep.subr.mxu0 0.0
    %609 = vmatpush1.msra.mxu0 0.0
    %610 = vmatprep.subr.mxu0 0.0
    %611 = vmatpush1.msra.mxu0 0.0
    %612 = vmatprep.subr.mxu0 0.0
    %613 = vmatpush1.msra.mxu0 0.0
    %614 = vmatprep.subr.mxu0 0.0
    %615 = vmatpush1.msra.mxu0 0.0
    %616 = vmatprep.subr.mxu0 0.0
    %617 = vmatpush1.msra.mxu0 0.0
    %618 = vmatprep.subr.mxu0 0.0
    %619 = vmatpush1.msra.mxu0 0.0
    %620 = vmatprep.subr.mxu0 0.0
    %621 = vmatpush1.msra.mxu0 0.0
    %622 = vmatprep.subr.mxu0 0.0
    %623 = vmatpush1.msra.mxu0 0.0
    %624 = vmatprep.subr.mxu0 0.0
    %625 = vmatpush1.msra.mxu0 0.0
    %626 = vmatprep.subr.mxu0 0.0
    %627 = vmatpush1.msra.mxu0 0.0
    %628 = vmatprep.subr.mxu0 0.0
    %629 = vmatpush1.msra.mxu0 0.0
    %630 = vmatprep.subr.mxu0 0.0
    %631 = vmatpush1.msra.mxu0 0.0
    %632 = vmatprep.subr.mxu0 0.0
    %633 = vmatpush1.msra.mxu0 0.0
    %634 = vmatprep.subr.mxu0 0.0
    %635 = vmatpush1.msra.mxu0 0.0
    %636 = vmatprep.subr.mxu0 0.0
    %637 = vmatpush1.msra.mxu0 0.0
    %638 = vmatprep.subr.mxu0 0.0
    %639 = vmatpush1.msra.mxu0 0.0
    %640 = vmatprep.subr.mxu0 0.0
    %641 = vmatpush1.msra.mxu0 0.0
    %642 = vmatprep.subr.mxu0 0.0
    %643 = vmatpush1.msra.mxu0 0.0
    %644 = vmatprep.subr.mxu0 0.0
    %645 = vmatpush1.msra.mxu0 0.0
    %646 = vmatprep.mubr.f32.mxu0 0.0
    %647 = vmatmul.mubr.f32.gmra.mrb[0].mxu0 %v580
    %v648 = vpop.f32.mrb[0].mxu0
    %v649 = vadd.f32 0.0, %v648
    %v650 = vpop.f32.mrb[0].mxu0
    %651 = vdwg.mxu0
    %s652 = scalar_lea.vmem %s4, 32
    %v653 = vld [vmem:[%s652] sm:$0xff]
    %v654 = vld [vmem:[%s652 + $0x8] sm:$0xff]
    %v655 = vld [vmem:[%s652 + $0x10] sm:$0xff]
    %v656 = vld [vmem:[%s652 + $0x18] sm:$0xff]
    %s657 = scalar_lea.vmem %s6, 32
    %v658 = vld [vmem:[%s657] sm:$0xff]
    %v659 = vld [vmem:[%s657 + $0x8] sm:$0xff]
    %v660 = vld [vmem:[%s657 + $0x10] sm:$0xff]
    %v661 = vld [vmem:[%s657 + $0x18] sm:$0xff]
    %s662 = scalar_lea.vmem %s8, 32
    %v663 = vld [vmem:[%s662] sm:$0xff]
    %v664 = vld [vmem:[%s662 + $0x8] sm:$0xff]
    %v665 = vld [vmem:[%s662 + $0x10] sm:$0xff]
    %v666 = vld [vmem:[%s662 + $0x18] sm:$0xff]
    %s667 = scalar_lea.vmem %s10, 8
    %v668 = vld [vmem:[%s667] sm:$0xff]
    %s669 = scalar_lea.vmem %s5, 1
    %v670 = vld [vmem:[%s669] sm:$0x1]
    %v672 = vlaneseq
    %v673 = vshrl.u32 %v672, 7
    %v674 = vsub.s32 0, %v673
    %v675 = vrot.slane %v670, %v674
    %677 = vmatprep.subr.mxu0 0.0
    %678 = vmatpush1.msra.mxu0 %v653
    %679 = vmatprep.subr.mxu0 0.0
    %680 = vmatpush1.msra.mxu0 %v654
    %681 = vmatprep.subr.mxu0 0.0
    %682 = vmatpush1.msra.mxu0 %v655
    %683 = vmatprep.subr.mxu0 0.0
    %684 = vmatpush1.msra.mxu0 %v656
    %685 = vmatprep.subr.mxu0 0.0
    %686 = vmatpush1.msra.mxu0 0.0
    %687 = vmatprep.subr.mxu0 0.0
    %688 = vmatpush1.msra.mxu0 0.0
    %689 = vmatprep.subr.mxu0 0.0
    %690 = vmatpush1.msra.mxu0 0.0
    %691 = vmatprep.subr.mxu0 0.0
    %692 = vmatpush1.msra.mxu0 0.0
    %693 = vmatprep.subr.mxu0 0.0
    %694 = vmatpush1.msra.mxu0 0.0
    %695 = vmatprep.subr.mxu0 0.0
    %696 = vmatpush1.msra.mxu0 0.0
    %697 = vmatprep.subr.mxu0 0.0
    %698 = vmatpush1.msra.mxu0 0.0
    %699 = vmatprep.subr.mxu0 0.0
    %700 = vmatpush1.msra.mxu0 0.0
    %701 = vmatprep.subr.mxu0 0.0
    %702 = vmatpush1.msra.mxu0 0.0
    %703 = vmatprep.subr.mxu0 0.0
    %704 = vmatpush1.msra.mxu0 0.0
    %705 = vmatprep.subr.mxu0 0.0
    %706 = vmatpush1.msra.mxu0 0.0
    %707 = vmatprep.subr.mxu0 0.0
    %708 = vmatpush1.msra.mxu0 0.0
    %709 = vmatprep.subr.mxu0 0.0
    %710 = vmatpush1.msra.mxu0 0.0
    %711 = vmatprep.subr.mxu0 0.0
    %712 = vmatpush1.msra.mxu0 0.0
    %713 = vmatprep.subr.mxu0 0.0
    %714 = vmatpush1.msra.mxu0 0.0
    %715 = vmatprep.subr.mxu0 0.0
    %716 = vmatpush1.msra.mxu0 0.0
    %717 = vmatprep.subr.mxu0 0.0
    %718 = vmatpush1.msra.mxu0 0.0
    %719 = vmatprep.subr.mxu0 0.0
    %720 = vmatpush1.msra.mxu0 0.0
    %721 = vmatprep.subr.mxu0 0.0
    %722 = vmatpush1.msra.mxu0 0.0
    %723 = vmatprep.subr.mxu0 0.0
    %724 = vmatpush1.msra.mxu0 0.0
    %725 = vmatprep.subr.mxu0 0.0
    %726 = vmatpush1.msra.mxu0 0.0
    %727 = vmatprep.subr.mxu0 0.0
    %728 = vmatpush1.msra.mxu0 0.0
    %729 = vmatprep.subr.mxu0 0.0
    %730 = vmatpush1.msra.mxu0 0.0
    %731 = vmatprep.subr.mxu0 0.0
    %732 = vmatpush1.msra.mxu0 0.0
    %733 = vmatprep.subr.mxu0 0.0
    %734 = vmatpush1.msra.mxu0 0.0
    %735 = vmatprep.subr.mxu0 0.0
    %736 = vmatpush1.msra.mxu0 0.0
    %737 = vmatprep.subr.mxu0 0.0
    %738 = vmatpush1.msra.mxu0 0.0
    %739 = vmatprep.subr.mxu0 0.0
    %740 = vmatpush1.msra.mxu0 0.0
    %741 = vmatprep.mubr.f32.mxu0 0.0
    %742 = vmatmul.mubr.f32.gmra.mrb[0].mxu0 %v70
    %v743 = vpop.f32.mrb[0].mxu0
    %v744 = vadd.f32 %v675, %v743
    %v745 = vpop.f32.mrb[0].mxu0
    %746 = vmatprep.mubr.f32.mxu0 0.0
    %747 = vmatmul.mubr.f32.gmra.mrb[0].mxu0 %v73
    %v748 = vpop.f32.mrb[0].mxu0
    %v749 = vadd.f32 %v675, %v748
    %v750 = vpop.f32.mrb[0].mxu0
    %751 = vdwg.mxu0
    %v752 = vmul.f32 %v744, 0.35355338
    %v753 = vmul.f32 %v749, 0.35355338
    %s754 = scalar_lea.vmem %s7, 1
    %v755 = vld [vmem:[%s754] sm:$0x1]
    %v757 = vlaneseq
    %v758 = vshrl.u32 %v757, 7
    %v759 = vsub.s32 0, %v758
    %v760 = vrot.slane %v755, %v759
    %762 = vmatprep.subr.mxu0 0.0
    %763 = vmatpush1.msra.mxu0 %v658
    %764 = vmatprep.subr.mxu0 0.0
    %765 = vmatpush1.msra.mxu0 %v659
    %766 = vmatprep.subr.mxu0 0.0
    %767 = vmatpush1.msra.mxu0 %v660
    %768 = vmatprep.subr.mxu0 0.0
    %769 = vmatpush1.msra.mxu0 %v661
    %770 = vmatprep.subr.mxu0 0.0
    %771 = vmatpush1.msra.mxu0 0.0
    %772 = vmatprep.subr.mxu0 0.0
    %773 = vmatpush1.msra.mxu0 0.0
    %774 = vmatprep.subr.mxu0 0.0
    %775 = vmatpush1.msra.mxu0 0.0
    %776 = vmatprep.subr.mxu0 0.0
    %777 = vmatpush1.msra.mxu0 0.0
    %778 = vmatprep.subr.mxu0 0.0
    %779 = vmatpush1.msra.mxu0 0.0
    %780 = vmatprep.subr.mxu0 0.0
    %781 = vmatpush1.msra.mxu0 0.0
    %782 = vmatprep.subr.mxu0 0.0
    %783 = vmatpush1.msra.mxu0 0.0
    %784 = vmatprep.subr.mxu0 0.0
    %785 = vmatpush1.msra.mxu0 0.0
    %786 = vmatprep.subr.mxu0 0.0
    %787 = vmatpush1.msra.mxu0 0.0
    %788 = vmatprep.subr.mxu0 0.0
    %789 = vmatpush1.msra.mxu0 0.0
    %790 = vmatprep.subr.mxu0 0.0
    %791 = vmatpush1.msra.mxu0 0.0
    %792 = vmatprep.subr.mxu0 0.0
    %793 = vmatpush1.msra.mxu0 0.0
    %794 = vmatprep.subr.mxu0 0.0
    %795 = vmatpush1.msra.mxu0 0.0
    %796 = vmatprep.subr.mxu0 0.0
    %797 = vmatpush1.msra.mxu0 0.0
    %798 = vmatprep.subr.mxu0 0.0
    %799 = vmatpush1.msra.mxu0 0.0
    %800 = vmatprep.subr.mxu0 0.0
    %801 = vmatpush1.msra.mxu0 0.0
    %802 = vmatprep.subr.mxu0 0.0
    %803 = vmatpush1.msra.mxu0 0.0
    %804 = vmatprep.subr.mxu0 0.0
    %805 = vmatpush1.msra.mxu0 0.0
    %806 = vmatprep.subr.mxu0 0.0
    %807 = vmatpush1.msra.mxu0 0.0
    %808 = vmatprep.subr.mxu0 0.0
    %809 = vmatpush1.msra.mxu0 0.0
    %810 = vmatprep.subr.mxu0 0.0
    %811 = vmatpush1.msra.mxu0 0.0
    %812 = vmatprep.subr.mxu0 0.0
    %813 = vmatpush1.msra.mxu0 0.0
    %814 = vmatprep.subr.mxu0 0.0
    %815 = vmatpush1.msra.mxu0 0.0
    %816 = vmatprep.subr.mxu0 0.0
    %817 = vmatpush1.msra.mxu0 0.0
    %818 = vmatprep.subr.mxu0 0.0
    %819 = vmatpush1.msra.mxu0 0.0
    %820 = vmatprep.subr.mxu0 0.0
    %821 = vmatpush1.msra.mxu0 0.0
    %822 = vmatprep.subr.mxu0 0.0
    %823 = vmatpush1.msra.mxu0 0.0
    %824 = vmatprep.subr.mxu0 0.0
    %825 = vmatpush1.msra.mxu0 0.0
    %826 = vmatprep.mubr.f32.mxu0 0.0
    %827 = vmatmul.mubr.f32.gmra.mrb[0].mxu0 %v160
    %v828 = vpop.f32.mrb[0].mxu0
    %v829 = vadd.f32 %v760, %v828
    %v830 = vpop.f32.mrb[0].mxu0
    %831 = vmatprep.mubr.f32.mxu0 0.0
    %832 = vmatmul.mubr.f32.gmra.mrb[0].mxu0 %v163
    %v833 = vpop.f32.mrb[0].mxu0
    %v834 = vadd.f32 %v760, %v833
    %v835 = vpop.f32.mrb[0].mxu0
    %836 = vdwg.mxu0
    %s837 = scalar_lea.vmem %s9, 1
    %v838 = vld [vmem:[%s837] sm:$0x1]
    %v840 = vlaneseq
    %v841 = vshrl.u32 %v840, 7
    %v842 = vsub.s32 0, %v841
    %v843 = vrot.slane %v838, %v842
    %845 = vmatprep.subr.mxu0 0.0
    %846 = vmatpush1.msra.mxu0 %v663
    %847 = vmatprep.subr.mxu0 0.0
    %848 = vmatpush1.msra.mxu0 %v664
    %849 = vmatprep.subr.mxu0 0.0
    %850 = vmatpush1.msra.mxu0 %v665
    %851 = vmatprep.subr.mxu0 0.0
    %852 = vmatpush1.msra.mxu0 %v666
    %853 = vmatprep.subr.mxu0 0.0
    %854 = vmatpush1.msra.mxu0 0.0
    %855 = vmatprep.subr.mxu0 0.0
    %856 = vmatpush1.msra.mxu0 0.0
    %857 = vmatprep.subr.mxu0 0.0
    %858 = vmatpush1.msra.mxu0 0.0
    %859 = vmatprep.subr.mxu0 0.0
    %860 = vmatpush1.msra.mxu0 0.0
    %861 = vmatprep.subr.mxu0 0.0
    %862 = vmatpush1.msra.mxu0 0.0
    %863 = vmatprep.subr.mxu0 0.0
    %864 = vmatpush1.msra.mxu0 0.0
    %865 = vmatprep.subr.mxu0 0.0
    %866 = vmatpush1.msra.mxu0 0.0
    %867 = vmatprep.subr.mxu0 0.0
    %868 = vmatpush1.msra.mxu0 0.0
    %869 = vmatprep.subr.mxu0 0.0
    %870 = vmatpush1.msra.mxu0 0.0
    %871 = vmatprep.subr.mxu0 0.0
    %872 = vmatpush1.msra.mxu0 0.0
    %873 = vmatprep.subr.mxu0 0.0
    %874 = vmatpush1.msra.mxu0 0.0
    %875 = vmatprep.subr.mxu0 0.0
    %876 = vmatpush1.msra.mxu0 0.0
    %877 = vmatprep.subr.mxu0 0.0
    %878 = vmatpush1.msra.mxu0 0.0
    %879 = vmatprep.subr.mxu0 0.0
    %880 = vmatpush1.msra.mxu0 0.0
    %881 = vmatprep.subr.mxu0 0.0
    %882 = vmatpush1.msra.mxu0 0.0
    %883 = vmatprep.subr.mxu0 0.0
    %884 = vmatpush1.msra.mxu0 0.0
    %885 = vmatprep.subr.mxu0 0.0
    %886 = vmatpush1.msra.mxu0 0.0
    %887 = vmatprep.subr.mxu0 0.0
    %888 = vmatpush1.msra.mxu0 0.0
    %889 = vmatprep.subr.mxu0 0.0
    %890 = vmatpush1.msra.mxu0 0.0
    %891 = vmatprep.subr.mxu0 0.0
    %892 = vmatpush1.msra.mxu0 0.0
    %893 = vmatprep.subr.mxu0 0.0
    %894 = vmatpush1.msra.mxu0 0.0
    %895 = vmatprep.subr.mxu0 0.0
    %896 = vmatpush1.msra.mxu0 0.0
    %897 = vmatprep.subr.mxu0 0.0
    %898 = vmatpush1.msra.mxu0 0.0
    %899 = vmatprep.subr.mxu0 0.0
    %900 = vmatpush1.msra.mxu0 0.0
    %901 = vmatprep.subr.mxu0 0.0
    %902 = vmatpush1.msra.mxu0 0.0
    %903 = vmatprep.subr.mxu0 0.0
    %904 = vmatpush1.msra.mxu0 0.0
    %905 = vmatprep.subr.mxu0 0.0
    %906 = vmatpush1.msra.mxu0 0.0
    %907 = vmatprep.subr.mxu0 0.0
    %908 = vmatpush1.msra.mxu0 0.0
    %909 = vmatprep.mubr.f32.mxu0 0.0
    %910 = vmatmul.mubr.f32.gmra.mrb[0].mxu0 %v248
    %v911 = vpop.f32.mrb[0].mxu0
    %v912 = vadd.f32 %v843, %v911
    %v913 = vpop.f32.mrb[0].mxu0
    %914 = vmatprep.mubr.f32.mxu0 0.0
    %915 = vmatmul.mubr.f32.gmra.mrb[0].mxu0 %v251
    %v916 = vpop.f32.mrb[0].mxu0
    %v917 = vadd.f32 %v843, %v916
    %v918 = vpop.f32.mrb[0].mxu0
    %919 = vdwg.mxu0
    %v921 = vsel %vm329, %v752, 0
    %v924 = vsel %vm329, %v829, 0
    %926 = vmatprep.subr.mxu0 0.0
    %927 = vmatpush1.xpose.msra.mxu0 %v924
    %928 = vmatprep.subr.mxu0 0.0
    %929 = vmatpush1.xpose.msra.mxu0 0.0
    %930 = vmatprep.subr.mxu0 0.0
    %931 = vmatpush1.xpose.msra.mxu0 0.0
    %932 = vmatprep.subr.mxu0 0.0
    %933 = vmatpush1.xpose.msra.mxu0 0.0
    %934 = vmatprep.subr.mxu0 0.0
    %935 = vmatpush1.xpose.msra.mxu0 0.0
    %936 = vmatprep.subr.mxu0 0.0
    %937 = vmatpush1.xpose.msra.mxu0 0.0
    %938 = vmatprep.subr.mxu0 0.0
    %939 = vmatpush1.xpose.msra.mxu0 0.0
    %940 = vmatprep.subr.mxu0 0.0
    %941 = vmatpush1.xpose.msra.mxu0 0.0
    %942 = vmatprep.subr.mxu0 0.0
    %943 = vmatpush1.xpose.msra.mxu0 0.0
    %944 = vmatprep.subr.mxu0 0.0
    %945 = vmatpush1.xpose.msra.mxu0 0.0
    %946 = vmatprep.subr.mxu0 0.0
    %947 = vmatpush1.xpose.msra.mxu0 0.0
    %948 = vmatprep.subr.mxu0 0.0
    %949 = vmatpush1.xpose.msra.mxu0 0.0
    %950 = vmatprep.subr.mxu0 0.0
    %951 = vmatpush1.xpose.msra.mxu0 0.0
    %952 = vmatprep.subr.mxu0 0.0
    %953 = vmatpush1.xpose.msra.mxu0 0.0
    %954 = vmatprep.subr.mxu0 0.0
    %955 = vmatpush1.xpose.msra.mxu0 0.0
    %956 = vmatprep.subr.mxu0 0.0
    %957 = vmatpush1.xpose.msra.mxu0 0.0
    %958 = vmatprep.subr.mxu0 0.0
    %959 = vmatpush1.xpose.msra.mxu0 0.0
    %960 = vmatprep.subr.mxu0 0.0
    %961 = vmatpush1.xpose.msra.mxu0 0.0
    %962 = vmatprep.subr.mxu0 0.0
    %963 = vmatpush1.xpose.msra.mxu0 0.0
    %964 = vmatprep.subr.mxu0 0.0
    %965 = vmatpush1.xpose.msra.mxu0 0.0
    %966 = vmatprep.subr.mxu0 0.0
    %967 = vmatpush1.xpose.msra.mxu0 0.0
    %968 = vmatprep.subr.mxu0 0.0
    %969 = vmatpush1.xpose.msra.mxu0 0.0
    %970 = vmatprep.subr.mxu0 0.0
    %971 = vmatpush1.xpose.msra.mxu0 0.0
    %972 = vmatprep.subr.mxu0 0.0
    %973 = vmatpush1.xpose.msra.mxu0 0.0
    %974 = vmatprep.subr.mxu0 0.0
    %975 = vmatpush1.xpose.msra.mxu0 0.0
    %976 = vmatprep.subr.mxu0 0.0
    %977 = vmatpush1.xpose.msra.mxu0 0.0
    %978 = vmatprep.subr.mxu0 0.0
    %979 = vmatpush1.xpose.msra.mxu0 0.0
    %980 = vmatprep.subr.mxu0 0.0
    %981 = vmatpush1.xpose.msra.mxu0 0.0
    %982 = vmatprep.subr.mxu0 0.0
    %983 = vmatpush1.xpose.msra.mxu0 0.0
    %984 = vmatprep.subr.mxu0 0.0
    %985 = vmatpush1.xpose.msra.mxu0 0.0
    %986 = vmatprep.subr.mxu0 0.0
    %987 = vmatpush1.xpose.msra.mxu0 0.0
    %988 = vmatprep.subr.mxu0 0.0
    %989 = vmatpush1.xpose.msra.mxu0 0.0
    %990 = vmatprep.mubr.f32.mxu0 0.0
    %991 = vmatmul.mubr.f32.gmra.mrb[0].mxu0 %v921
    %v992 = vpop.f32.mrb[0].mxu0
    %v993 = vadd.f32 %v328, %v992
    %v994 = vpop.f32.mrb[0].mxu0
    %995 = vdwg.mxu0
    %v996 = vsel %vm329, %v993, -inf
    %997 = vmax.xlane.f32.xlu0 %v996
    %v998 = vpop.xlane.xlu0 %997
    %v999 = vsub.f32 %v993, %v998
    %v1000 = vmul.f32 %v999, 1.442695
    %v1001 = vpow.pop %v1000
    %v1002 = vsel %vm329, %v1001, 0.0
    %1003 = vadd.xlane.f32.xlu0 %v1002
    %v1004 = vpop.xlane.xlu0 %1003
    %v1005 = vrcp.pop %v1004
    %v1006 = vmul.f32 %v1001, %v1005
    %v1008 = vsel %vm329, %v1006, 0
    %1010 = vmatprep.subr.mxu0 0.0
    %1011 = vmatpush1.msra.mxu0 %v912
    %1012 = vmatprep.subr.mxu0 0.0
    %1013 = vmatpush1.msra.mxu0 0.0
    %1014 = vmatprep.subr.mxu0 0.0
    %1015 = vmatpush1.msra.mxu0 0.0
    %1016 = vmatprep.subr.mxu0 0.0
    %1017 = vmatpush1.msra.mxu0 0.0
    %1018 = vmatprep.subr.mxu0 0.0
    %1019 = vmatpush1.msra.mxu0 0.0
    %1020 = vmatprep.subr.mxu0 0.0
    %1021 = vmatpush1.msra.mxu0 0.0
    %1022 = vmatprep.subr.mxu0 0.0
    %1023 = vmatpush1.msra.mxu0 0.0
    %1024 = vmatprep.subr.mxu0 0.0
    %1025 = vmatpush1.msra.mxu0 0.0
    %1026 = vmatprep.subr.mxu0 0.0
    %1027 = vmatpush1.msra.mxu0 0.0
    %1028 = vmatprep.subr.mxu0 0.0
    %1029 = vmatpush1.msra.mxu0 0.0
    %1030 = vmatprep.subr.mxu0 0.0
    %1031 = vmatpush1.msra.mxu0 0.0
    %1032 = vmatprep.subr.mxu0 0.0
    %1033 = vmatpush1.msra.mxu0 0.0
    %1034 = vmatprep.subr.mxu0 0.0
    %1035 = vmatpush1.msra.mxu0 0.0
    %1036 = vmatprep.subr.mxu0 0.0
    %1037 = vmatpush1.msra.mxu0 0.0
    %1038 = vmatprep.subr.mxu0 0.0
    %1039 = vmatpush1.msra.mxu0 0.0
    %1040 = vmatprep.subr.mxu0 0.0
    %1041 = vmatpush1.msra.mxu0 0.0
    %1042 = vmatprep.subr.mxu0 0.0
    %1043 = vmatpush1.msra.mxu0 0.0
    %1044 = vmatprep.subr.mxu0 0.0
    %1045 = vmatpush1.msra.mxu0 0.0
    %1046 = vmatprep.subr.mxu0 0.0
    %1047 = vmatpush1.msra.mxu0 0.0
    %1048 = vmatprep.subr.mxu0 0.0
    %1049 = vmatpush1.msra.mxu0 0.0
    %1050 = vmatprep.subr.mxu0 0.0
    %1051 = vmatpush1.msra.mxu0 0.0
    %1052 = vmatprep.subr.mxu0 0.0
    %1053 = vmatpush1.msra.mxu0 0.0
    %1054 = vmatprep.subr.mxu0 0.0
    %1055 = vmatpush1.msra.mxu0 0.0
    %1056 = vmatprep.subr.mxu0 0.0
    %1057 = vmatpush1.msra.mxu0 0.0
    %1058 = vmatprep.subr.mxu0 0.0
    %1059 = vmatpush1.msra.mxu0 0.0
    %1060 = vmatprep.subr.mxu0 0.0
    %1061 = vmatpush1.msra.mxu0 0.0
    %1062 = vmatprep.subr.mxu0 0.0
    %1063 = vmatpush1.msra.mxu0 0.0
    %1064 = vmatprep.subr.mxu0 0.0
    %1065 = vmatpush1.msra.mxu0 0.0
    %1066 = vmatprep.subr.mxu0 0.0
    %1067 = vmatpush1.msra.mxu0 0.0
    %1068 = vmatprep.subr.mxu0 0.0
    %1069 = vmatpush1.msra.mxu0 0.0
    %1070 = vmatprep.subr.mxu0 0.0
    %1071 = vmatpush1.msra.mxu0 0.0
    %1072 = vmatprep.subr.mxu0 0.0
    %1073 = vmatpush1.msra.mxu0 0.0
    %1074 = vmatprep.mubr.f32.mxu0 0.0
    %1075 = vmatmul.mubr.f32.gmra.mrb[0].mxu0 %v1008
    %v1076 = vpop.f32.mrb[0].mxu0
    %v1077 = vadd.f32 0.0, %v1076
    %v1078 = vpop.f32.mrb[0].mxu0
    %1079 = vdwg.mxu0
    %v1081 = vsel %vm329, %v753, 0
    %v1084 = vsel %vm329, %v834, 0
    %1086 = vmatprep.subr.mxu0 0.0
    %1087 = vmatpush1.xpose.msra.mxu0 %v1084
    %1088 = vmatprep.subr.mxu0 0.0
    %1089 = vmatpush1.xpose.msra.mxu0 0.0
    %1090 = vmatprep.subr.mxu0 0.0
    %1091 = vmatpush1.xpose.msra.mxu0 0.0
    %1092 = vmatprep.subr.mxu0 0.0
    %1093 = vmatpush1.xpose.msra.mxu0 0.0
    %1094 = vmatprep.subr.mxu0 0.0
    %1095 = vmatpush1.xpose.msra.mxu0 0.0
    %1096 = vmatprep.subr.mxu0 0.0
    %1097 = vmatpush1.xpose.msra.mxu0 0.0
    %1098 = vmatprep.subr.mxu0 0.0
    %1099 = vmatpush1.xpose.msra.mxu0 0.0
    %1100 = vmatprep.subr.mxu0 0.0
    %1101 = vmatpush1.xpose.msra.mxu0 0.0
    %1102 = vmatprep.subr.mxu0 0.0
    %1103 = vmatpush1.xpose.msra.mxu0 0.0
    %1104 = vmatprep.subr.mxu0 0.0
    %1105 = vmatpush1.xpose.msra.mxu0 0.0
    %1106 = vmatprep.subr.mxu0 0.0
    %1107 = vmatpush1.xpose.msra.mxu0 0.0
    %1108 = vmatprep.subr.mxu0 0.0
    %1109 = vmatpush1.xpose.msra.mxu0 0.0
    %1110 = vmatprep.subr.mxu0 0.0
    %1111 = vmatpush1.xpose.msra.mxu0 0.0
    %1112 = vmatprep.subr.mxu0 0.0
    %1113 = vmatpush1.xpose.msra.mxu0 0.0
    %1114 = vmatprep.subr.mxu0 0.0
    %1115 = vmatpush1.xpose.msra.mxu0 0.0
    %1116 = vmatprep.subr.mxu0 0.0
    %1117 = vmatpush1.xpose.msra.mxu0 0.0
    %1118 = vmatprep.subr.mxu0 0.0
    %1119 = vmatpush1.xpose.msra.mxu0 0.0
    %1120 = vmatprep.subr.mxu0 0.0
    %1121 = vmatpush1.xpose.msra.mxu0 0.0
    %1122 = vmatprep.subr.mxu0 0.0
    %1123 = vmatpush1.xpose.msra.mxu0 0.0
    %1124 = vmatprep.subr.mxu0 0.0
    %1125 = vmatpush1.xpose.msra.mxu0 0.0
    %1126 = vmatprep.subr.mxu0 0.0
    %1127 = vmatpush1.xpose.msra.mxu0 0.0
    %1128 = vmatprep.subr.mxu0 0.0
    %1129 = vmatpush1.xpose.msra.mxu0 0.0
    %1130 = vmatprep.subr.mxu0 0.0
    %1131 = vmatpush1.xpose.msra.mxu0 0.0
    %1132 = vmatprep.subr.mxu0 0.0
    %1133 = vmatpush1.xpose.msra.mxu0 0.0
    %1134 = vmatprep.subr.mxu0 0.0
    %1135 = vmatpush1.xpose.msra.mxu0 0.0
    %1136 = vmatprep.subr.mxu0 0.0
    %1137 = vmatpush1.xpose.msra.mxu0 0.0
    %1138 = vmatprep.subr.mxu0 0.0
    %1139 = vmatpush1.xpose.msra.mxu0 0.0
    %1140 = vmatprep.subr.mxu0 0.0
    %1141 = vmatpush1.xpose.msra.mxu0 0.0
    %1142 = vmatprep.subr.mxu0 0.0
    %1143 = vmatpush1.xpose.msra.mxu0 0.0
    %1144 = vmatprep.subr.mxu0 0.0
    %1145 = vmatpush1.xpose.msra.mxu0 0.0
    %1146 = vmatprep.subr.mxu0 0.0
    %1147 = vmatpush1.xpose.msra.mxu0 0.0
    %1148 = vmatprep.subr.mxu0 0.0
    %1149 = vmatpush1.xpose.msra.mxu0 0.0
    %1150 = vmatprep.mubr.f32.mxu0 0.0
    %1151 = vmatmul.mubr.f32.gmra.mrb[0].mxu0 %v1081
    %v1152 = vpop.f32.mrb[0].mxu0
    %v1153 = vadd.f32 %v491, %v1152
    %v1154 = vpop.f32.mrb[0].mxu0
    %1155 = vdwg.mxu0
    %v1156 = vsel %vm329, %v1153, -inf
    %1157 = vmax.xlane.f32.xlu0 %v1156
    %v1158 = vpop.xlane.xlu0 %1157
    %v1159 = vsub.f32 %v1153, %v1158
    %v1160 = vmul.f32 %v1159, 1.442695
    %v1161 = vpow.pop %v1160
    %v1162 = vsel %vm329, %v1161, 0.0
    %1163 = vadd.xlane.f32.xlu0 %v1162
    %v1164 = vpop.xlane.xlu0 %1163
    %v1165 = vrcp.pop %v1164
    %v1166 = vmul.f32 %v1161, %v1165
    %v1168 = vsel %vm329, %v1166, 0
    %1170 = vmatprep.subr.mxu0 0.0
    %1171 = vmatpush1.msra.mxu0 %v917
    %1172 = vmatprep.subr.mxu0 0.0
    %1173 = vmatpush1.msra.mxu0 0.0
    %1174 = vmatprep.subr.mxu0 0.0
    %1175 = vmatpush1.msra.mxu0 0.0
    %1176 = vmatprep.subr.mxu0 0.0
    %1177 = vmatpush1.msra.mxu0 0.0
    %1178 = vmatprep.subr.mxu0 0.0
    %1179 = vmatpush1.msra.mxu0 0.0
    %1180 = vmatprep.subr.mxu0 0.0
    %1181 = vmatpush1.msra.mxu0 0.0
    %1182 = vmatprep.subr.mxu0 0.0
    %1183 = vmatpush1.msra.mxu0 0.0
    %1184 = vmatprep.subr.mxu0 0.0
    %1185 = vmatpush1.msra.mxu0 0.0
    %1186 = vmatprep.subr.mxu0 0.0
    %1187 = vmatpush1.msra.mxu0 0.0
    %1188 = vmatprep.subr.mxu0 0.0
    %1189 = vmatpush1.msra.mxu0 0.0
    %1190 = vmatprep.subr.mxu0 0.0
    %1191 = vmatpush1.msra.mxu0 0.0
    %1192 = vmatprep.subr.mxu0 0.0
    %1193 = vmatpush1.msra.mxu0 0.0
    %1194 = vmatprep.subr.mxu0 0.0
    %1195 = vmatpush1.msra.mxu0 0.0
    %1196 = vmatprep.subr.mxu0 0.0
    %1197 = vmatpush1.msra.mxu0 0.0
    %1198 = vmatprep.subr.mxu0 0.0
    %1199 = vmatpush1.msra.mxu0 0.0
    %1200 = vmatprep.subr.mxu0 0.0
    %1201 = vmatpush1.msra.mxu0 0.0
    %1202 = vmatprep.subr.mxu0 0.0
    %1203 = vmatpush1.msra.mxu0 0.0
    %1204 = vmatprep.subr.mxu0 0.0
    %1205 = vmatpush1.msra.mxu0 0.0
    %1206 = vmatprep.subr.mxu0 0.0
    %1207 = vmatpush1.msra.mxu0 0.0
    %1208 = vmatprep.subr.mxu0 0.0
    %1209 = vmatpush1.msra.mxu0 0.0
    %1210 = vmatprep.subr.mxu0 0.0
    %1211 = vmatpush1.msra.mxu0 0.0
    %1212 = vmatprep.subr.mxu0 0.0
    %1213 = vmatpush1.msra.mxu0 0.0
    %1214 = vmatprep.subr.mxu0 0.0
    %1215 = vmatpush1.msra.mxu0 0.0
    %1216 = vmatprep.subr.mxu0 0.0
    %1217 = vmatpush1.msra.mxu0 0.0
    %1218 = vmatprep.subr.mxu0 0.0
    %1219 = vmatpush1.msra.mxu0 0.0
    %1220 = vmatprep.subr.mxu0 0.0
    %1221 = vmatpush1.msra.mxu0 0.0
    %1222 = vmatprep.subr.mxu0 0.0
    %1223 = vmatpush1.msra.mxu0 0.0
    %1224 = vmatprep.subr.mxu0 0.0
    %1225 = vmatpush1.msra.mxu0 0.0
    %1226 = vmatprep.subr.mxu0 0.0
    %1227 = vmatpush1.msra.mxu0 0.0
    %1228 = vmatprep.subr.mxu0 0.0
    %1229 = vmatpush1.msra.mxu0 0.0
    %1230 = vmatprep.subr.mxu0 0.0
    %1231 = vmatpush1.msra.mxu0 0.0
    %1232 = vmatprep.subr.mxu0 0.0
    %1233 = vmatpush1.msra.mxu0 0.0
    %1234 = vmatprep.mubr.f32.mxu0 0.0
    %1235 = vmatmul.mubr.f32.gmra.mrb[0].mxu0 %v1168
    %v1236 = vpop.f32.mrb[0].mxu0
    %v1237 = vadd.f32 0.0, %v1236
    %v1238 = vpop.f32.mrb[0].mxu0
    %1239 = vdwg.mxu0
    %v1241 = vsel %vm329, %v1077, 0
    %v1244 = vsel %vm329, %v1237, 0
    %1246 = vmatprep.subr.mxu0 0.0
    %1247 = vmatpush1.msra.mxu0 %v668
    %1248 = vmatprep.subr.mxu0 0.0
    %1249 = vmatpush1.msra.mxu0 0.0
    %1250 = vmatprep.subr.mxu0 0.0
    %1251 = vmatpush1.msra.mxu0 0.0
    %1252 = vmatprep.subr.mxu0 0.0
    %1253 = vmatpush1.msra.mxu0 0.0
    %1254 = vmatprep.subr.mxu0 0.0
    %1255 = vmatpush1.msra.mxu0 0.0
    %1256 = vmatprep.subr.mxu0 0.0
    %1257 = vmatpush1.msra.mxu0 0.0
    %1258 = vmatprep.subr.mxu0 0.0
    %1259 = vmatpush1.msra.mxu0 0.0
    %1260 = vmatprep.subr.mxu0 0.0
    %1261 = vmatpush1.msra.mxu0 0.0
    %1262 = vmatprep.subr.mxu0 0.0
    %1263 = vmatpush1.msra.mxu0 0.0
    %1264 = vmatprep.subr.mxu0 0.0
    %1265 = vmatpush1.msra.mxu0 0.0
    %1266 = vmatprep.subr.mxu0 0.0
    %1267 = vmatpush1.msra.mxu0 0.0
    %1268 = vmatprep.subr.mxu0 0.0
    %1269 = vmatpush1.msra.mxu0 0.0
    %1270 = vmatprep.subr.mxu0 0.0
    %1271 = vmatpush1.msra.mxu0 0.0
    %1272 = vmatprep.subr.mxu0 0.0
    %1273 = vmatpush1.msra.mxu0 0.0
    %1274 = vmatprep.subr.mxu0 0.0
    %1275 = vmatpush1.msra.mxu0 0.0
    %1276 = vmatprep.subr.mxu0 0.0
    %1277 = vmatpush1.msra.mxu0 0.0
    %1278 = vmatprep.subr.mxu0 0.0
    %1279 = vmatpush1.msra.mxu0 0.0
    %1280 = vmatprep.subr.mxu0 0.0
    %1281 = vmatpush1.msra.mxu0 0.0
    %1282 = vmatprep.subr.mxu0 0.0
    %1283 = vmatpush1.msra.mxu0 0.0
    %1284 = vmatprep.subr.mxu0 0.0
    %1285 = vmatpush1.msra.mxu0 0.0
    %1286 = vmatprep.subr.mxu0 0.0
    %1287 = vmatpush1.msra.mxu0 0.0
    %1288 = vmatprep.subr.mxu0 0.0
    %1289 = vmatpush1.msra.mxu0 0.0
    %1290 = vmatprep.subr.mxu0 0.0
    %1291 = vmatpush1.msra.mxu0 0.0
    %1292 = vmatprep.subr.mxu0 0.0
    %1293 = vmatpush1.msra.mxu0 0.0
    %1294 = vmatprep.subr.mxu0 0.0
    %1295 = vmatpush1.msra.mxu0 0.0
    %1296 = vmatprep.subr.mxu0 0.0
    %1297 = vmatpush1.msra.mxu0 0.0
    %1298 = vmatprep.subr.mxu0 0.0
    %1299 = vmatpush1.msra.mxu0 0.0
    %1300 = vmatprep.subr.mxu0 0.0
    %1301 = vmatpush1.msra.mxu0 0.0
    %1302 = vmatprep.subr.mxu0 0.0
    %1303 = vmatpush1.msra.mxu0 0.0
    %1304 = vmatprep.subr.mxu0 0.0
    %1305 = vmatpush1.msra.mxu0 0.0
    %1306 = vmatprep.subr.mxu0 0.0
    %1307 = vmatpush1.msra.mxu0 0.0
    %1308 = vmatprep.subr.mxu0 0.0
    %1309 = vmatpush1.msra.mxu0 0.0
    %1310 = vmatprep.mubr.f32.mxu0 0.0
    %1311 = vmatmul.mubr.f32.gmra.mrb[0].mxu0 %v1241
    %v1312 = vpop.f32.mrb[0].mxu0
    %v1313 = vadd.f32 0.0, %v1312
    %v1314 = vpop.f32.mrb[0].mxu0
    %1315 = vmatprep.mubr.f32.mxu0 0.0
    %1316 = vmatmul.mubr.f32.gmra.mrb[0].mxu0 %v1244
    %v1317 = vpop.f32.mrb[0].mxu0
    %v1318 = vadd.f32 0.0, %v1317
    %v1319 = vpop.f32.mrb[0].mxu0
    %1320 = vdwg.mxu0
    %v1322 = vsel %vm329, %v487, 0
    %v1325 = vsel %vm329, %v649, 0
    %1327 = vmatprep.subr.mxu0 0.0
    %1328 = vmatpush1.msra.mxu0 %v60
    %1329 = vmatprep.subr.mxu0 0.0
    %1330 = vmatpush1.msra.mxu0 0.0
    %1331 = vmatprep.subr.mxu0 0.0
    %1332 = vmatpush1.msra.mxu0 0.0
    %1333 = vmatprep.subr.mxu0 0.0
    %1334 = vmatpush1.msra.mxu0 0.0
    %1335 = vmatprep.subr.mxu0 0.0
    %1336 = vmatpush1.msra.mxu0 0.0
    %1337 = vmatprep.subr.mxu0 0.0
    %1338 = vmatpush1.msra.mxu0 0.0
    %1339 = vmatprep.subr.mxu0 0.0
    %1340 = vmatpush1.msra.mxu0 0.0
    %1341 = vmatprep.subr.mxu0 0.0
    %1342 = vmatpush1.msra.mxu0 0.0
    %1343 = vmatprep.subr.mxu0 0.0
    %1344 = vmatpush1.msra.mxu0 0.0
    %1345 = vmatprep.subr.mxu0 0.0
    %1346 = vmatpush1.msra.mxu0 0.0
    %1347 = vmatprep.subr.mxu0 0.0
    %1348 = vmatpush1.msra.mxu0 0.0
    %1349 = vmatprep.subr.mxu0 0.0
    %1350 = vmatpush1.msra.mxu0 0.0
    %1351 = vmatprep.subr.mxu0 0.0
    %1352 = vmatpush1.msra.mxu0 0.0
    %1353 = vmatprep.subr.mxu0 0.0
    %1354 = vmatpush1.msra.mxu0 0.0
    %1355 = vmatprep.subr.mxu0 0.0
    %1356 = vmatpush1.msra.mxu0 0.0
    %1357 = vmatprep.subr.mxu0 0.0
    %1358 = vmatpush1.msra.mxu0 0.0
    %1359 = vmatprep.subr.mxu0 0.0
    %1360 = vmatpush1.msra.mxu0 0.0
    %1361 = vmatprep.subr.mxu0 0.0
    %1362 = vmatpush1.msra.mxu0 0.0
    %1363 = vmatprep.subr.mxu0 0.0
    %1364 = vmatpush1.msra.mxu0 0.0
    %1365 = vmatprep.subr.mxu0 0.0
    %1366 = vmatpush1.msra.mxu0 0.0
    %1367 = vmatprep.subr.mxu0 0.0
    %1368 = vmatpush1.msra.mxu0 0.0
    %1369 = vmatprep.subr.mxu0 0.0
    %1370 = vmatpush1.msra.mxu0 0.0
    %1371 = vmatprep.subr.mxu0 0.0
    %1372 = vmatpush1.msra.mxu0 0.0
    %1373 = vmatprep.subr.mxu0 0.0
    %1374 = vmatpush1.msra.mxu0 0.0
    %1375 = vmatprep.subr.mxu0 0.0
    %1376 = vmatpush1.msra.mxu0 0.0
    %1377 = vmatprep.subr.mxu0 0.0
    %1378 = vmatpush1.msra.mxu0 0.0
    %1379 = vmatprep.subr.mxu0 0.0
    %1380 = vmatpush1.msra.mxu0 0.0
    %1381 = vmatprep.subr.mxu0 0.0
    %1382 = vmatpush1.msra.mxu0 0.0
    %1383 = vmatprep.subr.mxu0 0.0
    %1384 = vmatpush1.msra.mxu0 0.0
    %1385 = vmatprep.subr.mxu0 0.0
    %1386 = vmatpush1.msra.mxu0 0.0
    %1387 = vmatprep.subr.mxu0 0.0
    %1388 = vmatpush1.msra.mxu0 0.0
    %1389 = vmatprep.subr.mxu0 0.0
    %1390 = vmatpush1.msra.mxu0 0.0
    %1391 = vmatprep.mubr.f32.mxu0 0.0
    %1392 = vmatmul.mubr.f32.gmra.mrb[0].mxu0 %v1322
    %v1393 = vpop.f32.mrb[0].mxu0
    %v1394 = vadd.f32 %v1313, %v1393
    %v1395 = vpop.f32.mrb[0].mxu0
    %1396 = vmatprep.mubr.f32.mxu0 0.0
    %1397 = vmatmul.mubr.f32.gmra.mrb[0].mxu0 %v1325
    %v1398 = vpop.f32.mrb[0].mxu0
    %v1399 = vadd.f32 %v1318, %v1398
    %v1400 = vpop.f32.mrb[0].mxu0
    %1401 = vdwg.mxu0
    %s1402 = scalar_lea.vmem %s4, 64
    %v1403 = vld [vmem:[%s1402] sm:$0xff]
    %v1404 = vld [vmem:[%s1402 + $0x8] sm:$0xff]
    %v1405 = vld [vmem:[%s1402 + $0x10] sm:$0xff]
    %v1406 = vld [vmem:[%s1402 + $0x18] sm:$0xff]
    %s1407 = scalar_lea.vmem %s6, 64
    %v1408 = vld [vmem:[%s1407] sm:$0xff]
    %v1409 = vld [vmem:[%s1407 + $0x8] sm:$0xff]
    %v1410 = vld [vmem:[%s1407 + $0x10] sm:$0xff]
    %v1411 = vld [vmem:[%s1407 + $0x18] sm:$0xff]
    %s1412 = scalar_lea.vmem %s8, 64
    %v1413 = vld [vmem:[%s1412] sm:$0xff]
    %v1414 = vld [vmem:[%s1412 + $0x8] sm:$0xff]
    %v1415 = vld [vmem:[%s1412 + $0x10] sm:$0xff]
    %v1416 = vld [vmem:[%s1412 + $0x18] sm:$0xff]
    %s1417 = scalar_lea.vmem %s10, 16
    %v1418 = vld [vmem:[%s1417] sm:$0xff]
    %s1419 = scalar_lea.vmem %s5, 2
    %v1420 = vld [vmem:[%s1419] sm:$0x1]
    %v1422 = vlaneseq
    %v1423 = vshrl.u32 %v1422, 7
    %v1424 = vsub.s32 0, %v1423
    %v1425 = vrot.slane %v1420, %v1424
    %1427 = vmatprep.subr.mxu0 0.0
    %1428 = vmatpush1.msra.mxu0 %v1403
    %1429 = vmatprep.subr.mxu0 0.0
    %1430 = vmatpush1.msra.mxu0 %v1404
    %1431 = vmatprep.subr.mxu0 0.0
    %1432 = vmatpush1.msra.mxu0 %v1405
    %1433 = vmatprep.subr.mxu0 0.0
    %1434 = vmatpush1.msra.mxu0 %v1406
    %1435 = vmatprep.subr.mxu0 0.0
    %1436 = vmatpush1.msra.mxu0 0.0
    %1437 = vmatprep.subr.mxu0 0.0
    %1438 = vmatpush1.msra.mxu0 0.0
    %1439 = vmatprep.subr.mxu0 0.0
    %1440 = vmatpush1.msra.mxu0 0.0
    %1441 = vmatprep.subr.mxu0 0.0
    %1442 = vmatpush1.msra.mxu0 0.0
    %1443 = vmatprep.subr.mxu0 0.0
    %1444 = vmatpush1.msra.mxu0 0.0
    %1445 = vmatprep.subr.mxu0 0.0
    %1446 = vmatpush1.msra.mxu0 0.0
    %1447 = vmatprep.subr.mxu0 0.0
    %1448 = vmatpush1.msra.mxu0 0.0
    %1449 = vmatprep.subr.mxu0 0.0
    %1450 = vmatpush1.msra.mxu0 0.0
    %1451 = vmatprep.subr.mxu0 0.0
    %1452 = vmatpush1.msra.mxu0 0.0
    %1453 = vmatprep.subr.mxu0 0.0
    %1454 = vmatpush1.msra.mxu0 0.0
    %1455 = vmatprep.subr.mxu0 0.0
    %1456 = vmatpush1.msra.mxu0 0.0
    %1457 = vmatprep.subr.mxu0 0.0
    %1458 = vmatpush1.msra.mxu0 0.0
    %1459 = vmatprep.subr.mxu0 0.0
    %1460 = vmatpush1.msra.mxu0 0.0
    %1461 = vmatprep.subr.mxu0 0.0
    %1462 = vmatpush1.msra.mxu0 0.0
    %1463 = vmatprep.subr.mxu0 0.0
    %1464 = vmatpush1.msra.mxu0 0.0
    %1465 = vmatprep.subr.mxu0 0.0
    %1466 = vmatpush1.msra.mxu0 0.0
    %1467 = vmatprep.subr.mxu0 0.0
    %1468 = vmatpush1.msra.mxu0 0.0
    %1469 = vmatprep.subr.mxu0 0.0
    %1470 = vmatpush1.msra.mxu0 0.0
    %1471 = vmatprep.subr.mxu0 0.0
    %1472 = vmatpush1.msra.mxu0 0.0
    %1473 = vmatprep.subr.mxu0 0.0
    %1474 = vmatpush1.msra.mxu0 0.0
    %1475 = vmatprep.subr.mxu0 0.0
    %1476 = vmatpush1.msra.mxu0 0.0
    %1477 = vmatprep.subr.mxu0 0.0
    %1478 = vmatpush1.msra.mxu0 0.0
    %1479 = vmatprep.subr.mxu0 0.0
    %1480 = vmatpush1.msra.mxu0 0.0
    %1481 = vmatprep.subr.mxu0 0.0
    %1482 = vmatpush1.msra.mxu0 0.0
    %1483 = vmatprep.subr.mxu0 0.0
    %1484 = vmatpush1.msra.mxu0 0.0
    %1485 = vmatprep.subr.mxu0 0.0
    %1486 = vmatpush1.msra.mxu0 0.0
    %1487 = vmatprep.subr.mxu0 0.0
    %1488 = vmatpush1.msra.mxu0 0.0
    %1489 = vmatprep.subr.mxu0 0.0
    %1490 = vmatpush1.msra.mxu0 0.0
    %1491 = vmatprep.mubr.f32.mxu0 0.0
    %1492 = vmatmul.mubr.f32.gmra.mrb[0].mxu0 %v70
    %v1493 = vpop.f32.mrb[0].mxu0
    %v1494 = vadd.f32 %v1425, %v1493
    %v1495 = vpop.f32.mrb[0].mxu0
    %1496 = vmatprep.mubr.f32.mxu0 0.0
    %1497 = vmatmul.mubr.f32.gmra.mrb[0].mxu0 %v73
    %v1498 = vpop.f32.mrb[0].mxu0
    %v1499 = vadd.f32 %v1425, %v1498
    %v1500 = vpop.f32.mrb[0].mxu0
    %1501 = vdwg.mxu0
    %v1502 = vmul.f32 %v1494, 0.35355338
    %v1503 = vmul.f32 %v1499, 0.35355338
    %s1504 = scalar_lea.vmem %s7, 2
    %v1505 = vld [vmem:[%s1504] sm:$0x1]
    %v1507 = vlaneseq
    %v1508 = vshrl.u32 %v1507, 7
    %v1509 = vsub.s32 0, %v1508
    %v1510 = vrot.slane %v1505, %v1509
    %1512 = vmatprep.subr.mxu0 0.0
    %1513 = vmatpush1.msra.mxu0 %v1408
    %1514 = vmatprep.subr.mxu0 0.0
    %1515 = vmatpush1.msra.mxu0 %v1409
    %1516 = vmatprep.subr.mxu0 0.0
    %1517 = vmatpush1.msra.mxu0 %v1410
    %1518 = vmatprep.subr.mxu0 0.0
    %1519 = vmatpush1.msra.mxu0 %v1411
    %1520 = vmatprep.subr.mxu0 0.0
    %1521 = vmatpush1.msra.mxu0 0.0
    %1522 = vmatprep.subr.mxu0 0.0
    %1523 = vmatpush1.msra.mxu0 0.0
    %1524 = vmatprep.subr.mxu0 0.0
    %1525 = vmatpush1.msra.mxu0 0.0
    %1526 = vmatprep.subr.mxu0 0.0
    %1527 = vmatpush1.msra.mxu0 0.0
    %1528 = vmatprep.subr.mxu0 0.0
    %1529 = vmatpush1.msra.mxu0 0.0
    %1530 = vmatprep.subr.mxu0 0.0
    %1531 = vmatpush1.msra.mxu0 0.0
    %1532 = vmatprep.subr.mxu0 0.0
    %1533 = vmatpush1.msra.mxu0 0.0
    %1534 = vmatprep.subr.mxu0 0.0
    %1535 = vmatpush1.msra.mxu0 0.0
    %1536 = vmatprep.subr.mxu0 0.0
    %1537 = vmatpush1.msra.mxu0 0.0
    %1538 = vmatprep.subr.mxu0 0.0
    %1539 = vmatpush1.msra.mxu0 0.0
    %1540 = vmatprep.subr.mxu0 0.0
    %1541 = vmatpush1.msra.mxu0 0.0
    %1542 = vmatprep.subr.mxu0 0.0
    %1543 = vmatpush1.msra.mxu0 0.0
    %1544 = vmatprep.subr.mxu0 0.0
    %1545 = vmatpush1.msra.mxu0 0.0
    %1546 = vmatprep.subr.mxu0 0.0
    %1547 = vmatpush1.msra.mxu0 0.0
    %1548 = vmatprep.subr.mxu0 0.0
    %1549 = vmatpush1.msra.mxu0 0.0
    %1550 = vmatprep.subr.mxu0 0.0
    %1551 = vmatpush1.msra.mxu0 0.0
    %1552 = vmatprep.subr.mxu0 0.0
    %1553 = vmatpush1.msra.mxu0 0.0
    %1554 = vmatprep.subr.mxu0 0.0
    %1555 = vmatpush1.msra.mxu0 0.0
    %1556 = vmatprep.subr.mxu0 0.0
    %1557 = vmatpush1.msra.mxu0 0.0
    %1558 = vmatprep.subr.mxu0 0.0
    %1559 = vmatpush1.msra.mxu0 0.0
    %1560 = vmatprep.subr.mxu0 0.0
    %1561 = vmatpush1.msra.mxu0 0.0
    %1562 = vmatprep.subr.mxu0 0.0
    %1563 = vmatpush1.msra.mxu0 0.0
    %1564 = vmatprep.subr.mxu0 0.0
    %1565 = vmatpush1.msra.mxu0 0.0
    %1566 = vmatprep.subr.mxu0 0.0
    %1567 = vmatpush1.msra.mxu0 0.0
    %1568 = vmatprep.subr.mxu0 0.0
    %1569 = vmatpush1.msra.mxu0 0.0
    %1570 = vmatprep.subr.mxu0 0.0
    %1571 = vmatpush1.msra.mxu0 0.0
    %1572 = vmatprep.subr.mxu0 0.0
    %1573 = vmatpush1.msra.mxu0 0.0
    %1574 = vmatprep.subr.mxu0 0.0
    %1575 = vmatpush1.msra.mxu0 0.0
    %1576 = vmatprep.mubr.f32.mxu0 0.0
    %1577 = vmatmul.mubr.f32.gmra.mrb[0].mxu0 %v160
    %v1578 = vpop.f32.mrb[0].mxu0
    %v1579 = vadd.f32 %v1510, %v1578
    %v1580 = vpop.f32.mrb[0].mxu0
    %1581 = vmatprep.mubr.f32.mxu0 0.0
    %1582 = vmatmul.mubr.f32.gmra.mrb[0].mxu0 %v163
    %v1583 = vpop.f32.mrb[0].mxu0
    %v1584 = vadd.f32 %v1510, %v1583
    %v1585 = vpop.f32.mrb[0].mxu0
    %1586 = vdwg.mxu0
    %s1587 = scalar_lea.vmem %s9, 2
    %v1588 = vld [vmem:[%s1587] sm:$0x1]
    %v1590 = vlaneseq
    %v1591 = vshrl.u32 %v1590, 7
    %v1592 = vsub.s32 0, %v1591
    %v1593 = vrot.slane %v1588, %v1592
    %1595 = vmatprep.subr.mxu0 0.0
    %1596 = vmatpush1.msra.mxu0 %v1413
    %1597 = vmatprep.subr.mxu0 0.0
    %1598 = vmatpush1.msra.mxu0 %v1414
    %1599 = vmatprep.subr.mxu0 0.0
    %1600 = vmatpush1.msra.mxu0 %v1415
    %1601 = vmatprep.subr.mxu0 0.0
    %1602 = vmatpush1.msra.mxu0 %v1416
    %1603 = vmatprep.subr.mxu0 0.0
    %1604 = vmatpush1.msra.mxu0 0.0
    %1605 = vmatprep.subr.mxu0 0.0
    %1606 = vmatpush1.msra.mxu0 0.0
    %1607 = vmatprep.subr.mxu0 0.0
    %1608 = vmatpush1.msra.mxu0 0.0
    %1609 = vmatprep.subr.mxu0 0.0
    %1610 = vmatpush1.msra.mxu0 0.0
    %1611 = vmatprep.subr.mxu0 0.0
    %1612 = vmatpush1.msra.mxu0 0.0
    %1613 = vmatprep.subr.mxu0 0.0
    %1614 = vmatpush1.msra.mxu0 0.0
    %1615 = vmatprep.subr.mxu0 0.0
    %1616 = vmatpush1.msra.mxu0 0.0
    %1617 = vmatprep.subr.mxu0 0.0
    %1618 = vmatpush1.msra.mxu0 0.0
    %1619 = vmatprep.subr.mxu0 0.0
    %1620 = vmatpush1.msra.mxu0 0.0
    %1621 = vmatprep.subr.mxu0 0.0
    %1622 = vmatpush1.msra.mxu0 0.0
    %1623 = vmatprep.subr.mxu0 0.0
    %1624 = vmatpush1.msra.mxu0 0.0
    %1625 = vmatprep.subr.mxu0 0.0
    %1626 = vmatpush1.msra.mxu0 0.0
    %1627 = vmatprep.subr.mxu0 0.0
    %1628 = vmatpush1.msra.mxu0 0.0
    %1629 = vmatprep.subr.mxu0 0.0
    %1630 = vmatpush1.msra.mxu0 0.0
    %1631 = vmatprep.subr.mxu0 0.0
    %1632 = vmatpush1.msra.mxu0 0.0
    %1633 = vmatprep.subr.mxu0 0.0
    %1634 = vmatpush1.msra.mxu0 0.0
    %1635 = vmatprep.subr.mxu0 0.0
    %1636 = vmatpush1.msra.mxu0 0.0
    %1637 = vmatprep.subr.mxu0 0.0
    %1638 = vmatpush1.msra.mxu0 0.0
    %1639 = vmatprep.subr.mxu0 0.0
    %1640 = vmatpush1.msra.mxu0 0.0
    %1641 = vmatprep.subr.mxu0 0.0
    %1642 = vmatpush1.msra.mxu0 0.0
    %1643 = vmatprep.subr.mxu0 0.0
    %1644 = vmatpush1.msra.mxu0 0.0
    %1645 = vmatprep.subr.mxu0 0.0
    %1646 = vmatpush1.msra.mxu0 0.0
    %1647 = vmatprep.subr.mxu0 0.0
    %1648 = vmatpush1.msra.mxu0 0.0
    %1649 = vmatprep.subr.mxu0 0.0
    %1650 = vmatpush1.msra.mxu0 0.0
    %1651 = vmatprep.subr.mxu0 0.0
    %1652 = vmatpush1.msra.mxu0 0.0
    %1653 = vmatprep.subr.mxu0 0.0
    %1654 = vmatpush1.msra.mxu0 0.0
    %1655 = vmatprep.subr.mxu0 0.0
    %1656 = vmatpush1.msra.mxu0 0.0
    %1657 = vmatprep.subr.mxu0 0.0
    %1658 = vmatpush1.msra.mxu0 0.0
    %1659 = vmatprep.mubr.f32.mxu0 0.0
    %1660 = vmatmul.mubr.f32.gmra.mrb[0].mxu0 %v248
    %v1661 = vpop.f32.mrb[0].mxu0
    %v1662 = vadd.f32 %v1593, %v1661
    %v1663 = vpop.f32.mrb[0].mxu0
    %1664 = vmatprep.mubr.f32.mxu0 0.0
    %1665 = vmatmul.mubr.f32.gmra.mrb[0].mxu0 %v251
    %v1666 = vpop.f32.mrb[0].mxu0
    %v1667 = vadd.f32 %v1593, %v1666
    %v1668 = vpop.f32.mrb[0].mxu0
    %1669 = vdwg.mxu0
    %v1671 = vsel %vm329, %v1502, 0
    %v1674 = vsel %vm329, %v1579, 0
    %1676 = vmatprep.subr.mxu0 0.0
    %1677 = vmatpush1.xpose.msra.mxu0 %v1674
    %1678 = vmatprep.subr.mxu0 0.0
    %1679 = vmatpush1.xpose.msra.mxu0 0.0
    %1680 = vmatprep.subr.mxu0 0.0
    %1681 = vmatpush1.xpose.msra.mxu0 0.0
    %1682 = vmatprep.subr.mxu0 0.0
    %1683 = vmatpush1.xpose.msra.mxu0 0.0
    %1684 = vmatprep.subr.mxu0 0.0
    %1685 = vmatpush1.xpose.msra.mxu0 0.0
    %1686 = vmatprep.subr.mxu0 0.0
    %1687 = vmatpush1.xpose.msra.mxu0 0.0
    %1688 = vmatprep.subr.mxu0 0.0
    %1689 = vmatpush1.xpose.msra.mxu0 0.0
    %1690 = vmatprep.subr.mxu0 0.0
    %1691 = vmatpush1.xpose.msra.mxu0 0.0
    %1692 = vmatprep.subr.mxu0 0.0
    %1693 = vmatpush1.xpose.msra.mxu0 0.0
    %1694 = vmatprep.subr.mxu0 0.0
    %1695 = vmatpush1.xpose.msra.mxu0 0.0
    %1696 = vmatprep.subr.mxu0 0.0
    %1697 = vmatpush1.xpose.msra.mxu0 0.0
    %1698 = vmatprep.subr.mxu0 0.0
    %1699 = vmatpush1.xpose.msra.mxu0 0.0
    %1700 = vmatprep.subr.mxu0 0.0
    %1701 = vmatpush1.xpose.msra.mxu0 0.0
    %1702 = vmatprep.subr.mxu0 0.0
    %1703 = vmatpush1.xpose.msra.mxu0 0.0
    %1704 = vmatprep.subr.mxu0 0.0
    %1705 = vmatpush1.xpose.msra.mxu0 0.0
    %1706 = vmatprep.subr.mxu0 0.0
    %1707 = vmatpush1.xpose.msra.mxu0 0.0
    %1708 = vmatprep.subr.mxu0 0.0
    %1709 = vmatpush1.xpose.msra.mxu0 0.0
    %1710 = vmatprep.subr.mxu0 0.0
    %1711 = vmatpush1.xpose.msra.mxu0 0.0
    %1712 = vmatprep.subr.mxu0 0.0
    %1713 = vmatpush1.xpose.msra.mxu0 0.0
    %1714 = vmatprep.subr.mxu0 0.0
    %1715 = vmatpush1.xpose.msra.mxu0 0.0
    %1716 = vmatprep.subr.mxu0 0.0
    %1717 = vmatpush1.xpose.msra.mxu0 0.0
    %1718 = vmatprep.subr.mxu0 0.0
    %1719 = vmatpush1.xpose.msra.mxu0 0.0
    %1720 = vmatprep.subr.mxu0 0.0
    %1721 = vmatpush1.xpose.msra.mxu0 0.0
    %1722 = vmatprep.subr.mxu0 0.0
    %1723 = vmatpush1.xpose.msra.mxu0 0.0
    %1724 = vmatprep.subr.mxu0 0.0
    %1725 = vmatpush1.xpose.msra.mxu0 0.0
    %1726 = vmatprep.subr.mxu0 0.0
    %1727 = vmatpush1.xpose.msra.mxu0 0.0
    %1728 = vmatprep.subr.mxu0 0.0
    %1729 = vmatpush1.xpose.msra.mxu0 0.0
    %1730 = vmatprep.subr.mxu0 0.0
    %1731 = vmatpush1.xpose.msra.mxu0 0.0
    %1732 = vmatprep.subr.mxu0 0.0
    %1733 = vmatpush1.xpose.msra.mxu0 0.0
    %1734 = vmatprep.subr.mxu0 0.0
    %1735 = vmatpush1.xpose.msra.mxu0 0.0
    %1736 = vmatprep.subr.mxu0 0.0
    %1737 = vmatpush1.xpose.msra.mxu0 0.0
    %1738 = vmatprep.subr.mxu0 0.0
    %1739 = vmatpush1.xpose.msra.mxu0 0.0
    %1740 = vmatprep.mubr.f32.mxu0 0.0
    %1741 = vmatmul.mubr.f32.gmra.mrb[0].mxu0 %v1671
    %v1742 = vpop.f32.mrb[0].mxu0
    %v1743 = vadd.f32 %v328, %v1742
    %v1744 = vpop.f32.mrb[0].mxu0
    %1745 = vdwg.mxu0
    %v1746 = vsel %vm329, %v1743, -inf
    %1747 = vmax.xlane.f32.xlu0 %v1746
    %v1748 = vpop.xlane.xlu0 %1747
    %v1749 = vsub.f32 %v1743, %v1748
    %v1750 = vmul.f32 %v1749, 1.442695
    %v1751 = vpow.pop %v1750
    %v1752 = vsel %vm329, %v1751, 0.0
    %1753 = vadd.xlane.f32.xlu0 %v1752
    %v1754 = vpop.xlane.xlu0 %1753
    %v1755 = vrcp.pop %v1754
    %v1756 = vmul.f32 %v1751, %v1755
    %v1758 = vsel %vm329, %v1756, 0
    %1760 = vmatprep.subr.mxu0 0.0
    %1761 = vmatpush1.msra.mxu0 %v1662
    %1762 = vmatprep.subr.mxu0 0.0
    %1763 = vmatpush1.msra.mxu0 0.0
    %1764 = vmatprep.subr.mxu0 0.0
    %1765 = vmatpush1.msra.mxu0 0.0
    %1766 = vmatprep.subr.mxu0 0.0
    %1767 = vmatpush1.msra.mxu0 0.0
    %1768 = vmatprep.subr.mxu0 0.0
    %1769 = vmatpush1.msra.mxu0 0.0
    %1770 = vmatprep.subr.mxu0 0.0
    %1771 = vmatpush1.msra.mxu0 0.0
    %1772 = vmatprep.subr.mxu0 0.0
    %1773 = vmatpush1.msra.mxu0 0.0
    %1774 = vmatprep.subr.mxu0 0.0
    %1775 = vmatpush1.msra.mxu0 0.0
    %1776 = vmatprep.subr.mxu0 0.0
    %1777 = vmatpush1.msra.mxu0 0.0
    %1778 = vmatprep.subr.mxu0 0.0
    %1779 = vmatpush1.msra.mxu0 0.0
    %1780 = vmatprep.subr.mxu0 0.0
    %1781 = vmatpush1.msra.mxu0 0.0
    %1782 = vmatprep.subr.mxu0 0.0
    %1783 = vmatpush1.msra.mxu0 0.0
    %1784 = vmatprep.subr.mxu0 0.0
    %1785 = vmatpush1.msra.mxu0 0.0
    %1786 = vmatprep.subr.mxu0 0.0
    %1787 = vmatpush1.msra.mxu0 0.0
    %1788 = vmatprep.subr.mxu0 0.0
    %1789 = vmatpush1.msra.mxu0 0.0
    %1790 = vmatprep.subr.mxu0 0.0
    %1791 = vmatpush1.msra.mxu0 0.0
    %1792 = vmatprep.subr.mxu0 0.0
    %1793 = vmatpush1.msra.mxu0 0.0
    %1794 = vmatprep.subr.mxu0 0.0
    %1795 = vmatpush1.msra.mxu0 0.0
    %1796 = vmatprep.subr.mxu0 0.0
    %1797 = vmatpush1.msra.mxu0 0.0
    %1798 = vmatprep.subr.mxu0 0.0
    %1799 = vmatpush1.msra.mxu0 0.0
    %1800 = vmatprep.subr.mxu0 0.0
    %1801 = vmatpush1.msra.mxu0 0.0
    %1802 = vmatprep.subr.mxu0 0.0
    %1803 = vmatpush1.msra.mxu0 0.0
    %1804 = vmatprep.subr.mxu0 0.0
    %1805 = vmatpush1.msra.mxu0 0.0
    %1806 = vmatprep.subr.mxu0 0.0
    %1807 = vmatpush1.msra.mxu0 0.0
    %1808 = vmatprep.subr.mxu0 0.0
    %1809 = vmatpush1.msra.mxu0 0.0
    %1810 = vmatprep.subr.mxu0 0.0
    %1811 = vmatpush1.msra.mxu0 0.0
    %1812 = vmatprep.subr.mxu0 0.0
    %1813 = vmatpush1.msra.mxu0 0.0
    %1814 = vmatprep.subr.mxu0 0.0
    %1815 = vmatpush1.msra.mxu0 0.0
    %1816 = vmatprep.subr.mxu0 0.0
    %1817 = vmatpush1.msra.mxu0 0.0
    %1818 = vmatprep.subr.mxu0 0.0
    %1819 = vmatpush1.msra.mxu0 0.0
    %1820 = vmatprep.subr.mxu0 0.0
    %1821 = vmatpush1.msra.mxu0 0.0
    %1822 = vmatprep.subr.mxu0 0.0
    %1823 = vmatpush1.msra.mxu0 0.0
    %1824 = vmatprep.mubr.f32.mxu0 0.0
    %1825 = vmatmul.mubr.f32.gmra.mrb[0].mxu0 %v1758
    %v1826 = vpop.f32.mrb[0].mxu0
    %v1827 = vadd.f32 0.0, %v1826
    %v1828 = vpop.f32.mrb[0].mxu0
    %1829 = vdwg.mxu0
    %v1831 = vsel %vm329, %v1503, 0
    %v1834 = vsel %vm329, %v1584, 0
    %1836 = vmatprep.subr.mxu0 0.0
    %1837 = vmatpush1.xpose.msra.mxu0 %v1834
    %1838 = vmatprep.subr.mxu0 0.0
    %1839 = vmatpush1.xpose.msra.mxu0 0.0
    %1840 = vmatprep.subr.mxu0 0.0
    %1841 = vmatpush1.xpose.msra.mxu0 0.0
    %1842 = vmatprep.subr.mxu0 0.0
    %1843 = vmatpush1.xpose.msra.mxu0 0.0
    %1844 = vmatprep.subr.mxu0 0.0
    %1845 = vmatpush1.xpose.msra.mxu0 0.0
    %1846 = vmatprep.subr.mxu0 0.0
    %1847 = vmatpush1.xpose.msra.mxu0 0.0
    %1848 = vmatprep.subr.mxu0 0.0
    %1849 = vmatpush1.xpose.msra.mxu0 0.0
    %1850 = vmatprep.subr.mxu0 0.0
    %1851 = vmatpush1.xpose.msra.mxu0 0.0
    %1852 = vmatprep.subr.mxu0 0.0
    %1853 = vmatpush1.xpose.msra.mxu0 0.0
    %1854 = vmatprep.subr.mxu0 0.0
    %1855 = vmatpush1.xpose.msra.mxu0 0.0
    %1856 = vmatprep.subr.mxu0 0.0
    %1857 = vmatpush1.xpose.msra.mxu0 0.0
    %1858 = vmatprep.subr.mxu0 0.0
    %1859 = vmatpush1.xpose.msra.mxu0 0.0
    %1860 = vmatprep.subr.mxu0 0.0
    %1861 = vmatpush1.xpose.msra.mxu0 0.0
    %1862 = vmatprep.subr.mxu0 0.0
    %1863 = vmatpush1.xpose.msra.mxu0 0.0
    %1864 = vmatprep.subr.mxu0 0.0
    %1865 = vmatpush1.xpose.msra.mxu0 0.0
    %1866 = vmatprep.subr.mxu0 0.0
    %1867 = vmatpush1.xpose.msra.mxu0 0.0
    %1868 = vmatprep.subr.mxu0 0.0
    %1869 = vmatpush1.xpose.msra.mxu0 0.0
    %1870 = vmatprep.subr.mxu0 0.0
    %1871 = vmatpush1.xpose.msra.mxu0 0.0
    %1872 = vmatprep.subr.mxu0 0.0
    %1873 = vmatpush1.xpose.msra.mxu0 0.0
    %1874 = vmatprep.subr.mxu0 0.0
    %1875 = vmatpush1.xpose.msra.mxu0 0.0
    %1876 = vmatprep.subr.mxu0 0.0
    %1877 = vmatpush1.xpose.msra.mxu0 0.0
    %1878 = vmatprep.subr.mxu0 0.0
    %1879 = vmatpush1.xpose.msra.mxu0 0.0
    %1880 = vmatprep.subr.mxu0 0.0
    %1881 = vmatpush1.xpose.msra.mxu0 0.0
    %1882 = vmatprep.subr.mxu0 0.0
    %1883 = vmatpush1.xpose.msra.mxu0 0.0
    %1884 = vmatprep.subr.mxu0 0.0
    %1885 = vmatpush1.xpose.msra.mxu0 0.0
    %1886 = vmatprep.subr.mxu0 0.0
    %1887 = vmatpush1.xpose.msra.mxu0 0.0
    %1888 = vmatprep.subr.mxu0 0.0
    %1889 = vmatpush1.xpose.msra.mxu0 0.0
    %1890 = vmatprep.subr.mxu0 0.0
    %1891 = vmatpush1.xpose.msra.mxu0 0.0
    %1892 = vmatprep.subr.mxu0 0.0
    %1893 = vmatpush1.xpose.msra.mxu0 0.0
    %1894 = vmatprep.subr.mxu0 0.0
    %1895 = vmatpush1.xpose.msra.mxu0 0.0
    %1896 = vmatprep.subr.mxu0 0.0
    %1897 = vmatpush1.xpose.msra.mxu0 0.0
    %1898 = vmatprep.subr.mxu0 0.0
    %1899 = vmatpush1.xpose.msra.mxu0 0.0
    %1900 = vmatprep.mubr.f32.mxu0 0.0
    %1901 = vmatmul.mubr.f32.gmra.mrb[0].mxu0 %v1831
    %v1902 = vpop.f32.mrb[0].mxu0
    %v1903 = vadd.f32 %v491, %v1902
    %v1904 = vpop.f32.mrb[0].mxu0
    %1905 = vdwg.mxu0
    %v1906 = vsel %vm329, %v1903, -inf
    %1907 = vmax.xlane.f32.xlu0 %v1906
    %v1908 = vpop.xlane.xlu0 %1907
    %v1909 = vsub.f32 %v1903, %v1908
    %v1910 = vmul.f32 %v1909, 1.442695
    %v1911 = vpow.pop %v1910
    %v1912 = vsel %vm329, %v1911, 0.0
    %1913 = vadd.xlane.f32.xlu0 %v1912
    %v1914 = vpop.xlane.xlu0 %1913
    %v1915 = vrcp.pop %v1914
    %v1916 = vmul.f32 %v1911, %v1915
    %v1918 = vsel %vm329, %v1916, 0
    %1920 = vmatprep.subr.mxu0 0.0
    %1921 = vmatpush1.msra.mxu0 %v1667
    %1922 = vmatprep.subr.mxu0 0.0
    %1923 = vmatpush1.msra.mxu0 0.0
    %1924 = vmatprep.subr.mxu0 0.0
    %1925 = vmatpush1.msra.mxu0 0.0
    %1926 = vmatprep.subr.mxu0 0.0
    %1927 = vmatpush1.msra.mxu0 0.0
    %1928 = vmatprep.subr.mxu0 0.0
    %1929 = vmatpush1.msra.mxu0 0.0
    %1930 = vmatprep.subr.mxu0 0.0
    %1931 = vmatpush1.msra.mxu0 0.0
    %1932 = vmatprep.subr.mxu0 0.0
    %1933 = vmatpush1.msra.mxu0 0.0
    %1934 = vmatprep.subr.mxu0 0.0
    %1935 = vmatpush1.msra.mxu0 0.0
    %1936 = vmatprep.subr.mxu0 0.0
    %1937 = vmatpush1.msra.mxu0 0.0
    %1938 = vmatprep.subr.mxu0 0.0
    %1939 = vmatpush1.msra.mxu0 0.0
    %1940 = vmatprep.subr.mxu0 0.0
    %1941 = vmatpush1.msra.mxu0 0.0
    %1942 = vmatprep.subr.mxu0 0.0
    %1943 = vmatpush1.msra.mxu0 0.0
    %1944 = vmatprep.subr.mxu0 0.0
    %1945 = vmatpush1.msra.mxu0 0.0
    %1946 = vmatprep.subr.mxu0 0.0
    %1947 = vmatpush1.msra.mxu0 0.0
    %1948 = vmatprep.subr.mxu0 0.0
    %1949 = vmatpush1.msra.mxu0 0.0
    %1950 = vmatprep.subr.mxu0 0.0
    %1951 = vmatpush1.msra.mxu0 0.0
    %1952 = vmatprep.subr.mxu0 0.0
    %1953 = vmatpush1.msra.mxu0 0.0
    %1954 = vmatprep.subr.mxu0 0.0
    %1955 = vmatpush1.msra.mxu0 0.0
    %1956 = vmatprep.subr.mxu0 0.0
    %1957 = vmatpush1.msra.mxu0 0.0
    %1958 = vmatprep.subr.mxu0 0.0
    %1959 = vmatpush1.msra.mxu0 0.0
    %1960 = vmatprep.subr.mxu0 0.0
    %1961 = vmatpush1.msra.mxu0 0.0
    %1962 = vmatprep.subr.mxu0 0.0
    %1963 = vmatpush1.msra.mxu0 0.0
    %1964 = vmatprep.subr.mxu0 0.0
    %1965 = vmatpush1.msra.mxu0 0.0
    %1966 = vmatprep.subr.mxu0 0.0
    %1967 = vmatpush1.msra.mxu0 0.0
    %1968 = vmatprep.subr.mxu0 0.0
    %1969 = vmatpush1.msra.mxu0 0.0
    %1970 = vmatprep.subr.mxu0 0.0
    %1971 = vmatpush1.msra.mxu0 0.0
    %1972 = vmatprep.subr.mxu0 0.0
    %1973 = vmatpush1.msra.mxu0 0.0
    %1974 = vmatprep.subr.mxu0 0.0
    %1975 = vmatpush1.msra.mxu0 0.0
    %1976 = vmatprep.subr.mxu0 0.0
    %1977 = vmatpush1.msra.mxu0 0.0
    %1978 = vmatprep.subr.mxu0 0.0
    %1979 = vmatpush1.msra.mxu0 0.0
    %1980 = vmatprep.subr.mxu0 0.0
    %1981 = vmatpush1.msra.mxu0 0.0
    %1982 = vmatprep.subr.mxu0 0.0
    %1983 = vmatpush1.msra.mxu0 0.0
    %1984 = vmatprep.mubr.f32.mxu0 0.0
    %1985 = vmatmul.mubr.f32.gmra.mrb[0].mxu0 %v1918
    %v1986 = vpop.f32.mrb[0].mxu0
    %v1987 = vadd.f32 0.0, %v1986
    %v1988 = vpop.f32.mrb[0].mxu0
    %1989 = vdwg.mxu0
    %v1991 = vsel %vm329, %v1827, 0
    %v1994 = vsel %vm329, %v1987, 0
    %1996 = vmatprep.subr.mxu0 0.0
    %1997 = vmatpush1.msra.mxu0 %v1418
    %1998 = vmatprep.subr.mxu0 0.0
    %1999 = vmatpush1.msra.mxu0 0.0
    %2000 = vmatprep.subr.mxu0 0.0
    %2001 = vmatpush1.msra.mxu0 0.0
    %2002 = vmatprep.subr.mxu0 0.0
    %2003 = vmatpush1.msra.mxu0 0.0
    %2004 = vmatprep.subr.mxu0 0.0
    %2005 = vmatpush1.msra.mxu0 0.0
    %2006 = vmatprep.subr.mxu0 0.0
    %2007 = vmatpush1.msra.mxu0 0.0
    %2008 = vmatprep.subr.mxu0 0.0
    %2009 = vmatpush1.msra.mxu0 0.0
    %2010 = vmatprep.subr.mxu0 0.0
    %2011 = vmatpush1.msra.mxu0 0.0
    %2012 = vmatprep.subr.mxu0 0.0
    %2013 = vmatpush1.msra.mxu0 0.0
    %2014 = vmatprep.subr.mxu0 0.0
    %2015 = vmatpush1.msra.mxu0 0.0
    %2016 = vmatprep.subr.mxu0 0.0
    %2017 = vmatpush1.msra.mxu0 0.0
    %2018 = vmatprep.subr.mxu0 0.0
    %2019 = vmatpush1.msra.mxu0 0.0
    %2020 = vmatprep.subr.mxu0 0.0
    %2021 = vmatpush1.msra.mxu0 0.0
    %2022 = vmatprep.subr.mxu0 0.0
    %2023 = vmatpush1.msra.mxu0 0.0
    %2024 = vmatprep.subr.mxu0 0.0
    %2025 = vmatpush1.msra.mxu0 0.0
    %2026 = vmatprep.subr.mxu0 0.0
    %2027 = vmatpush1.msra.mxu0 0.0
    %2028 = vmatprep.subr.mxu0 0.0
    %2029 = vmatpush1.msra.mxu0 0.0
    %2030 = vmatprep.subr.mxu0 0.0
    %2031 = vmatpush1.msra.mxu0 0.0
    %2032 = vmatprep.subr.mxu0 0.0
    %2033 = vmatpush1.msra.mxu0 0.0
    %2034 = vmatprep.subr.mxu0 0.0
    %2035 = vmatpush1.msra.mxu0 0.0
    %2036 = vmatprep.subr.mxu0 0.0
    %2037 = vmatpush1.msra.mxu0 0.0
    %2038 = vmatprep.subr.mxu0 0.0
    %2039 = vmatpush1.msra.mxu0 0.0
    %2040 = vmatprep.subr.mxu0 0.0
    %2041 = vmatpush1.msra.mxu0 0.0
    %2042 = vmatprep.subr.mxu0 0.0
    %2043 = vmatpush1.msra.mxu0 0.0
    %2044 = vmatprep.subr.mxu0 0.0
    %2045 = vmatpush1.msra.mxu0 0.0
    %2046 = vmatprep.subr.mxu0 0.0
    %2047 = vmatpush1.msra.mxu0 0.0
    %2048 = vmatprep.subr.mxu0 0.0
    %2049 = vmatpush1.msra.mxu0 0.0
    %2050 = vmatprep.subr.mxu0 0.0
    %2051 = vmatpush1.msra.mxu0 0.0
    %2052 = vmatprep.subr.mxu0 0.0
    %2053 = vmatpush1.msra.mxu0 0.0
    %2054 = vmatprep.subr.mxu0 0.0
    %2055 = vmatpush1.msra.mxu0 0.0
    %2056 = vmatprep.subr.mxu0 0.0
    %2057 = vmatpush1.msra.mxu0 0.0
    %2058 = vmatprep.subr.mxu0 0.0
    %2059 = vmatpush1.msra.mxu0 0.0
    %2060 = vmatprep.mubr.f32.mxu0 0.0
    %2061 = vmatmul.mubr.f32.gmra.mrb[0].mxu0 %v1991
    %v2062 = vpop.f32.mrb[0].mxu0
    %v2063 = vadd.f32 0.0, %v2062
    %v2064 = vpop.f32.mrb[0].mxu0
    %2065 = vmatprep.mubr.f32.mxu0 0.0
    %2066 = vmatmul.mubr.f32.gmra.mrb[0].mxu0 %v1994
    %v2067 = vpop.f32.mrb[0].mxu0
    %v2068 = vadd.f32 0.0, %v2067
    %v2069 = vpop.f32.mrb[0].mxu0
    %2070 = vdwg.mxu0
    %v2071 = vadd.f32 %v1394, %v2063
    %v2072 = vadd.f32 %v1399, %v2068
    %s2073 = scalar_lea.vmem %s4, 96
    %v2074 = vld [vmem:[%s2073] sm:$0xff]
    %v2075 = vld [vmem:[%s2073 + $0x8] sm:$0xff]
    %v2076 = vld [vmem:[%s2073 + $0x10] sm:$0xff]
    %v2077 = vld [vmem:[%s2073 + $0x18] sm:$0xff]
    %s2078 = scalar_lea.vmem %s6, 96
    %v2079 = vld [vmem:[%s2078] sm:$0xff]
    %v2080 = vld [vmem:[%s2078 + $0x8] sm:$0xff]
    %v2081 = vld [vmem:[%s2078 + $0x10] sm:$0xff]
    %v2082 = vld [vmem:[%s2078 + $0x18] sm:$0xff]
    %s2083 = scalar_lea.vmem %s8, 96
    %v2084 = vld [vmem:[%s2083] sm:$0xff]
    %v2085 = vld [vmem:[%s2083 + $0x8] sm:$0xff]
    %v2086 = vld [vmem:[%s2083 + $0x10] sm:$0xff]
    %v2087 = vld [vmem:[%s2083 + $0x18] sm:$0xff]
    %s2088 = scalar_lea.vmem %s10, 24
    %v2089 = vld [vmem:[%s2088] sm:$0xff]
    %s2090 = scalar_lea.vmem %s5, 3
    %v2091 = vld [vmem:[%s2090] sm:$0x1]
    %v2093 = vlaneseq
    %v2094 = vshrl.u32 %v2093, 7
    %v2095 = vsub.s32 0, %v2094
    %v2096 = vrot.slane %v2091, %v2095
    %2098 = vmatprep.subr.mxu0 0.0
    %2099 = vmatpush1.msra.mxu0 %v2074
    %2100 = vmatprep.subr.mxu0 0.0
    %2101 = vmatpush1.msra.mxu0 %v2075
    %2102 = vmatprep.subr.mxu0 0.0
    %2103 = vmatpush1.msra.mxu0 %v2076
    %2104 = vmatprep.subr.mxu0 0.0
    %2105 = vmatpush1.msra.mxu0 %v2077
    %2106 = vmatprep.subr.mxu0 0.0
    %2107 = vmatpush1.msra.mxu0 0.0
    %2108 = vmatprep.subr.mxu0 0.0
    %2109 = vmatpush1.msra.mxu0 0.0
    %2110 = vmatprep.subr.mxu0 0.0
    %2111 = vmatpush1.msra.mxu0 0.0
    %2112 = vmatprep.subr.mxu0 0.0
    %2113 = vmatpush1.msra.mxu0 0.0
    %2114 = vmatprep.subr.mxu0 0.0
    %2115 = vmatpush1.msra.mxu0 0.0
    %2116 = vmatprep.subr.mxu0 0.0
    %2117 = vmatpush1.msra.mxu0 0.0
    %2118 = vmatprep.subr.mxu0 0.0
    %2119 = vmatpush1.msra.mxu0 0.0
    %2120 = vmatprep.subr.mxu0 0.0
    %2121 = vmatpush1.msra.mxu0 0.0
    %2122 = vmatprep.subr.mxu0 0.0
    %2123 = vmatpush1.msra.mxu0 0.0
    %2124 = vmatprep.subr.mxu0 0.0
    %2125 = vmatpush1.msra.mxu0 0.0
    %2126 = vmatprep.subr.mxu0 0.0
    %2127 = vmatpush1.msra.mxu0 0.0
    %2128 = vmatprep.subr.mxu0 0.0
    %2129 = vmatpush1.msra.mxu0 0.0
    %2130 = vmatprep.subr.mxu0 0.0
    %2131 = vmatpush1.msra.mxu0 0.0
    %2132 = vmatprep.subr.mxu0 0.0
    %2133 = vmatpush1.msra.mxu0 0.0
    %2134 = vmatprep.subr.mxu0 0.0
    %2135 = vmatpush1.msra.mxu0 0.0
    %2136 = vmatprep.subr.mxu0 0.0
    %2137 = vmatpush1.msra.mxu0 0.0
    %2138 = vmatprep.subr.mxu0 0.0
    %2139 = vmatpush1.msra.mxu0 0.0
    %2140 = vmatprep.subr.mxu0 0.0
    %2141 = vmatpush1.msra.mxu0 0.0
    %2142 = vmatprep.subr.mxu0 0.0
    %2143 = vmatpush1.msra.mxu0 0.0
    %2144 = vmatprep.subr.mxu0 0.0
    %2145 = vmatpush1.msra.mxu0 0.0
    %2146 = vmatprep.subr.mxu0 0.0
    %2147 = vmatpush1.msra.mxu0 0.0
    %2148 = vmatprep.subr.mxu0 0.0
    %2149 = vmatpush1.msra.mxu0 0.0
    %2150 = vmatprep.subr.mxu0 0.0
    %2151 = vmatpush1.msra.mxu0 0.0
    %2152 = vmatprep.subr.mxu0 0.0
    %2153 = vmatpush1.msra.mxu0 0.0
    %2154 = vmatprep.subr.mxu0 0.0
    %2155 = vmatpush1.msra.mxu0 0.0
    %2156 = vmatprep.subr.mxu0 0.0
    %2157 = vmatpush1.msra.mxu0 0.0
    %2158 = vmatprep.subr.mxu0 0.0
    %2159 = vmatpush1.msra.mxu0 0.0
    %2160 = vmatprep.subr.mxu0 0.0
    %2161 = vmatpush1.msra.mxu0 0.0
    %2162 = vmatprep.mubr.f32.mxu0 0.0
    %2163 = vmatmul.mubr.f32.gmra.mrb[0].mxu0 %v70
    %v2164 = vpop.f32.mrb[0].mxu0
    %v2165 = vadd.f32 %v2096, %v2164
    %v2166 = vpop.f32.mrb[0].mxu0
    %2167 = vmatprep.mubr.f32.mxu0 0.0
    %2168 = vmatmul.mubr.f32.gmra.mrb[0].mxu0 %v73
    %v2169 = vpop.f32.mrb[0].mxu0
    %v2170 = vadd.f32 %v2096, %v2169
    %v2171 = vpop.f32.mrb[0].mxu0
    %2172 = vdwg.mxu0
    %v2173 = vmul.f32 %v2165, 0.35355338
    %v2174 = vmul.f32 %v2170, 0.35355338
    %s2175 = scalar_lea.vmem %s7, 3
    %v2176 = vld [vmem:[%s2175] sm:$0x1]
    %v2178 = vlaneseq
    %v2179 = vshrl.u32 %v2178, 7
    %v2180 = vsub.s32 0, %v2179
    %v2181 = vrot.slane %v2176, %v2180
    %2183 = vmatprep.subr.mxu0 0.0
    %2184 = vmatpush1.msra.mxu0 %v2079
    %2185 = vmatprep.subr.mxu0 0.0
    %2186 = vmatpush1.msra.mxu0 %v2080
    %2187 = vmatprep.subr.mxu0 0.0
    %2188 = vmatpush1.msra.mxu0 %v2081
    %2189 = vmatprep.subr.mxu0 0.0
    %2190 = vmatpush1.msra.mxu0 %v2082
    %2191 = vmatprep.subr.mxu0 0.0
    %2192 = vmatpush1.msra.mxu0 0.0
    %2193 = vmatprep.subr.mxu0 0.0
    %2194 = vmatpush1.msra.mxu0 0.0
    %2195 = vmatprep.subr.mxu0 0.0
    %2196 = vmatpush1.msra.mxu0 0.0
    %2197 = vmatprep.subr.mxu0 0.0
    %2198 = vmatpush1.msra.mxu0 0.0
    %2199 = vmatprep.subr.mxu0 0.0
    %2200 = vmatpush1.msra.mxu0 0.0
    %2201 = vmatprep.subr.mxu0 0.0
    %2202 = vmatpush1.msra.mxu0 0.0
    %2203 = vmatprep.subr.mxu0 0.0
    %2204 = vmatpush1.msra.mxu0 0.0
    %2205 = vmatprep.subr.mxu0 0.0
    %2206 = vmatpush1.msra.mxu0 0.0
    %2207 = vmatprep.subr.mxu0 0.0
    %2208 = vmatpush1.msra.mxu0 0.0
    %2209 = vmatprep.subr.mxu0 0.0
    %2210 = vmatpush1.msra.mxu0 0.0
    %2211 = vmatprep.subr.mxu0 0.0
    %2212 = vmatpush1.msra.mxu0 0.0
    %2213 = vmatprep.subr.mxu0 0.0
    %2214 = vmatpush1.msra.mxu0 0.0
    %2215 = vmatprep.subr.mxu0 0.0
    %2216 = vmatpush1.msra.mxu0 0.0
    %2217 = vmatprep.subr.mxu0 0.0
    %2218 = vmatpush1.msra.mxu0 0.0
    %2219 = vmatprep.subr.mxu0 0.0
    %2220 = vmatpush1.msra.mxu0 0.0
    %2221 = vmatprep.subr.mxu0 0.0
    %2222 = vmatpush1.msra.mxu0 0.0
    %2223 = vmatprep.subr.mxu0 0.0
    %2224 = vmatpush1.msra.mxu0 0.0
    %2225 = vmatprep.subr.mxu0 0.0
    %2226 = vmatpush1.msra.mxu0 0.0
    %2227 = vmatprep.subr.mxu0 0.0
    %2228 = vmatpush1.msra.mxu0 0.0
    %2229 = vmatprep.subr.mxu0 0.0
    %2230 = vmatpush1.msra.mxu0 0.0
    %2231 = vmatprep.subr.mxu0 0.0
    %2232 = vmatpush1.msra.mxu0 0.0
    %2233 = vmatprep.subr.mxu0 0.0
    %2234 = vmatpush1.msra.mxu0 0.0
    %2235 = vmatprep.subr.mxu0 0.0
    %2236 = vmatpush1.msra.mxu0 0.0
    %2237 = vmatprep.subr.mxu0 0.0
    %2238 = vmatpush1.msra.mxu0 0.0
    %2239 = vmatprep.subr.mxu0 0.0
    %2240 = vmatpush1.msra.mxu0 0.0
    %2241 = vmatprep.subr.mxu0 0.0
    %2242 = vmatpush1.msra.mxu0 0.0
    %2243 = vmatprep.subr.mxu0 0.0
    %2244 = vmatpush1.msra.mxu0 0.0
    %2245 = vmatprep.subr.mxu0 0.0
    %2246 = vmatpush1.msra.mxu0 0.0
    %2247 = vmatprep.mubr.f32.mxu0 0.0
    %2248 = vmatmul.mubr.f32.gmra.mrb[0].mxu0 %v160
    %v2249 = vpop.f32.mrb[0].mxu0
    %v2250 = vadd.f32 %v2181, %v2249
    %v2251 = vpop.f32.mrb[0].mxu0
    %2252 = vmatprep.mubr.f32.mxu0 0.0
    %2253 = vmatmul.mubr.f32.gmra.mrb[0].mxu0 %v163
    %v2254 = vpop.f32.mrb[0].mxu0
    %v2255 = vadd.f32 %v2181, %v2254
    %v2256 = vpop.f32.mrb[0].mxu0
    %2257 = vdwg.mxu0
    %s2258 = scalar_lea.vmem %s9, 3
    %v2259 = vld [vmem:[%s2258] sm:$0x1]
    %v2261 = vlaneseq
    %v2262 = vshrl.u32 %v2261, 7
    %v2263 = vsub.s32 0, %v2262
    %v2264 = vrot.slane %v2259, %v2263
    %2266 = vmatprep.subr.mxu0 0.0
    %2267 = vmatpush1.msra.mxu0 %v2084
    %2268 = vmatprep.subr.mxu0 0.0
    %2269 = vmatpush1.msra.mxu0 %v2085
    %2270 = vmatprep.subr.mxu0 0.0
    %2271 = vmatpush1.msra.mxu0 %v2086
    %2272 = vmatprep.subr.mxu0 0.0
    %2273 = vmatpush1.msra.mxu0 %v2087
    %2274 = vmatprep.subr.mxu0 0.0
    %2275 = vmatpush1.msra.mxu0 0.0
    %2276 = vmatprep.subr.mxu0 0.0
    %2277 = vmatpush1.msra.mxu0 0.0
    %2278 = vmatprep.subr.mxu0 0.0
    %2279 = vmatpush1.msra.mxu0 0.0
    %2280 = vmatprep.subr.mxu0 0.0
    %2281 = vmatpush1.msra.mxu0 0.0
    %2282 = vmatprep.subr.mxu0 0.0
    %2283 = vmatpush1.msra.mxu0 0.0
    %2284 = vmatprep.subr.mxu0 0.0
    %2285 = vmatpush1.msra.mxu0 0.0
    %2286 = vmatprep.subr.mxu0 0.0
    %2287 = vmatpush1.msra.mxu0 0.0
    %2288 = vmatprep.subr.mxu0 0.0
    %2289 = vmatpush1.msra.mxu0 0.0
    %2290 = vmatprep.subr.mxu0 0.0
    %2291 = vmatpush1.msra.mxu0 0.0
    %2292 = vmatprep.subr.mxu0 0.0
    %2293 = vmatpush1.msra.mxu0 0.0
    %2294 = vmatprep.subr.mxu0 0.0
    %2295 = vmatpush1.msra.mxu0 0.0
    %2296 = vmatprep.subr.mxu0 0.0
    %2297 = vmatpush1.msra.mxu0 0.0
    %2298 = vmatprep.subr.mxu0 0.0
    %2299 = vmatpush1.msra.mxu0 0.0
    %2300 = vmatprep.subr.mxu0 0.0
    %2301 = vmatpush1.msra.mxu0 0.0
    %2302 = vmatprep.subr.mxu0 0.0
    %2303 = vmatpush1.msra.mxu0 0.0
    %2304 = vmatprep.subr.mxu0 0.0
    %2305 = vmatpush1.msra.mxu0 0.0
    %2306 = vmatprep.subr.mxu0 0.0
    %2307 = vmatpush1.msra.mxu0 0.0
    %2308 = vmatprep.subr.mxu0 0.0
    %2309 = vmatpush1.msra.mxu0 0.0
    %2310 = vmatprep.subr.mxu0 0.0
    %2311 = vmatpush1.msra.mxu0 0.0
    %2312 = vmatprep.subr.mxu0 0.0
    %2313 = vmatpush1.msra.mxu0 0.0
    %2314 = vmatprep.subr.mxu0 0.0
    %2315 = vmatpush1.msra.mxu0 0.0
    %2316 = vmatprep.subr.mxu0 0.0
    %2317 = vmatpush1.msra.mxu0 0.0
    %2318 = vmatprep.subr.mxu0 0.0
    %2319 = vmatpush1.msra.mxu0 0.0
    %2320 = vmatprep.subr.mxu0 0.0
    %2321 = vmatpush1.msra.mxu0 0.0
    %2322 = vmatprep.subr.mxu0 0.0
    %2323 = vmatpush1.msra.mxu0 0.0
    %2324 = vmatprep.subr.mxu0 0.0
    %2325 = vmatpush1.msra.mxu0 0.0
    %2326 = vmatprep.subr.mxu0 0.0
    %2327 = vmatpush1.msra.mxu0 0.0
    %2328 = vmatprep.subr.mxu0 0.0
    %2329 = vmatpush1.msra.mxu0 0.0
    %2330 = vmatprep.mubr.f32.mxu0 0.0
    %2331 = vmatmul.mubr.f32.gmra.mrb[0].mxu0 %v248
    %v2332 = vpop.f32.mrb[0].mxu0
    %v2333 = vadd.f32 %v2264, %v2332
    %v2334 = vpop.f32.mrb[0].mxu0
    %2335 = vmatprep.mubr.f32.mxu0 0.0
    %2336 = vmatmul.mubr.f32.gmra.mrb[0].mxu0 %v251
    %v2337 = vpop.f32.mrb[0].mxu0
    %v2338 = vadd.f32 %v2264, %v2337
    %v2339 = vpop.f32.mrb[0].mxu0
    %2340 = vdwg.mxu0
    %v2342 = vsel %vm329, %v2173, 0
    %v2345 = vsel %vm329, %v2250, 0
    %2347 = vmatprep.subr.mxu0 0.0
    %2348 = vmatpush1.xpose.msra.mxu0 %v2345
    %2349 = vmatprep.subr.mxu0 0.0
    %2350 = vmatpush1.xpose.msra.mxu0 0.0
    %2351 = vmatprep.subr.mxu0 0.0
    %2352 = vmatpush1.xpose.msra.mxu0 0.0
    %2353 = vmatprep.subr.mxu0 0.0
    %2354 = vmatpush1.xpose.msra.mxu0 0.0
    %2355 = vmatprep.subr.mxu0 0.0
    %2356 = vmatpush1.xpose.msra.mxu0 0.0
    %2357 = vmatprep.subr.mxu0 0.0
    %2358 = vmatpush1.xpose.msra.mxu0 0.0
    %2359 = vmatprep.subr.mxu0 0.0
    %2360 = vmatpush1.xpose.msra.mxu0 0.0
    %2361 = vmatprep.subr.mxu0 0.0
    %2362 = vmatpush1.xpose.msra.mxu0 0.0
    %2363 = vmatprep.subr.mxu0 0.0
    %2364 = vmatpush1.xpose.msra.mxu0 0.0
    %2365 = vmatprep.subr.mxu0 0.0
    %2366 = vmatpush1.xpose.msra.mxu0 0.0
    %2367 = vmatprep.subr.mxu0 0.0
    %2368 = vmatpush1.xpose.msra.mxu0 0.0
    %2369 = vmatprep.subr.mxu0 0.0
    %2370 = vmatpush1.xpose.msra.mxu0 0.0
    %2371 = vmatprep.subr.mxu0 0.0
    %2372 = vmatpush1.xpose.msra.mxu0 0.0
    %2373 = vmatprep.subr.mxu0 0.0
    %2374 = vmatpush1.xpose.msra.mxu0 0.0
    %2375 = vmatprep.subr.mxu0 0.0
    %2376 = vmatpush1.xpose.msra.mxu0 0.0
    %2377 = vmatprep.subr.mxu0 0.0
    %2378 = vmatpush1.xpose.msra.mxu0 0.0
    %2379 = vmatprep.subr.mxu0 0.0
    %2380 = vmatpush1.xpose.msra.mxu0 0.0
    %2381 = vmatprep.subr.mxu0 0.0
    %2382 = vmatpush1.xpose.msra.mxu0 0.0
    %2383 = vmatprep.subr.mxu0 0.0
    %2384 = vmatpush1.xpose.msra.mxu0 0.0
    %2385 = vmatprep.subr.mxu0 0.0
    %2386 = vmatpush1.xpose.msra.mxu0 0.0
    %2387 = vmatprep.subr.mxu0 0.0
    %2388 = vmatpush1.xpose.msra.mxu0 0.0
    %2389 = vmatprep.subr.mxu0 0.0
    %2390 = vmatpush1.xpose.msra.mxu0 0.0
    %2391 = vmatprep.subr.mxu0 0.0
    %2392 = vmatpush1.xpose.msra.mxu0 0.0
    %2393 = vmatprep.subr.mxu0 0.0
    %2394 = vmatpush1.xpose.msra.mxu0 0.0
    %2395 = vmatprep.subr.mxu0 0.0
    %2396 = vmatpush1.xpose.msra.mxu0 0.0
    %2397 = vmatprep.subr.mxu0 0.0
    %2398 = vmatpush1.xpose.msra.mxu0 0.0
    %2399 = vmatprep.subr.mxu0 0.0
    %2400 = vmatpush1.xpose.msra.mxu0 0.0
    %2401 = vmatprep.subr.mxu0 0.0
    %2402 = vmatpush1.xpose.msra.mxu0 0.0
    %2403 = vmatprep.subr.mxu0 0.0
    %2404 = vmatpush1.xpose.msra.mxu0 0.0
    %2405 = vmatprep.subr.mxu0 0.0
    %2406 = vmatpush1.xpose.msra.mxu0 0.0
    %2407 = vmatprep.subr.mxu0 0.0
    %2408 = vmatpush1.xpose.msra.mxu0 0.0
    %2409 = vmatprep.subr.mxu0 0.0
    %2410 = vmatpush1.xpose.msra.mxu0 0.0
    %2411 = vmatprep.mubr.f32.mxu0 0.0
    %2412 = vmatmul.mubr.f32.gmra.mrb[0].mxu0 %v2342
    %v2413 = vpop.f32.mrb[0].mxu0
    %v2414 = vadd.f32 %v328, %v2413
    %v2415 = vpop.f32.mrb[0].mxu0
    %2416 = vdwg.mxu0
    %v2417 = vsel %vm329, %v2414, -inf
    %2418 = vmax.xlane.f32.xlu0 %v2417
    %v2419 = vpop.xlane.xlu0 %2418
    %v2420 = vsub.f32 %v2414, %v2419
    %v2421 = vmul.f32 %v2420, 1.442695
    %v2422 = vpow.pop %v2421
    %v2423 = vsel %vm329, %v2422, 0.0
    %2424 = vadd.xlane.f32.xlu0 %v2423
    %v2425 = vpop.xlane.xlu0 %2424
    %v2426 = vrcp.pop %v2425
    %v2427 = vmul.f32 %v2422, %v2426
    %v2429 = vsel %vm329, %v2427, 0
    %2431 = vmatprep.subr.mxu0 0.0
    %2432 = vmatpush1.msra.mxu0 %v2333
    %2433 = vmatprep.subr.mxu0 0.0
    %2434 = vmatpush1.msra.mxu0 0.0
    %2435 = vmatprep.subr.mxu0 0.0
    %2436 = vmatpush1.msra.mxu0 0.0
    %2437 = vmatprep.subr.mxu0 0.0
    %2438 = vmatpush1.msra.mxu0 0.0
    %2439 = vmatprep.subr.mxu0 0.0
    %2440 = vmatpush1.msra.mxu0 0.0
    %2441 = vmatprep.subr.mxu0 0.0
    %2442 = vmatpush1.msra.mxu0 0.0
    %2443 = vmatprep.subr.mxu0 0.0
    %2444 = vmatpush1.msra.mxu0 0.0
    %2445 = vmatprep.subr.mxu0 0.0
    %2446 = vmatpush1.msra.mxu0 0.0
    %2447 = vmatprep.subr.mxu0 0.0
    %2448 = vmatpush1.msra.mxu0 0.0
    %2449 = vmatprep.subr.mxu0 0.0
    %2450 = vmatpush1.msra.mxu0 0.0
    %2451 = vmatprep.subr.mxu0 0.0
    %2452 = vmatpush1.msra.mxu0 0.0
    %2453 = vmatprep.subr.mxu0 0.0
    %2454 = vmatpush1.msra.mxu0 0.0
    %2455 = vmatprep.subr.mxu0 0.0
    %2456 = vmatpush1.msra.mxu0 0.0
    %2457 = vmatprep.subr.mxu0 0.0
    %2458 = vmatpush1.msra.mxu0 0.0
    %2459 = vmatprep.subr.mxu0 0.0
    %2460 = vmatpush1.msra.mxu0 0.0
    %2461 = vmatprep.subr.mxu0 0.0
    %2462 = vmatpush1.msra.mxu0 0.0
    %2463 = vmatprep.subr.mxu0 0.0
    %2464 = vmatpush1.msra.mxu0 0.0
    %2465 = vmatprep.subr.mxu0 0.0
    %2466 = vmatpush1.msra.mxu0 0.0
    %2467 = vmatprep.subr.mxu0 0.0
    %2468 = vmatpush1.msra.mxu0 0.0
    %2469 = vmatprep.subr.mxu0 0.0
    %2470 = vmatpush1.msra.mxu0 0.0
    %2471 = vmatprep.subr.mxu0 0.0
    %2472 = vmatpush1.msra.mxu0 0.0
    %2473 = vmatprep.subr.mxu0 0.0
    %2474 = vmatpush1.msra.mxu0 0.0
    %2475 = vmatprep.subr.mxu0 0.0
    %2476 = vmatpush1.msra.mxu0 0.0
    %2477 = vmatprep.subr.mxu0 0.0
    %2478 = vmatpush1.msra.mxu0 0.0
    %2479 = vmatprep.subr.mxu0 0.0
    %2480 = vmatpush1.msra.mxu0 0.0
    %2481 = vmatprep.subr.mxu0 0.0
    %2482 = vmatpush1.msra.mxu0 0.0
    %2483 = vmatprep.subr.mxu0 0.0
    %2484 = vmatpush1.msra.mxu0 0.0
    %2485 = vmatprep.subr.mxu0 0.0
    %2486 = vmatpush1.msra.mxu0 0.0
    %2487 = vmatprep.subr.mxu0 0.0
    %2488 = vmatpush1.msra.mxu0 0.0
    %2489 = vmatprep.subr.mxu0 0.0
    %2490 = vmatpush1.msra.mxu0 0.0
    %2491 = vmatprep.subr.mxu0 0.0
    %2492 = vmatpush1.msra.mxu0 0.0
    %2493 = vmatprep.subr.mxu0 0.0
    %2494 = vmatpush1.msra.mxu0 0.0
    %2495 = vmatprep.mubr.f32.mxu0 0.0
    %2496 = vmatmul.mubr.f32.gmra.mrb[0].mxu0 %v2429
    %v2497 = vpop.f32.mrb[0].mxu0
    %v2498 = vadd.f32 0.0, %v2497
    %v2499 = vpop.f32.mrb[0].mxu0
    %2500 = vdwg.mxu0
    %v2502 = vsel %vm329, %v2174, 0
    %v2505 = vsel %vm329, %v2255, 0
    %2507 = vmatprep.subr.mxu0 0.0
    %2508 = vmatpush1.xpose.msra.mxu0 %v2505
    %2509 = vmatprep.subr.mxu0 0.0
    %2510 = vmatpush1.xpose.msra.mxu0 0.0
    %2511 = vmatprep.subr.mxu0 0.0
    %2512 = vmatpush1.xpose.msra.mxu0 0.0
    %2513 = vmatprep.subr.mxu0 0.0
    %2514 = vmatpush1.xpose.msra.mxu0 0.0
    %2515 = vmatprep.subr.mxu0 0.0
    %2516 = vmatpush1.xpose.msra.mxu0 0.0
    %2517 = vmatprep.subr.mxu0 0.0
    %2518 = vmatpush1.xpose.msra.mxu0 0.0
    %2519 = vmatprep.subr.mxu0 0.0
    %2520 = vmatpush1.xpose.msra.mxu0 0.0
    %2521 = vmatprep.subr.mxu0 0.0
    %2522 = vmatpush1.xpose.msra.mxu0 0.0
    %2523 = vmatprep.subr.mxu0 0.0
    %2524 = vmatpush1.xpose.msra.mxu0 0.0
    %2525 = vmatprep.subr.mxu0 0.0
    %2526 = vmatpush1.xpose.msra.mxu0 0.0
    %2527 = vmatprep.subr.mxu0 0.0
    %2528 = vmatpush1.xpose.msra.mxu0 0.0
    %2529 = vmatprep.subr.mxu0 0.0
    %2530 = vmatpush1.xpose.msra.mxu0 0.0
    %2531 = vmatprep.subr.mxu0 0.0
    %2532 = vmatpush1.xpose.msra.mxu0 0.0
    %2533 = vmatprep.subr.mxu0 0.0
    %2534 = vmatpush1.xpose.msra.mxu0 0.0
    %2535 = vmatprep.subr.mxu0 0.0
    %2536 = vmatpush1.xpose.msra.mxu0 0.0
    %2537 = vmatprep.subr.mxu0 0.0
    %2538 = vmatpush1.xpose.msra.mxu0 0.0
    %2539 = vmatprep.subr.mxu0 0.0
    %2540 = vmatpush1.xpose.msra.mxu0 0.0
    %2541 = vmatprep.subr.mxu0 0.0
    %2542 = vmatpush1.xpose.msra.mxu0 0.0
    %2543 = vmatprep.subr.mxu0 0.0
    %2544 = vmatpush1.xpose.msra.mxu0 0.0
    %2545 = vmatprep.subr.mxu0 0.0
    %2546 = vmatpush1.xpose.msra.mxu0 0.0
    %2547 = vmatprep.subr.mxu0 0.0
    %2548 = vmatpush1.xpose.msra.mxu0 0.0
    %2549 = vmatprep.subr.mxu0 0.0
    %2550 = vmatpush1.xpose.msra.mxu0 0.0
    %2551 = vmatprep.subr.mxu0 0.0
    %2552 = vmatpush1.xpose.msra.mxu0 0.0
    %2553 = vmatprep.subr.mxu0 0.0
    %2554 = vmatpush1.xpose.msra.mxu0 0.0
    %2555 = vmatprep.subr.mxu0 0.0
    %2556 = vmatpush1.xpose.msra.mxu0 0.0
    %2557 = vmatprep.subr.mxu0 0.0
    %2558 = vmatpush1.xpose.msra.mxu0 0.0
    %2559 = vmatprep.subr.mxu0 0.0
    %2560 = vmatpush1.xpose.msra.mxu0 0.0
    %2561 = vmatprep.subr.mxu0 0.0
    %2562 = vmatpush1.xpose.msra.mxu0 0.0
    %2563 = vmatprep.subr.mxu0 0.0
    %2564 = vmatpush1.xpose.msra.mxu0 0.0
    %2565 = vmatprep.subr.mxu0 0.0
    %2566 = vmatpush1.xpose.msra.mxu0 0.0
    %2567 = vmatprep.subr.mxu0 0.0
    %2568 = vmatpush1.xpose.msra.mxu0 0.0
    %2569 = vmatprep.subr.mxu0 0.0
    %2570 = vmatpush1.xpose.msra.mxu0 0.0
    %2571 = vmatprep.mubr.f32.mxu0 0.0
    %2572 = vmatmul.mubr.f32.gmra.mrb[0].mxu0 %v2502
    %v2573 = vpop.f32.mrb[0].mxu0
    %v2574 = vadd.f32 %v491, %v2573
    %v2575 = vpop.f32.mrb[0].mxu0
    %2576 = vdwg.mxu0
    %v2577 = vsel %vm329, %v2574, -inf
    %2578 = vmax.xlane.f32.xlu0 %v2577
    %v2579 = vpop.xlane.xlu0 %2578
    %v2580 = vsub.f32 %v2574, %v2579
    %v2581 = vmul.f32 %v2580, 1.442695
    %v2582 = vpow.pop %v2581
    %v2583 = vsel %vm329, %v2582, 0.0
    %2584 = vadd.xlane.f32.xlu0 %v2583
    %v2585 = vpop.xlane.xlu0 %2584
    %v2586 = vrcp.pop %v2585
    %v2587 = vmul.f32 %v2582, %v2586
    %v2589 = vsel %vm329, %v2587, 0
    %2591 = vmatprep.subr.mxu0 0.0
    %2592 = vmatpush1.msra.mxu0 %v2338
    %2593 = vmatprep.subr.mxu0 0.0
    %2594 = vmatpush1.msra.mxu0 0.0
    %2595 = vmatprep.subr.mxu0 0.0
    %2596 = vmatpush1.msra.mxu0 0.0
    %2597 = vmatprep.subr.mxu0 0.0
    %2598 = vmatpush1.msra.mxu0 0.0
    %2599 = vmatprep.subr.mxu0 0.0
    %2600 = vmatpush1.msra.mxu0 0.0
    %2601 = vmatprep.subr.mxu0 0.0
    %2602 = vmatpush1.msra.mxu0 0.0
    %2603 = vmatprep.subr.mxu0 0.0
    %2604 = vmatpush1.msra.mxu0 0.0
    %2605 = vmatprep.subr.mxu0 0.0
    %2606 = vmatpush1.msra.mxu0 0.0
    %2607 = vmatprep.subr.mxu0 0.0
    %2608 = vmatpush1.msra.mxu0 0.0
    %2609 = vmatprep.subr.mxu0 0.0
    %2610 = vmatpush1.msra.mxu0 0.0
    %2611 = vmatprep.subr.mxu0 0.0
    %2612 = vmatpush1.msra.mxu0 0.0
    %2613 = vmatprep.subr.mxu0 0.0
    %2614 = vmatpush1.msra.mxu0 0.0
    %2615 = vmatprep.subr.mxu0 0.0
    %2616 = vmatpush1.msra.mxu0 0.0
    %2617 = vmatprep.subr.mxu0 0.0
    %2618 = vmatpush1.msra.mxu0 0.0
    %2619 = vmatprep.subr.mxu0 0.0
    %2620 = vmatpush1.msra.mxu0 0.0
    %2621 = vmatprep.subr.mxu0 0.0
    %2622 = vmatpush1.msra.mxu0 0.0
    %2623 = vmatprep.subr.mxu0 0.0
    %2624 = vmatpush1.msra.mxu0 0.0
    %2625 = vmatprep.subr.mxu0 0.0
    %2626 = vmatpush1.msra.mxu0 0.0
    %2627 = vmatprep.subr.mxu0 0.0
    %2628 = vmatpush1.msra.mxu0 0.0
    %2629 = vmatprep.subr.mxu0 0.0
    %2630 = vmatpush1.msra.mxu0 0.0
    %2631 = vmatprep.subr.mxu0 0.0
    %2632 = vmatpush1.msra.mxu0 0.0
    %2633 = vmatprep.subr.mxu0 0.0
    %2634 = vmatpush1.msra.mxu0 0.0
    %2635 = vmatprep.subr.mxu0 0.0
    %2636 = vmatpush1.msra.mxu0 0.0
    %2637 = vmatprep.subr.mxu0 0.0
    %2638 = vmatpush1.msra.mxu0 0.0
    %2639 = vmatprep.subr.mxu0 0.0
    %2640 = vmatpush1.msra.mxu0 0.0
    %2641 = vmatprep.subr.mxu0 0.0
    %2642 = vmatpush1.msra.mxu0 0.0
    %2643 = vmatprep.subr.mxu0 0.0
    %2644 = vmatpush1.msra.mxu0 0.0
    %2645 = vmatprep.subr.mxu0 0.0
    %2646 = vmatpush1.msra.mxu0 0.0
    %2647 = vmatprep.subr.mxu0 0.0
    %2648 = vmatpush1.msra.mxu0 0.0
    %2649 = vmatprep.subr.mxu0 0.0
    %2650 = vmatpush1.msra.mxu0 0.0
    %2651 = vmatprep.subr.mxu0 0.0
    %2652 = vmatpush1.msra.mxu0 0.0
    %2653 = vmatprep.subr.mxu0 0.0
    %2654 = vmatpush1.msra.mxu0 0.0
    %2655 = vmatprep.mubr.f32.mxu0 0.0
    %2656 = vmatmul.mubr.f32.gmra.mrb[0].mxu0 %v2589
    %v2657 = vpop.f32.mrb[0].mxu0
    %v2658 = vadd.f32 0.0, %v2657
    %v2659 = vpop.f32.mrb[0].mxu0
    %2660 = vdwg.mxu0
    %v2662 = vsel %vm329, %v2498, 0
    %v2665 = vsel %vm329, %v2658, 0
    %2667 = vmatprep.subr.mxu0 0.0
    %2668 = vmatpush1.msra.mxu0 %v2089
    %2669 = vmatprep.subr.mxu0 0.0
    %2670 = vmatpush1.msra.mxu0 0.0
    %2671 = vmatprep.subr.mxu0 0.0
    %2672 = vmatpush1.msra.mxu0 0.0
    %2673 = vmatprep.subr.mxu0 0.0
    %2674 = vmatpush1.msra.mxu0 0.0
    %2675 = vmatprep.subr.mxu0 0.0
    %2676 = vmatpush1.msra.mxu0 0.0
    %2677 = vmatprep.subr.mxu0 0.0
    %2678 = vmatpush1.msra.mxu0 0.0
    %2679 = vmatprep.subr.mxu0 0.0
    %2680 = vmatpush1.msra.mxu0 0.0
    %2681 = vmatprep.subr.mxu0 0.0
    %2682 = vmatpush1.msra.mxu0 0.0
    %2683 = vmatprep.subr.mxu0 0.0
    %2684 = vmatpush1.msra.mxu0 0.0
    %2685 = vmatprep.subr.mxu0 0.0
    %2686 = vmatpush1.msra.mxu0 0.0
    %2687 = vmatprep.subr.mxu0 0.0
    %2688 = vmatpush1.msra.mxu0 0.0
    %2689 = vmatprep.subr.mxu0 0.0
    %2690 = vmatpush1.msra.mxu0 0.0
    %2691 = vmatprep.subr.mxu0 0.0
    %2692 = vmatpush1.msra.mxu0 0.0
    %2693 = vmatprep.subr.mxu0 0.0
    %2694 = vmatpush1.msra.mxu0 0.0
    %2695 = vmatprep.subr.mxu0 0.0
    %2696 = vmatpush1.msra.mxu0 0.0
    %2697 = vmatprep.subr.mxu0 0.0
    %2698 = vmatpush1.msra.mxu0 0.0
    %2699 = vmatprep.subr.mxu0 0.0
    %2700 = vmatpush1.msra.mxu0 0.0
    %2701 = vmatprep.subr.mxu0 0.0
    %2702 = vmatpush1.msra.mxu0 0.0
    %2703 = vmatprep.subr.mxu0 0.0
    %2704 = vmatpush1.msra.mxu0 0.0
    %2705 = vmatprep.subr.mxu0 0.0
    %2706 = vmatpush1.msra.mxu0 0.0
    %2707 = vmatprep.subr.mxu0 0.0
    %2708 = vmatpush1.msra.mxu0 0.0
    %2709 = vmatprep.subr.mxu0 0.0
    %2710 = vmatpush1.msra.mxu0 0.0
    %2711 = vmatprep.subr.mxu0 0.0
    %2712 = vmatpush1.msra.mxu0 0.0
    %2713 = vmatprep.subr.mxu0 0.0
    %2714 = vmatpush1.msra.mxu0 0.0
    %2715 = vmatprep.subr.mxu0 0.0
    %2716 = vmatpush1.msra.mxu0 0.0
    %2717 = vmatprep.subr.mxu0 0.0
    %2718 = vmatpush1.msra.mxu0 0.0
    %2719 = vmatprep.subr.mxu0 0.0
    %2720 = vmatpush1.msra.mxu0 0.0
    %2721 = vmatprep.subr.mxu0 0.0
    %2722 = vmatpush1.msra.mxu0 0.0
    %2723 = vmatprep.subr.mxu0 0.0
    %2724 = vmatpush1.msra.mxu0 0.0
    %2725 = vmatprep.subr.mxu0 0.0
    %2726 = vmatpush1.msra.mxu0 0.0
    %2727 = vmatprep.subr.mxu0 0.0
    %2728 = vmatpush1.msra.mxu0 0.0
    %2729 = vmatprep.subr.mxu0 0.0
    %2730 = vmatpush1.msra.mxu0 0.0
    %2731 = vmatprep.mubr.f32.mxu0 0.0
    %2732 = vmatmul.mubr.f32.gmra.mrb[0].mxu0 %v2662
    %v2733 = vpop.f32.mrb[0].mxu0
    %v2734 = vadd.f32 0.0, %v2733
    %v2735 = vpop.f32.mrb[0].mxu0
    %2736 = vmatprep.mubr.f32.mxu0 0.0
    %2737 = vmatmul.mubr.f32.gmra.mrb[0].mxu0 %v2665
    %v2738 = vpop.f32.mrb[0].mxu0
    %v2739 = vadd.f32 0.0, %v2738
    %v2740 = vpop.f32.mrb[0].mxu0
    %2741 = vdwg.mxu0
    %v2742 = vadd.f32 %v2071, %v2734
    %v2743 = vadd.f32 %v2072, %v2739
    %v2744 = vld [vmem:[%s11] sm:$0x1]
    %v2746 = vlaneseq
    %v2747 = vshrl.u32 %v2746, 7
    %v2748 = vsub.s32 0, %v2747
    %v2749 = vrot.slane %v2744, %v2748
    %v2751 = vadd.f32 %v2742, %v2749
    %v2752 = vadd.f32 %v2743, %v2749
    %2753 = vst.msk [vmem:[#allocation2] sm:$0xff] %vm68, %v2751
    %2754 = vst.msk [vmem:[#allocation2 + $0x8] sm:$0xff] %vm68, %v2752
    // Predicated region
    $region50: #{tpu_custom_call.1} parent=1 // pred_check
      _
    $region51: #{tpu_custom_call.1} parent=1 // pred_check_branch
      %2756 = sbr.rel (0) target = $region53
    $region52: #{tpu_custom_call.1} parent=1 // pred_region
      %s2758 = ssub.s32 256, 256
      %2759 = vsyncadd [#allocation3], %s2758
      %s2760 = sshll.u32 [#allocation2], 4
      %s2761 = int_to_ptr.vmem [resolvable:$true] %s2760
      %2766 = dma.vmem_to_hbm [thread:$0]  %s2761, 256, %s12, [#allocation3], 128, 128, 8
    $region53: #{tpu_custom_call.1} parent=1 // pred_fallthru
      _
    // Predicated region
    $region54: #{tpu_custom_call.1} parent=1 // pred_check
      _
    $region55: #{tpu_custom_call.1} parent=1 // pred_check_branch
      %2768 = sbr.rel (0) target = $region57
    $region56: #{tpu_custom_call.1} parent=1 // pred_region
      %2769 = dma.done [#allocation3], 256
    $region57: #{tpu_custom_call.1} parent=1 // pred_fallthru
      _
    %2770 = vsyncpa [#allocation3], 1

</llo_original>
